<compile_context>
chip_gen: v6e
topology: v6e:2x2x1
jax: 0.10.0
libtpu: 0.0.40
codegen_flags: <defaults>
</compile_context>

<pallas_src>
import jax
import jax.numpy as jnp
from jax.experimental import pallas as pl
from jax.experimental.pallas import tpu as pltpu

EPS = 1e-5  # nn.InstanceNorm2d default eps


# ---------------------------------------------------------------------------
# In-kernel helpers (operate on one VMEM-resident sample)
# ---------------------------------------------------------------------------
def _shift_w_reflect(a, dx):
    """(H, W, C) -> slab with slab[:, x] = a[:, x+dx], ReflectionPad2d(1) edges."""
    if dx == 0:
        return a
    if dx == -1:
        return jnp.concatenate([a[:, 1:2], a[:, :-1]], axis=1)
    return jnp.concatenate([a[:, 1:], a[:, -2:-1]], axis=1)
    # TODO(synk): replace with pltpu.roll (XLU slot) + 2-column masked fixup
    # once packed-dtype sublane rotates are confirmed on all target chips.


def _shift_h_reflect(a, dy):
    """(H, W, C) -> slab with slab[y] = a[y+dy], reflection at the edges.
    Leading-axis slices/concat: tile-aligned, no sublane repacking."""
    if dy == 0:
        return a
    if dy == -1:
        return jnp.concatenate([a[1:2], a[:-1]], axis=0)
    return jnp.concatenate([a[1:], a[-2:-1]], axis=0)


def _conv3x3(a, w_ref):
    """3x3 reflect-padded conv as 9 accumulating MXU matmuls (no im2col).

    a:     (H, W, Cin) activations, already cast to the MXU operand dtype.
    w_ref: (9, Cin, Cout) VMEM ref; tap index = kh*3 + kw.
    Returns (H*W, Cout) float32.
    """
    H, W, C = a.shape
    cout = w_ref.shape[-1]
    # Only two sublane-repacking shifts per conv; H shifts below are cheap.
    cols = (_shift_w_reflect(a, -1), a, _shift_w_reflect(a, 1))
    acc = jnp.zeros((H * W, cout), jnp.float32)
    for kw in range(3):                       # static unroll: 9 MXU pushes
        aw = cols[kw]
        for kh in range(3):
            slab = _shift_h_reflect(aw, kh - 1).reshape(H * W, C)
            acc = acc + jnp.dot(slab, w_ref[kh * 3 + kw],
                                preferred_element_type=jnp.float32)
    return acc


def _instance_norm(y):
    """Per-channel InstanceNorm over flattened spatial.  y: (N, C) f32.
    Centered (two-pass) variance: matches PyTorch numerics, same cost here
    since the tile is already VMEM-resident."""
    inv_n = 1.0 / y.shape[0]
    mean = jnp.sum(y, axis=0, keepdims=True) * inv_n
    centered = y - mean
    var = jnp.sum(centered * centered, axis=0, keepdims=True) * inv_n
    return centered * jax.lax.rsqrt(var + EPS)


# ---------------------------------------------------------------------------
# Pallas kernel: one grid step == one batch element (full residual block)
# ---------------------------------------------------------------------------
def residual_block_kernel(x_ref, w1_ref, w2_ref, o_ref):
    x = x_ref[0]                                   # (H, W, C)
    H, W, C = x.shape
    x_f32 = x.astype(jnp.float32)                  # kept only for the residual
    x_mx = x.astype(w1_ref.dtype)                  # cast ONCE for the MXU

    y1 = _conv3x3(x_mx, w1_ref)                    # conv1: (H*W, C) f32
    h = jnp.maximum(_instance_norm(y1), 0.0)       # fused IN + ReLU (f32)

    h_mx = h.astype(w2_ref.dtype).reshape(H, W, C)
    y2 = _conv3x3(h_mx, w2_ref)                    # conv2: (H*W, C) f32

    out = x_f32.reshape(H * W, C) + _instance_norm(y2)   # fused IN + residual
    o_ref[0] = out.reshape(H, W, C).astype(o_ref.dtype)


# ---------------------------------------------------------------------------
# Wrappers
# ---------------------------------------------------------------------------
def residual_block_nhwc(x, w1_oihw, b1, w2_oihw, b2, *, mxu_dtype=jnp.bfloat16):
    """NHWC Pix2PixHD ResidualBlock forward (preferred entry point).

    b1/b2 are accepted for nn.Conv2d interface parity but intentionally
    unused: a per-channel conv bias is cancelled exactly by the following
    InstanceNorm2d(affine=False, per-sample spatial stats).  This does NOT
    hold if the norm becomes affine / running-stats or is swapped out.

    mxu_dtype: matmul operand dtype (bfloat16 default for v6e/v7x/v5e MXU
    throughput; accumulation and all norm/ReLU/residual math stay float32).
    """
    del b1, b2  # exact no-op before InstanceNorm2d(affine=False)

    B, H, W, C = x.shape
    assert H >= 2 and W >= 2, "ReflectionPad2d(1) requires H >= 2 and W >= 2"
    assert w1_oihw.shape == (C, C, 3, 3) and w2_oihw.shape == (C, C, 3, 3)

    def _to_taps(w_oihw):
        # OIHW -> (kh, kw, Cin, Cout) -> (9, Cin, Cout); tap index = kh*3+kw.
        return (jnp.transpose(w_oihw, (2, 3, 1, 0))
                .reshape(9, C, C).astype(mxu_dtype))

    w1 = _to_taps(w1_oihw)
    w2 = _to_taps(w2_oihw)

    x_bytes = jnp.dtype(x.dtype).itemsize
    w_bytes = jnp.dtype(mxu_dtype).itemsize
    hwc = H * W * C
    # Resident estimate: double-buffered in/out blocks + f32 intermediates
    # (x_f32, conv accumulators, norm temps) + mxu-dtype copies (x_mx, h_mx,
    # 3 W-shifted cols) + double-buffered weights, with 1.5x slack.
    est = (4 * hwc * x_bytes + 8 * hwc * 4 + 6 * hwc * w_bytes
           + 2 * 2 * 9 * C * C * w_bytes)
    vmem_limit = int(min(64 * 1024 * 1024,
                         max(32 * 1024 * 1024, 3 * est // 2)))

    flops = 2 * 2 * B * H * W * 9 * C * C            # two convs, 2 flop/MAC
    bytes_accessed = 2 * B * hwc * x_bytes + 2 * 9 * C * C * w_bytes

    return pl.pallas_call(
        residual_block_kernel,
        out_shape=jax.ShapeDtypeStruct((B, H, W, C), x.dtype),
        grid_spec=pltpu.PrefetchScalarGridSpec(
            num_scalar_prefetch=0,
            grid=(B,),
            in_specs=[
                pl.BlockSpec((1, H, W, C), lambda b: (b, 0, 0, 0)),   # x
                # Constant index_map: never re-fetched across the batch grid.
                # TODO(synk): single-buffer (pl.Buffered(1) / whole-array
                # VMEM residency) and Cout-slice for production C on v7x.
                pl.BlockSpec((9, C, C), lambda b: (0, 0, 0)),         # w1 taps
                pl.BlockSpec((9, C, C), lambda b: (0, 0, 0)),         # w2 taps
            ],
            out_specs=pl.BlockSpec((1, H, W, C), lambda b: (b, 0, 0, 0)),
        ),
        compiler_params=pltpu.CompilerParams(
            dimension_semantics=("parallel",),
            vmem_limit_bytes=vmem_limit),
        cost_estimate=pl.CostEstimate(
            flops=flops,
            transcendentals=2 * B * C,               # one rsqrt per channel/norm
            bytes_accessed=bytes_accessed),
    )(x, w1, w2)


def residual_block(x_nchw, w1_oihw, b1, w2_oihw, b2, *, mxu_dtype=jnp.bfloat16):
    """NCHW wrapper for PyTorch interface parity.

    Prefer residual_block_nhwc when chaining blocks: the two transposes below
    are full-tensor HBM round trips (largest relative cost on v5e).
    """
    x = jnp.transpose(x_nchw, (0, 2, 3, 1))          # NCHW -> NHWC
    y = residual_block_nhwc(x, w1_oihw, b1, w2_oihw, b2, mxu_dtype=mxu_dtype)
    return jnp.transpose(y, (0, 3, 1, 2))            # NHWC -> NCHW


# ---------------------------------------------------------------------------
# Pure-JAX reference (faithful to the PyTorch module, biases included)
# ---------------------------------------------------------------------------
def _reference(x, w1, b1, w2, b2):
    def conv(a, w, b):
        a = jnp.pad(a, ((0, 0), (0, 0), (1, 1), (1, 1)), mode="reflect")
        y = jax.lax.conv_general_dilated(
            a, w, window_strides=(1, 1), padding="VALID",
            dimension_numbers=("NCHW", "OIHW", "NCHW"))
        return y + b[None, :, None, None]

    def inorm(a):
        m = jnp.mean(a, axis=(2, 3), keepdims=True)
        v = jnp.mean(jnp.square(a - m), axis=(2, 3), keepdims=True)
        return (a - m) * jax.lax.rsqrt(v + EPS)

    h = jnp.maximum(inorm(conv(x, w1, b1)), 0.0)
    h = inorm(conv(h, w2, b2))
    return x + h


if __name__ == "__main__":
    B, C, H, W = 2, 4, 16, 16        # toy shape; NOT performance-representative
    key = jax.random.PRNGKey(0)
    k_x, k_w1, k_b1, k_w2, k_b2 = jax.random.split(key, 5)

    x = jax.random.normal(k_x, (B, C, H, W), jnp.float32)

    fan_in = C * 3 * 3
    bound = 1.0 / (fan_in ** 0.5)
    w1 = jax.random.uniform(k_w1, (C, C, 3, 3), jnp.float32, -bound, bound)
    b1 = jax.random.uniform(k_b1, (C,), jnp.float32, -bound, bound)
    w2 = jax.random.uniform(k_w2, (C, C, 3, 3), jnp.float32, -bound, bound)
    b2 = jax.random.uniform(k_b2, (C,), jnp.float32, -bound, bound)

    expected = _reference(x, w1, b1, w2, b2)

    # f32 MXU operands: tight numerical check against the PyTorch-faithful ref.
    out_f32 = jax.block_until_ready(
        residual_block(x, w1, b1, w2, b2, mxu_dtype=jnp.float32))
    assert out_f32.shape == (B, C, H, W)
    err_f32 = float(jnp.max(jnp.abs(out_f32 - expected)))
    assert err_f32 < 1e-4, f"f32 max abs error {err_f32}"

    # Default bf16 MXU operands (f32 accumulation / f32 norm math): loose check.
    out_bf16 = jax.block_until_ready(residual_block(x, w1, b1, w2, b2))
    assert out_bf16.shape == (B, C, H, W)
    err_bf16 = float(jnp.max(jnp.abs(out_bf16 - expected)))
    assert bool(jnp.all(jnp.isfinite(out_bf16)))
    assert err_bf16 < 2e-1, f"bf16 max abs error {err_bf16}"

    print("KERNEL_OK")
</pallas_src>

<mosaic_0001>
module attributes {stable_mosaic.version = 11 : i64} {
  func.func @residual_block_kernel(%arg0: i32, %arg1: memref<1x16x16x4xf32, #tpu.memory_space<vmem>>, %arg2: memref<9x4x4xf32, #tpu.memory_space<vmem>>, %arg3: memref<9x4x4xf32, #tpu.memory_space<vmem>>, %arg4: memref<1x16x16x4xf32, #tpu.memory_space<vmem>>) attributes {dimension_semantics = [#tpu.dimension_semantics<parallel>], iteration_bounds = array<i64: 2>, scalar_prefetch = 0 : i64, scratch_operands = 0 : i64, tpu.core_type = #tpu.core_type<tc>, window_params = [{transform_indices = @transform_0, window_bounds = array<i64: 1, 16, 16, 4>}, {pipeline_mode = #tpu.pipeline_mode<synchronous>, transform_indices = @transform_1, window_bounds = array<i64: 9, 4, 4>}, {pipeline_mode = #tpu.pipeline_mode<synchronous>, transform_indices = @transform_2, window_bounds = array<i64: 9, 4, 4>}, {transform_indices = @transform_3, window_bounds = array<i64: 1, 16, 16, 4>}]} {
    %c0 = arith.constant 0 : index
    %c0_0 = arith.constant 0 : index
    %c0_1 = arith.constant 0 : index
    %c0_2 = arith.constant 0 : index
    %0 = vector.load %arg1[%c0, %c0_0, %c0_1, %c0_2] : memref<1x16x16x4xf32, #tpu.memory_space<vmem>>, vector<1x16x16x4xf32>
    %1 = vector.shape_cast %0 : vector<1x16x16x4xf32> to vector<16x16x4xf32>
    %2 = vector.extract_strided_slice %1 {offsets = [0, 1, 0], sizes = [16, 1, 4], strides = [1, 1, 1]} : vector<16x16x4xf32> to vector<16x1x4xf32>
    %3 = vector.extract_strided_slice %1 {offsets = [0, 0, 0], sizes = [16, 15, 4], strides = [1, 1, 1]} : vector<16x16x4xf32> to vector<16x15x4xf32>
    %4 = tpu.concatenate %2, %3 in 1 : vector<16x1x4xf32>, vector<16x15x4xf32> -> vector<16x16x4xf32>
    %5 = vector.extract_strided_slice %1 {offsets = [0, 1, 0], sizes = [16, 15, 4], strides = [1, 1, 1]} : vector<16x16x4xf32> to vector<16x15x4xf32>
    %6 = vector.extract_strided_slice %1 {offsets = [0, 14, 0], sizes = [16, 1, 4], strides = [1, 1, 1]} : vector<16x16x4xf32> to vector<16x1x4xf32>
    %7 = tpu.concatenate %5, %6 in 1 : vector<16x15x4xf32>, vector<16x1x4xf32> -> vector<16x16x4xf32>
    %cst = arith.constant 0.000000e+00 : f32
    %8 = vector.broadcast %cst : f32 to vector<256x4xf32>
    %9 = vector.extract_strided_slice %4 {offsets = [1, 0, 0], sizes = [1, 16, 4], strides = [1, 1, 1]} : vector<16x16x4xf32> to vector<1x16x4xf32>
    %10 = vector.extract_strided_slice %4 {offsets = [0, 0, 0], sizes = [15, 16, 4], strides = [1, 1, 1]} : vector<16x16x4xf32> to vector<15x16x4xf32>
    %11 = tpu.concatenate %9, %10 in 0 : vector<1x16x4xf32>, vector<15x16x4xf32> -> vector<16x16x4xf32>
    %12 = vector.shape_cast %11 : vector<16x16x4xf32> to vector<256x4xf32>
    %c0_3 = arith.constant 0 : index
    %c0_4 = arith.constant 0 : index
    %c0_5 = arith.constant 0 : index
    %13 = vector.load %arg2[%c0_3, %c0_4, %c0_5] : memref<9x4x4xf32, #tpu.memory_space<vmem>>, vector<1x4x4xf32>
    %14 = vector.shape_cast %13 : vector<1x4x4xf32> to vector<4x4xf32>
    %cst_6 = arith.constant dense<0.000000e+00> : vector<256x4xf32>
    %15 = tpu.matmul %12, %14, %cst_6 {dimension_numbers = #tpu.dot_dimension_numbers<[1], [0], [0], [1], [0, 0, 1, 1], [], []>} : vector<256x4xf32>, vector<4x4xf32>, vector<256x4xf32> -> vector<256x4xf32>
    %16 = arith.addf %8, %15 : vector<256x4xf32>
    %17 = vector.shape_cast %4 : vector<16x16x4xf32> to vector<256x4xf32>
    %c3 = arith.constant 3 : index
    %c0_7 = arith.constant 0 : index
    %c0_8 = arith.constant 0 : index
    %18 = vector.load %arg2[%c3, %c0_7, %c0_8] : memref<9x4x4xf32, #tpu.memory_space<vmem>>, vector<1x4x4xf32>
    %19 = vector.shape_cast %18 : vector<1x4x4xf32> to vector<4x4xf32>
    %cst_9 = arith.constant dense<0.000000e+00> : vector<256x4xf32>
    %20 = tpu.matmul %17, %19, %cst_9 {dimension_numbers = #tpu.dot_dimension_numbers<[1], [0], [0], [1], [0, 0, 1, 1], [], []>} : vector<256x4xf32>, vector<4x4xf32>, vector<256x4xf32> -> vector<256x4xf32>
    %21 = arith.addf %16, %20 : vector<256x4xf32>
    %22 = vector.extract_strided_slice %4 {offsets = [1, 0, 0], sizes = [15, 16, 4], strides = [1, 1, 1]} : vector<16x16x4xf32> to vector<15x16x4xf32>
    %23 = vector.extract_strided_slice %4 {offsets = [14, 0, 0], sizes = [1, 16, 4], strides = [1, 1, 1]} : vector<16x16x4xf32> to vector<1x16x4xf32>
    %24 = tpu.concatenate %22, %23 in 0 : vector<15x16x4xf32>, vector<1x16x4xf32> -> vector<16x16x4xf32>
    %25 = vector.shape_cast %24 : vector<16x16x4xf32> to vector<256x4xf32>
    %c6 = arith.constant 6 : index
    %c0_10 = arith.constant 0 : index
    %c0_11 = arith.constant 0 : index
    %26 = vector.load %arg2[%c6, %c0_10, %c0_11] : memref<9x4x4xf32, #tpu.memory_space<vmem>>, vector<1x4x4xf32>
    %27 = vector.shape_cast %26 : vector<1x4x4xf32> to vector<4x4xf32>
    %cst_12 = arith.constant dense<0.000000e+00> : vector<256x4xf32>
    %28 = tpu.matmul %25, %27, %cst_12 {dimension_numbers = #tpu.dot_dimension_numbers<[1], [0], [0], [1], [0, 0, 1, 1], [], []>} : vector<256x4xf32>, vector<4x4xf32>, vector<256x4xf32> -> vector<256x4xf32>
    %29 = arith.addf %21, %28 : vector<256x4xf32>
    %30 = vector.extract_strided_slice %1 {offsets = [1, 0, 0], sizes = [1, 16, 4], strides = [1, 1, 1]} : vector<16x16x4xf32> to vector<1x16x4xf32>
    %31 = vector.extract_strided_slice %1 {offsets = [0, 0, 0], sizes = [15, 16, 4], strides = [1, 1, 1]} : vector<16x16x4xf32> to vector<15x16x4xf32>
    %32 = tpu.concatenate %30, %31 in 0 : vector<1x16x4xf32>, vector<15x16x4xf32> -> vector<16x16x4xf32>
    %33 = vector.shape_cast %32 : vector<16x16x4xf32> to vector<256x4xf32>
    %c1 = arith.constant 1 : index
    %c0_13 = arith.constant 0 : index
    %c0_14 = arith.constant 0 : index
    %34 = vector.load %arg2[%c1, %c0_13, %c0_14] : memref<9x4x4xf32, #tpu.memory_space<vmem>>, vector<1x4x4xf32>
    %35 = vector.shape_cast %34 : vector<1x4x4xf32> to vector<4x4xf32>
    %cst_15 = arith.constant dense<0.000000e+00> : vector<256x4xf32>
    %36 = tpu.matmul %33, %35, %cst_15 {dimension_numbers = #tpu.dot_dimension_numbers<[1], [0], [0], [1], [0, 0, 1, 1], [], []>} : vector<256x4xf32>, vector<4x4xf32>, vector<256x4xf32> -> vector<256x4xf32>
    %37 = arith.addf %29, %36 : vector<256x4xf32>
    %38 = vector.shape_cast %1 : vector<16x16x4xf32> to vector<256x4xf32>
    %c4 = arith.constant 4 : index
    %c0_16 = arith.constant 0 : index
    %c0_17 = arith.constant 0 : index
    %39 = vector.load %arg2[%c4, %c0_16, %c0_17] : memref<9x4x4xf32, #tpu.memory_space<vmem>>, vector<1x4x4xf32>
    %40 = vector.shape_cast %39 : vector<1x4x4xf32> to vector<4x4xf32>
    %cst_18 = arith.constant dense<0.000000e+00> : vector<256x4xf32>
    %41 = tpu.matmul %38, %40, %cst_18 {dimension_numbers = #tpu.dot_dimension_numbers<[1], [0], [0], [1], [0, 0, 1, 1], [], []>} : vector<256x4xf32>, vector<4x4xf32>, vector<256x4xf32> -> vector<256x4xf32>
    %42 = arith.addf %37, %41 : vector<256x4xf32>
    %43 = vector.extract_strided_slice %1 {offsets = [1, 0, 0], sizes = [15, 16, 4], strides = [1, 1, 1]} : vector<16x16x4xf32> to vector<15x16x4xf32>
    %44 = vector.extract_strided_slice %1 {offsets = [14, 0, 0], sizes = [1, 16, 4], strides = [1, 1, 1]} : vector<16x16x4xf32> to vector<1x16x4xf32>
    %45 = tpu.concatenate %43, %44 in 0 : vector<15x16x4xf32>, vector<1x16x4xf32> -> vector<16x16x4xf32>
    %46 = vector.shape_cast %45 : vector<16x16x4xf32> to vector<256x4xf32>
    %c7 = arith.constant 7 : index
    %c0_19 = arith.constant 0 : index
    %c0_20 = arith.constant 0 : index
    %47 = vector.load %arg2[%c7, %c0_19, %c0_20] : memref<9x4x4xf32, #tpu.memory_space<vmem>>, vector<1x4x4xf32>
    %48 = vector.shape_cast %47 : vector<1x4x4xf32> to vector<4x4xf32>
    %cst_21 = arith.constant dense<0.000000e+00> : vector<256x4xf32>
    %49 = tpu.matmul %46, %48, %cst_21 {dimension_numbers = #tpu.dot_dimension_numbers<[1], [0], [0], [1], [0, 0, 1, 1], [], []>} : vector<256x4xf32>, vector<4x4xf32>, vector<256x4xf32> -> vector<256x4xf32>
    %50 = arith.addf %42, %49 : vector<256x4xf32>
    %51 = vector.extract_strided_slice %7 {offsets = [1, 0, 0], sizes = [1, 16, 4], strides = [1, 1, 1]} : vector<16x16x4xf32> to vector<1x16x4xf32>
    %52 = vector.extract_strided_slice %7 {offsets = [0, 0, 0], sizes = [15, 16, 4], strides = [1, 1, 1]} : vector<16x16x4xf32> to vector<15x16x4xf32>
    %53 = tpu.concatenate %51, %52 in 0 : vector<1x16x4xf32>, vector<15x16x4xf32> -> vector<16x16x4xf32>
    %54 = vector.shape_cast %53 : vector<16x16x4xf32> to vector<256x4xf32>
    %c2 = arith.constant 2 : index
    %c0_22 = arith.constant 0 : index
    %c0_23 = arith.constant 0 : index
    %55 = vector.load %arg2[%c2, %c0_22, %c0_23] : memref<9x4x4xf32, #tpu.memory_space<vmem>>, vector<1x4x4xf32>
    %56 = vector.shape_cast %55 : vector<1x4x4xf32> to vector<4x4xf32>
    %cst_24 = arith.constant dense<0.000000e+00> : vector<256x4xf32>
    %57 = tpu.matmul %54, %56, %cst_24 {dimension_numbers = #tpu.dot_dimension_numbers<[1], [0], [0], [1], [0, 0, 1, 1], [], []>} : vector<256x4xf32>, vector<4x4xf32>, vector<256x4xf32> -> vector<256x4xf32>
    %58 = arith.addf %50, %57 : vector<256x4xf32>
    %59 = vector.shape_cast %7 : vector<16x16x4xf32> to vector<256x4xf32>
    %c5 = arith.constant 5 : index
    %c0_25 = arith.constant 0 : index
    %c0_26 = arith.constant 0 : index
    %60 = vector.load %arg2[%c5, %c0_25, %c0_26] : memref<9x4x4xf32, #tpu.memory_space<vmem>>, vector<1x4x4xf32>
    %61 = vector.shape_cast %60 : vector<1x4x4xf32> to vector<4x4xf32>
    %cst_27 = arith.constant dense<0.000000e+00> : vector<256x4xf32>
    %62 = tpu.matmul %59, %61, %cst_27 {dimension_numbers = #tpu.dot_dimension_numbers<[1], [0], [0], [1], [0, 0, 1, 1], [], []>} : vector<256x4xf32>, vector<4x4xf32>, vector<256x4xf32> -> vector<256x4xf32>
    %63 = arith.addf %58, %62 : vector<256x4xf32>
    %64 = vector.extract_strided_slice %7 {offsets = [1, 0, 0], sizes = [15, 16, 4], strides = [1, 1, 1]} : vector<16x16x4xf32> to vector<15x16x4xf32>
    %65 = vector.extract_strided_slice %7 {offsets = [14, 0, 0], sizes = [1, 16, 4], strides = [1, 1, 1]} : vector<16x16x4xf32> to vector<1x16x4xf32>
    %66 = tpu.concatenate %64, %65 in 0 : vector<15x16x4xf32>, vector<1x16x4xf32> -> vector<16x16x4xf32>
    %67 = vector.shape_cast %66 : vector<16x16x4xf32> to vector<256x4xf32>
    %c8 = arith.constant 8 : index
    %c0_28 = arith.constant 0 : index
    %c0_29 = arith.constant 0 : index
    %68 = vector.load %arg2[%c8, %c0_28, %c0_29] : memref<9x4x4xf32, #tpu.memory_space<vmem>>, vector<1x4x4xf32>
    %69 = vector.shape_cast %68 : vector<1x4x4xf32> to vector<4x4xf32>
    %cst_30 = arith.constant dense<0.000000e+00> : vector<256x4xf32>
    %70 = tpu.matmul %67, %69, %cst_30 {dimension_numbers = #tpu.dot_dimension_numbers<[1], [0], [0], [1], [0, 0, 1, 1], [], []>} : vector<256x4xf32>, vector<4x4xf32>, vector<256x4xf32> -> vector<256x4xf32>
    %71 = arith.addf %63, %70 : vector<256x4xf32>
    %cst_31 = arith.constant dense<0.000000e+00> : vector<4xf32>
    %72 = vector.multi_reduction <add>, %71, %cst_31 [0] : vector<256x4xf32> to vector<4xf32>
    %73 = vector.shape_cast %72 : vector<4xf32> to vector<1x4xf32>
    %cst_32 = arith.constant 3.906250e-03 : f32
    %74 = vector.broadcast %cst_32 : f32 to vector<1x4xf32>
    %75 = arith.mulf %73, %74 : vector<1x4xf32>
    %76 = vector.broadcast %75 : vector<1x4xf32> to vector<256x4xf32>
    %77 = arith.subf %71, %76 : vector<256x4xf32>
    %78 = arith.mulf %77, %77 : vector<256x4xf32>
    %cst_33 = arith.constant dense<0.000000e+00> : vector<4xf32>
    %79 = vector.multi_reduction <add>, %78, %cst_33 [0] : vector<256x4xf32> to vector<4xf32>
    %80 = vector.shape_cast %79 : vector<4xf32> to vector<1x4xf32>
    %cst_34 = arith.constant 3.906250e-03 : f32
    %81 = vector.broadcast %cst_34 : f32 to vector<1x4xf32>
    %82 = arith.mulf %80, %81 : vector<1x4xf32>
    %cst_35 = arith.constant 9.99999974E-6 : f32
    %83 = vector.broadcast %cst_35 : f32 to vector<1x4xf32>
    %84 = arith.addf %82, %83 : vector<1x4xf32>
    %85 = math.rsqrt %84 : vector<1x4xf32>
    %86 = vector.broadcast %85 : vector<1x4xf32> to vector<256x4xf32>
    %87 = arith.mulf %77, %86 : vector<256x4xf32>
    %cst_36 = arith.constant 0.000000e+00 : f32
    %88 = vector.broadcast %cst_36 : f32 to vector<256x4xf32>
    %89 = arith.maximumf %87, %88 : vector<256x4xf32>
    %90 = vector.shape_cast %89 : vector<256x4xf32> to vector<16x16x4xf32>
    %91 = vector.extract_strided_slice %90 {offsets = [0, 1, 0], sizes = [16, 1, 4], strides = [1, 1, 1]} : vector<16x16x4xf32> to vector<16x1x4xf32>
    %92 = vector.extract_strided_slice %90 {offsets = [0, 0, 0], sizes = [16, 15, 4], strides = [1, 1, 1]} : vector<16x16x4xf32> to vector<16x15x4xf32>
    %93 = tpu.concatenate %91, %92 in 1 : vector<16x1x4xf32>, vector<16x15x4xf32> -> vector<16x16x4xf32>
    %94 = vector.extract_strided_slice %90 {offsets = [0, 1, 0], sizes = [16, 15, 4], strides = [1, 1, 1]} : vector<16x16x4xf32> to vector<16x15x4xf32>
    %95 = vector.extract_strided_slice %90 {offsets = [0, 14, 0], sizes = [16, 1, 4], strides = [1, 1, 1]} : vector<16x16x4xf32> to vector<16x1x4xf32>
    %96 = tpu.concatenate %94, %95 in 1 : vector<16x15x4xf32>, vector<16x1x4xf32> -> vector<16x16x4xf32>
    %cst_37 = arith.constant 0.000000e+00 : f32
    %97 = vector.broadcast %cst_37 : f32 to vector<256x4xf32>
    %98 = vector.extract_strided_slice %93 {offsets = [1, 0, 0], sizes = [1, 16, 4], strides = [1, 1, 1]} : vector<16x16x4xf32> to vector<1x16x4xf32>
    %99 = vector.extract_strided_slice %93 {offsets = [0, 0, 0], sizes = [15, 16, 4], strides = [1, 1, 1]} : vector<16x16x4xf32> to vector<15x16x4xf32>
    %100 = tpu.concatenate %98, %99 in 0 : vector<1x16x4xf32>, vector<15x16x4xf32> -> vector<16x16x4xf32>
    %101 = vector.shape_cast %100 : vector<16x16x4xf32> to vector<256x4xf32>
    %c0_38 = arith.constant 0 : index
    %c0_39 = arith.constant 0 : index
    %c0_40 = arith.constant 0 : index
    %102 = vector.load %arg3[%c0_38, %c0_39, %c0_40] : memref<9x4x4xf32, #tpu.memory_space<vmem>>, vector<1x4x4xf32>
    %103 = vector.shape_cast %102 : vector<1x4x4xf32> to vector<4x4xf32>
    %cst_41 = arith.constant dense<0.000000e+00> : vector<256x4xf32>
    %104 = tpu.matmul %101, %103, %cst_41 {dimension_numbers = #tpu.dot_dimension_numbers<[1], [0], [0], [1], [0, 0, 1, 1], [], []>} : vector<256x4xf32>, vector<4x4xf32>, vector<256x4xf32> -> vector<256x4xf32>
    %105 = arith.addf %97, %104 : vector<256x4xf32>
    %106 = vector.shape_cast %93 : vector<16x16x4xf32> to vector<256x4xf32>
    %c3_42 = arith.constant 3 : index
    %c0_43 = arith.constant 0 : index
    %c0_44 = arith.constant 0 : index
    %107 = vector.load %arg3[%c3_42, %c0_43, %c0_44] : memref<9x4x4xf32, #tpu.memory_space<vmem>>, vector<1x4x4xf32>
    %108 = vector.shape_cast %107 : vector<1x4x4xf32> to vector<4x4xf32>
    %cst_45 = arith.constant dense<0.000000e+00> : vector<256x4xf32>
    %109 = tpu.matmul %106, %108, %cst_45 {dimension_numbers = #tpu.dot_dimension_numbers<[1], [0], [0], [1], [0, 0, 1, 1], [], []>} : vector<256x4xf32>, vector<4x4xf32>, vector<256x4xf32> -> vector<256x4xf32>
    %110 = arith.addf %105, %109 : vector<256x4xf32>
    %111 = vector.extract_strided_slice %93 {offsets = [1, 0, 0], sizes = [15, 16, 4], strides = [1, 1, 1]} : vector<16x16x4xf32> to vector<15x16x4xf32>
    %112 = vector.extract_strided_slice %93 {offsets = [14, 0, 0], sizes = [1, 16, 4], strides = [1, 1, 1]} : vector<16x16x4xf32> to vector<1x16x4xf32>
    %113 = tpu.concatenate %111, %112 in 0 : vector<15x16x4xf32>, vector<1x16x4xf32> -> vector<16x16x4xf32>
    %114 = vector.shape_cast %113 : vector<16x16x4xf32> to vector<256x4xf32>
    %c6_46 = arith.constant 6 : index
    %c0_47 = arith.constant 0 : index
    %c0_48 = arith.constant 0 : index
    %115 = vector.load %arg3[%c6_46, %c0_47, %c0_48] : memref<9x4x4xf32, #tpu.memory_space<vmem>>, vector<1x4x4xf32>
    %116 = vector.shape_cast %115 : vector<1x4x4xf32> to vector<4x4xf32>
    %cst_49 = arith.constant dense<0.000000e+00> : vector<256x4xf32>
    %117 = tpu.matmul %114, %116, %cst_49 {dimension_numbers = #tpu.dot_dimension_numbers<[1], [0], [0], [1], [0, 0, 1, 1], [], []>} : vector<256x4xf32>, vector<4x4xf32>, vector<256x4xf32> -> vector<256x4xf32>
    %118 = arith.addf %110, %117 : vector<256x4xf32>
    %119 = vector.extract_strided_slice %90 {offsets = [1, 0, 0], sizes = [1, 16, 4], strides = [1, 1, 1]} : vector<16x16x4xf32> to vector<1x16x4xf32>
    %120 = vector.extract_strided_slice %90 {offsets = [0, 0, 0], sizes = [15, 16, 4], strides = [1, 1, 1]} : vector<16x16x4xf32> to vector<15x16x4xf32>
    %121 = tpu.concatenate %119, %120 in 0 : vector<1x16x4xf32>, vector<15x16x4xf32> -> vector<16x16x4xf32>
    %122 = vector.shape_cast %121 : vector<16x16x4xf32> to vector<256x4xf32>
    %c1_50 = arith.constant 1 : index
    %c0_51 = arith.constant 0 : index
    %c0_52 = arith.constant 0 : index
    %123 = vector.load %arg3[%c1_50, %c0_51, %c0_52] : memref<9x4x4xf32, #tpu.memory_space<vmem>>, vector<1x4x4xf32>
    %124 = vector.shape_cast %123 : vector<1x4x4xf32> to vector<4x4xf32>
    %cst_53 = arith.constant dense<0.000000e+00> : vector<256x4xf32>
    %125 = tpu.matmul %122, %124, %cst_53 {dimension_numbers = #tpu.dot_dimension_numbers<[1], [0], [0], [1], [0, 0, 1, 1], [], []>} : vector<256x4xf32>, vector<4x4xf32>, vector<256x4xf32> -> vector<256x4xf32>
    %126 = arith.addf %118, %125 : vector<256x4xf32>
    %127 = vector.shape_cast %90 : vector<16x16x4xf32> to vector<256x4xf32>
    %c4_54 = arith.constant 4 : index
    %c0_55 = arith.constant 0 : index
    %c0_56 = arith.constant 0 : index
    %128 = vector.load %arg3[%c4_54, %c0_55, %c0_56] : memref<9x4x4xf32, #tpu.memory_space<vmem>>, vector<1x4x4xf32>
    %129 = vector.shape_cast %128 : vector<1x4x4xf32> to vector<4x4xf32>
    %cst_57 = arith.constant dense<0.000000e+00> : vector<256x4xf32>
    %130 = tpu.matmul %127, %129, %cst_57 {dimension_numbers = #tpu.dot_dimension_numbers<[1], [0], [0], [1], [0, 0, 1, 1], [], []>} : vector<256x4xf32>, vector<4x4xf32>, vector<256x4xf32> -> vector<256x4xf32>
    %131 = arith.addf %126, %130 : vector<256x4xf32>
    %132 = vector.extract_strided_slice %90 {offsets = [1, 0, 0], sizes = [15, 16, 4], strides = [1, 1, 1]} : vector<16x16x4xf32> to vector<15x16x4xf32>
    %133 = vector.extract_strided_slice %90 {offsets = [14, 0, 0], sizes = [1, 16, 4], strides = [1, 1, 1]} : vector<16x16x4xf32> to vector<1x16x4xf32>
    %134 = tpu.concatenate %132, %133 in 0 : vector<15x16x4xf32>, vector<1x16x4xf32> -> vector<16x16x4xf32>
    %135 = vector.shape_cast %134 : vector<16x16x4xf32> to vector<256x4xf32>
    %c7_58 = arith.constant 7 : index
    %c0_59 = arith.constant 0 : index
    %c0_60 = arith.constant 0 : index
    %136 = vector.load %arg3[%c7_58, %c0_59, %c0_60] : memref<9x4x4xf32, #tpu.memory_space<vmem>>, vector<1x4x4xf32>
    %137 = vector.shape_cast %136 : vector<1x4x4xf32> to vector<4x4xf32>
    %cst_61 = arith.constant dense<0.000000e+00> : vector<256x4xf32>
    %138 = tpu.matmul %135, %137, %cst_61 {dimension_numbers = #tpu.dot_dimension_numbers<[1], [0], [0], [1], [0, 0, 1, 1], [], []>} : vector<256x4xf32>, vector<4x4xf32>, vector<256x4xf32> -> vector<256x4xf32>
    %139 = arith.addf %131, %138 : vector<256x4xf32>
    %140 = vector.extract_strided_slice %96 {offsets = [1, 0, 0], sizes = [1, 16, 4], strides = [1, 1, 1]} : vector<16x16x4xf32> to vector<1x16x4xf32>
    %141 = vector.extract_strided_slice %96 {offsets = [0, 0, 0], sizes = [15, 16, 4], strides = [1, 1, 1]} : vector<16x16x4xf32> to vector<15x16x4xf32>
    %142 = tpu.concatenate %140, %141 in 0 : vector<1x16x4xf32>, vector<15x16x4xf32> -> vector<16x16x4xf32>
    %143 = vector.shape_cast %142 : vector<16x16x4xf32> to vector<256x4xf32>
    %c2_62 = arith.constant 2 : index
    %c0_63 = arith.constant 0 : index
    %c0_64 = arith.constant 0 : index
    %144 = vector.load %arg3[%c2_62, %c0_63, %c0_64] : memref<9x4x4xf32, #tpu.memory_space<vmem>>, vector<1x4x4xf32>
    %145 = vector.shape_cast %144 : vector<1x4x4xf32> to vector<4x4xf32>
    %cst_65 = arith.constant dense<0.000000e+00> : vector<256x4xf32>
    %146 = tpu.matmul %143, %145, %cst_65 {dimension_numbers = #tpu.dot_dimension_numbers<[1], [0], [0], [1], [0, 0, 1, 1], [], []>} : vector<256x4xf32>, vector<4x4xf32>, vector<256x4xf32> -> vector<256x4xf32>
    %147 = arith.addf %139, %146 : vector<256x4xf32>
    %148 = vector.shape_cast %96 : vector<16x16x4xf32> to vector<256x4xf32>
    %c5_66 = arith.constant 5 : index
    %c0_67 = arith.constant 0 : index
    %c0_68 = arith.constant 0 : index
    %149 = vector.load %arg3[%c5_66, %c0_67, %c0_68] : memref<9x4x4xf32, #tpu.memory_space<vmem>>, vector<1x4x4xf32>
    %150 = vector.shape_cast %149 : vector<1x4x4xf32> to vector<4x4xf32>
    %cst_69 = arith.constant dense<0.000000e+00> : vector<256x4xf32>
    %151 = tpu.matmul %148, %150, %cst_69 {dimension_numbers = #tpu.dot_dimension_numbers<[1], [0], [0], [1], [0, 0, 1, 1], [], []>} : vector<256x4xf32>, vector<4x4xf32>, vector<256x4xf32> -> vector<256x4xf32>
    %152 = arith.addf %147, %151 : vector<256x4xf32>
    %153 = vector.extract_strided_slice %96 {offsets = [1, 0, 0], sizes = [15, 16, 4], strides = [1, 1, 1]} : vector<16x16x4xf32> to vector<15x16x4xf32>
    %154 = vector.extract_strided_slice %96 {offsets = [14, 0, 0], sizes = [1, 16, 4], strides = [1, 1, 1]} : vector<16x16x4xf32> to vector<1x16x4xf32>
    %155 = tpu.concatenate %153, %154 in 0 : vector<15x16x4xf32>, vector<1x16x4xf32> -> vector<16x16x4xf32>
    %156 = vector.shape_cast %155 : vector<16x16x4xf32> to vector<256x4xf32>
    %c8_70 = arith.constant 8 : index
    %c0_71 = arith.constant 0 : index
    %c0_72 = arith.constant 0 : index
    %157 = vector.load %arg3[%c8_70, %c0_71, %c0_72] : memref<9x4x4xf32, #tpu.memory_space<vmem>>, vector<1x4x4xf32>
    %158 = vector.shape_cast %157 : vector<1x4x4xf32> to vector<4x4xf32>
    %cst_73 = arith.constant dense<0.000000e+00> : vector<256x4xf32>
    %159 = tpu.matmul %156, %158, %cst_73 {dimension_numbers = #tpu.dot_dimension_numbers<[1], [0], [0], [1], [0, 0, 1, 1], [], []>} : vector<256x4xf32>, vector<4x4xf32>, vector<256x4xf32> -> vector<256x4xf32>
    %160 = arith.addf %152, %159 : vector<256x4xf32>
    %161 = vector.shape_cast %1 : vector<16x16x4xf32> to vector<256x4xf32>
    %cst_74 = arith.constant dense<0.000000e+00> : vector<4xf32>
    %162 = vector.multi_reduction <add>, %160, %cst_74 [0] : vector<256x4xf32> to vector<4xf32>
    %163 = vector.shape_cast %162 : vector<4xf32> to vector<1x4xf32>
    %cst_75 = arith.constant 3.906250e-03 : f32
    %164 = vector.broadcast %cst_75 : f32 to vector<1x4xf32>
    %165 = arith.mulf %163, %164 : vector<1x4xf32>
    %166 = vector.broadcast %165 : vector<1x4xf32> to vector<256x4xf32>
    %167 = arith.subf %160, %166 : vector<256x4xf32>
    %168 = arith.mulf %167, %167 : vector<256x4xf32>
    %cst_76 = arith.constant dense<0.000000e+00> : vector<4xf32>
    %169 = vector.multi_reduction <add>, %168, %cst_76 [0] : vector<256x4xf32> to vector<4xf32>
    %170 = vector.shape_cast %169 : vector<4xf32> to vector<1x4xf32>
    %cst_77 = arith.constant 3.906250e-03 : f32
    %171 = vector.broadcast %cst_77 : f32 to vector<1x4xf32>
    %172 = arith.mulf %170, %171 : vector<1x4xf32>
    %cst_78 = arith.constant 9.99999974E-6 : f32
    %173 = vector.broadcast %cst_78 : f32 to vector<1x4xf32>
    %174 = arith.addf %172, %173 : vector<1x4xf32>
    %175 = math.rsqrt %174 : vector<1x4xf32>
    %176 = vector.broadcast %175 : vector<1x4xf32> to vector<256x4xf32>
    %177 = arith.mulf %167, %176 : vector<256x4xf32>
    %178 = arith.addf %161, %177 : vector<256x4xf32>
    %179 = vector.shape_cast %178 : vector<256x4xf32> to vector<16x16x4xf32>
    %c0_79 = arith.constant 0 : index
    %c0_80 = arith.constant 0 : index
    %c0_81 = arith.constant 0 : index
    %c0_82 = arith.constant 0 : index
    %180 = vector.load %arg4[%c0_79, %c0_80, %c0_81, %c0_82] : memref<1x16x16x4xf32, #tpu.memory_space<vmem>>, vector<1x16x16x4xf32>
    %181 = vector.shape_cast %180 : vector<1x16x16x4xf32> to vector<16x16x4xf32>
    %182 = vector.shape_cast %179 : vector<16x16x4xf32> to vector<1x16x16x4xf32>
    tpu.vector_store %arg4[%c0_79, %c0_80, %c0_81, %c0_82], %182 {strides = array<i32>} : memref<1x16x16x4xf32, #tpu.memory_space<vmem>>, vector<1x16x16x4xf32>,
    return
  }
  func.func @transform_0(%arg0: i32) -> (i32, i32, i32, i32) {
    %c0_i32 = arith.constant 0 : i32
    %c0_i32_0 = arith.constant 0 : i32
    %c0_i32_1 = arith.constant 0 : i32
    %c0_i32_2 = arith.constant 0 : i32
    return %arg0, %c0_i32, %c0_i32_0, %c0_i32_1 : i32, i32, i32, i32
  }
  func.func @transform_1(%arg0: i32) -> (i32, i32, i32) {
    %c0_i32 = arith.constant 0 : i32
    %c0_i32_0 = arith.constant 0 : i32
    %c0_i32_1 = arith.constant 0 : i32
    %c0_i32_2 = arith.constant 0 : i32
    return %c0_i32, %c0_i32_0, %c0_i32_1 : i32, i32, i32
  }
  func.func @transform_2(%arg0: i32) -> (i32, i32, i32) {
    %c0_i32 = arith.constant 0 : i32
    %c0_i32_0 = arith.constant 0 : i32
    %c0_i32_1 = arith.constant 0 : i32
    %c0_i32_2 = arith.constant 0 : i32
    return %c0_i32, %c0_i32_0, %c0_i32_1 : i32, i32, i32
  }
  func.func @transform_3(%arg0: i32) -> (i32, i32, i32, i32) {
    %c0_i32 = arith.constant 0 : i32
    %c0_i32_0 = arith.constant 0 : i32
    %c0_i32_1 = arith.constant 0 : i32
    %c0_i32_2 = arith.constant 0 : i32
    return %arg0, %c0_i32, %c0_i32_0, %c0_i32_1 : i32, i32, i32, i32
  }
}

</mosaic_0001>

<llo_original>
// kernel: tpu_custom_call.1
$region0: #{tpu_custom_call.1}
  #allocation0 [shape = 'u32[]', space=smem, size = 0x4, offset = 0x4, fixed_abs, tag = 'smem constant byte address 0x4 - core index']
  #allocation1 [shape = 'u32[144,128]{1,0:T(1,128)}', space=vmem, size = 0x12000, scoped, tag = 'internal scratch']
  %s0 = inlined_call_operand.vmem [shape: f32[2,16,16,4], index: 0, kind: input, shape index: {}]
  %s1 = inlined_call_operand.vmem [shape: f32[9,4,4], index: 1, kind: input, shape index: {}]
  %s2 = inlined_call_operand.vmem [shape: f32[9,4,4], index: 2, kind: input, shape index: {}]
  %s3 = inlined_call_operand.vmem [shape: f32[2,16,16,4], index: 3, kind: output, shape index: {}]
  %s4 = sld [smem:[#allocation0]]
  $region45: #{tpu_custom_call.1} parent=0
    _
  %s6 = ssub.s32 1, %s4
  %s7 = scalar_select 0, %s6, %s4
  loop: start=0, step=1, limit=4
  $region2: #{tpu_custom_call.1} parent=0 // loop_pre_header
    _
  $region3: #{tpu_custom_call.1} parent=0 // loop_header
    %s9 = sphi 0, %s13
    %p10 = scmp.ge.s32.totalorder %s9, 4
    %s19 = sphi 0, %s21
    %s22 = sphi 0, %s19
    %s23 = sphi 0, %s22
    %s39 = sphi 0, %s23
    %s43 = sphi 0, %s43
    %s45 = sphi 0, %s43
    %s46 = sphi 0, %s45
    %s60 = sphi 0, %s46
    %s64 = sphi 0, %s64
    %s66 = sphi 0, %s64
    %s67 = sphi 0, %s66
    %s81 = sphi 0, %s67
    %s87 = sphi 0, %s89
    %s90 = sphi 0, %s87
    %s91 = sphi 0, %s90
    %s107 = sphi 0, %s91
  $region4: #{tpu_custom_call.1} parent=0 // loop_header_branch
    %12 = sbr.rel (%p10) target = $region8
  $region5: #{tpu_custom_call.1} parent=0 // loop_body
    %s14 = ssub.s32 %s9, 1
    %s15 = ssub.s32 %s9, 2
    %s16 = sadd.s32 %s9, 1
    %s17 = ssub.s32 %s9, %s16
    %p18 = scmp.eq.s32.totalorder %s17, 0
    %s20 = sadd.s32 %s19, 1
    %s21 = scalar_select %p18, %s19, %s20
    %p24 = pneg %p18
    %p25 = scmp.eq.s32.totalorder %s9, 1
    %p26 = por %p24, %p25
    %p27 = scmp.ne.s32.totalorder %s19, %s22
    %p28 = scmp.eq.s32.totalorder %s9, 0
    %p29 = por %p27, %p28
    %p30 = scmp.ne.s32.totalorder %s19, %s22
    %p31 = scmp.eq.s32.totalorder %s14, 1
    %p32 = por %p30, %p31
    %p33 = scmp.ne.s32.totalorder %s22, %s23
    %p34 = scmp.eq.s32.totalorder %s14, 0
    %p35 = por %p33, %p34
    %p36 = scmp.ne.s32.totalorder %s22, %s23
    %p37 = scmp.eq.s32.totalorder %s15, 1
    %p38 = por %p36, %p37
    %p40 = scmp.ne.s32.totalorder %s23, %s39
    %p41 = scmp.eq.s32.totalorder %s15, 0
    %p42 = por %p40, %p41
    %s44 = sadd.s32 %s43, 1
    %p47 = scmp.eq.s32.totalorder %s9, 1
    %p48 = scmp.ne.s32.totalorder %s43, %s45
    %p49 = scmp.eq.s32.totalorder %s9, 0
    %p50 = por %p48, %p49
    %p51 = scmp.ne.s32.totalorder %s43, %s45
    %p52 = scmp.eq.s32.totalorder %s14, 1
    %p53 = por %p51, %p52
    %p54 = scmp.ne.s32.totalorder %s45, %s46
    %p55 = scmp.eq.s32.totalorder %s14, 0
    %p56 = por %p54, %p55
    %p57 = scmp.ne.s32.totalorder %s45, %s46
    %p58 = scmp.eq.s32.totalorder %s15, 1
    %p59 = por %p57, %p58
    %p61 = scmp.ne.s32.totalorder %s46, %s60
    %p62 = scmp.eq.s32.totalorder %s15, 0
    %p63 = por %p61, %p62
    %s65 = sadd.s32 %s64, 1
    %p68 = scmp.eq.s32.totalorder %s9, 1
    %p69 = scmp.ne.s32.totalorder %s64, %s66
    %p70 = scmp.eq.s32.totalorder %s9, 0
    %p71 = por %p69, %p70
    %p72 = scmp.ne.s32.totalorder %s64, %s66
    %p73 = scmp.eq.s32.totalorder %s14, 1
    %p74 = por %p72, %p73
    %p75 = scmp.ne.s32.totalorder %s66, %s67
    %p76 = scmp.eq.s32.totalorder %s14, 0
    %p77 = por %p75, %p76
    %p78 = scmp.ne.s32.totalorder %s66, %s67
    %p79 = scmp.eq.s32.totalorder %s15, 1
    %p80 = por %p78, %p79
    %p82 = scmp.ne.s32.totalorder %s67, %s81
    %p83 = scmp.eq.s32.totalorder %s15, 0
    %p84 = por %p82, %p83
    %s85 = ssub.s32 %s9, %s16
    %p86 = scmp.eq.s32.totalorder %s85, 0
    %s88 = sadd.s32 %s87, 1
    %s89 = scalar_select %p86, %s87, %s88
    %p92 = pneg %p86
    %p93 = scmp.eq.s32.totalorder %s9, 1
    %p94 = por %p92, %p93
    %p95 = scmp.ne.s32.totalorder %s87, %s90
    %p96 = scmp.eq.s32.totalorder %s9, 0
    %p97 = por %p95, %p96
    %p98 = scmp.ne.s32.totalorder %s87, %s90
    %p99 = scmp.eq.s32.totalorder %s14, 1
    %p100 = por %p98, %p99
    %p101 = scmp.ne.s32.totalorder %s90, %s91
    %p102 = scmp.eq.s32.totalorder %s14, 0
    %p103 = por %p101, %p102
    %p104 = scmp.ne.s32.totalorder %s90, %s91
    %p105 = scmp.eq.s32.totalorder %s15, 1
    %p106 = por %p104, %p105
    %p108 = scmp.ne.s32.totalorder %s91, %s107
    %p109 = scmp.eq.s32.totalorder %s15, 0
    %p110 = por %p108, %p109
    %p111 = scmp.le.s32.totalorder 1, %s9
    %p112 = scmp.lt.s32.totalorder %s9, 3
    %p113 = pnand %p111, %p112
    %p114 = pneg %p113
    // Predicated region
    $region9: #{tpu_custom_call.1} parent=5 // pred_check
      _
    $region10: #{tpu_custom_call.1} parent=5 // pred_check_branch
      %116 = sbr.rel (%p113) target = $region12
    $region11: #{tpu_custom_call.1} parent=5 // pred_region
      %s117 = ssub.s32 %s9, 1
      // Predicated region
      $region13: #{tpu_custom_call.1} parent=11 // pred_check
        %p118 = pneg %p56
      $region14: #{tpu_custom_call.1} parent=11 // pred_check_branch
        %120 = sbr.rel (%p118) target = $region16
      $region15: #{tpu_custom_call.1} parent=11 // pred_region
        _
      $region16: #{tpu_custom_call.1} parent=11 // pred_fallthru
        _
      // Predicated region
      $region17: #{tpu_custom_call.1} parent=11 // pred_check
        %p121 = pneg %p77
      $region18: #{tpu_custom_call.1} parent=11 // pred_check_branch
        %123 = sbr.rel (%p121) target = $region20
      $region19: #{tpu_custom_call.1} parent=11 // pred_region
        _
      $region20: #{tpu_custom_call.1} parent=11 // pred_fallthru
        _
    $region12: #{tpu_custom_call.1} parent=5 // pred_fallthru
      _
    %p124 = scmp.lt.s32.totalorder %s9, 2
    // Predicated region
    $region21: #{tpu_custom_call.1} parent=5 // pred_check
      %p125 = pneg %p124
    $region22: #{tpu_custom_call.1} parent=5 // pred_check_branch
      %127 = sbr.rel (%p125) target = $region24
    $region23: #{tpu_custom_call.1} parent=5 // pred_region
      // Predicated region
      $region25: #{tpu_custom_call.1} parent=23 // pred_check
        %p128 = pneg %p29
      $region26: #{tpu_custom_call.1} parent=23 // pred_check_branch
        %130 = sbr.rel (%p128) target = $region28
      $region27: #{tpu_custom_call.1} parent=23 // pred_region
        %p131 = scmp.lt.s32.totalorder %s9, 1
        %s132 = scalar_select %p131, %s9, 1
        %s133 = smul.addr %s132, 32
        %s134 = smul.addr %s133, 8
        %s135 = scalar_lea.vmem %s0, %s134
      $region28: #{tpu_custom_call.1} parent=23 // pred_fallthru
        _
    $region24: #{tpu_custom_call.1} parent=5 // pred_fallthru
      _
    %p136 = scmp.le.s32.totalorder 1, %s9
    %p137 = scmp.lt.s32.totalorder %s9, 3
    %p138 = pnand %p136, %p137
    %p139 = pneg %p138
    // Predicated region
    $region29: #{tpu_custom_call.1} parent=5 // pred_check
      _
    $region30: #{tpu_custom_call.1} parent=5 // pred_check_branch
      %141 = sbr.rel (%p138) target = $region32
    $region31: #{tpu_custom_call.1} parent=5 // pred_region
      %s142 = ssub.s32 %s9, 1
      %p143 = scmp.lt.s32.totalorder %s14, 1
      %s144 = scalar_select %p143, %s14, 1
      %s145 = smul.addr %s144, 32
      %s146 = smul.addr %s145, 8
      %s147 = scalar_lea.vmem %s0, %s146
      %p148 = pneg %p35
      %p149 = pneg %p32
      %p150 = pneg %p56
      %p151 = pneg %p53
      %p152 = pneg %p77
      %p153 = pneg %p74
      %p154 = pneg %p103
      %p155 = pneg %p100
      %p156 = scmp.lt.s32.totalorder %s14, 1
      %s157 = scalar_select %p156, %s14, 1
      %s158 = smul.addr %s157, 32
      %s159 = smul.addr %s158, 8
      %s160 = scalar_lea.vmem %s3, %s159
      %p161 = scmp.lt.s32.totalorder %s14, 1
      %s162 = scalar_select %p161, %s14, 1
      %s163 = smul.addr %s162, 32
      %s164 = smul.addr %s163, 8
      %s165 = scalar_lea.vmem %s0, %s164
      %p166 = scmp.lt.s32.totalorder %s14, 1
      %s167 = scalar_select %p166, %s14, 1
      %s168 = smul.addr %s167, 32
      %s169 = smul.addr %s168, 8
      %s170 = scalar_lea.vmem %s3, %s169
      %v171 = vld [vmem:[%s165] sm:$0xff]
      %v172 = vld [vmem:[%s165 + $0x8] sm:$0xff]
      %v173 = vld [vmem:[%s165 + $0x10] sm:$0xff]
      %v174 = vld [vmem:[%s165 + $0x18] sm:$0xff]
      %v175 = vld [vmem:[%s165 + $0x20] sm:$0xff]
      %v176 = vld [vmem:[%s165 + $0x28] sm:$0xff]
      %v177 = vld [vmem:[%s165 + $0x30] sm:$0xff]
      %v178 = vld [vmem:[%s165 + $0x38] sm:$0xff]
      %v179 = vld [vmem:[%s165 + $0x40] sm:$0xff]
      %v180 = vld [vmem:[%s165 + $0x48] sm:$0xff]
      %v181 = vld [vmem:[%s165 + $0x50] sm:$0xff]
      %v182 = vld [vmem:[%s165 + $0x58] sm:$0xff]
      %v183 = vld [vmem:[%s165 + $0x60] sm:$0xff]
      %v184 = vld [vmem:[%s165 + $0x68] sm:$0xff]
      %v185 = vld [vmem:[%s165 + $0x70] sm:$0xff]
      %v186 = vld [vmem:[%s165 + $0x78] sm:$0xff]
      %v187 = vld [vmem:[%s165 + $0x80] sm:$0xff]
      %v188 = vld [vmem:[%s165 + $0x88] sm:$0xff]
      %v189 = vld [vmem:[%s165 + $0x90] sm:$0xff]
      %v190 = vld [vmem:[%s165 + $0x98] sm:$0xff]
      %v191 = vld [vmem:[%s165 + $0xa0] sm:$0xff]
      %v192 = vld [vmem:[%s165 + $0xa8] sm:$0xff]
      %v193 = vld [vmem:[%s165 + $0xb0] sm:$0xff]
      %v194 = vld [vmem:[%s165 + $0xb8] sm:$0xff]
      %v195 = vld [vmem:[%s165 + $0xc0] sm:$0xff]
      %v196 = vld [vmem:[%s165 + $0xc8] sm:$0xff]
      %v197 = vld [vmem:[%s165 + $0xd0] sm:$0xff]
      %v198 = vld [vmem:[%s165 + $0xd8] sm:$0xff]
      %v199 = vld [vmem:[%s165 + $0xe0] sm:$0xff]
      %v200 = vld [vmem:[%s165 + $0xe8] sm:$0xff]
      %v201 = vld [vmem:[%s165 + $0xf0] sm:$0xff]
      %v202 = vld [vmem:[%s165 + $0xf8] sm:$0xff]
      %v219 = vrot.slane %v171, 1
      %v220 = vrot.slane %v173, 1
      %v221 = vrot.slane %v175, 1
      %v222 = vrot.slane %v177, 1
      %v223 = vrot.slane %v179, 1
      %v224 = vrot.slane %v181, 1
      %v225 = vrot.slane %v183, 1
      %v226 = vrot.slane %v185, 1
      %v227 = vrot.slane %v187, 1
      %v228 = vrot.slane %v189, 1
      %v229 = vrot.slane %v191, 1
      %v230 = vrot.slane %v193, 1
      %v231 = vrot.slane %v195, 1
      %v232 = vrot.slane %v197, 1
      %v233 = vrot.slane %v199, 1
      %v234 = vrot.slane %v201, 1
      %vm267 = vcmask 1040384
      %v268 = vrot.slane %v171, 7
      %v269 = vrot.slane %v172, 7
      %v270 = vsel %vm267, %v268, %v269
      %v271 = vrot.slane %v173, 7
      %v272 = vrot.slane %v174, 7
      %v273 = vsel %vm267, %v271, %v272
      %v274 = vrot.slane %v175, 7
      %v275 = vrot.slane %v176, 7
      %v276 = vsel %vm267, %v274, %v275
      %v277 = vrot.slane %v177, 7
      %v278 = vrot.slane %v178, 7
      %v279 = vsel %vm267, %v277, %v278
      %v280 = vrot.slane %v179, 7
      %v281 = vrot.slane %v180, 7
      %v282 = vsel %vm267, %v280, %v281
      %v283 = vrot.slane %v181, 7
      %v284 = vrot.slane %v182, 7
      %v285 = vsel %vm267, %v283, %v284
      %v286 = vrot.slane %v183, 7
      %v287 = vrot.slane %v184, 7
      %v288 = vsel %vm267, %v286, %v287
      %v289 = vrot.slane %v185, 7
      %v290 = vrot.slane %v186, 7
      %v291 = vsel %vm267, %v289, %v290
      %v292 = vrot.slane %v187, 7
      %v293 = vrot.slane %v188, 7
      %v294 = vsel %vm267, %v292, %v293
      %v295 = vrot.slane %v189, 7
      %v296 = vrot.slane %v190, 7
      %v297 = vsel %vm267, %v295, %v296
      %v298 = vrot.slane %v191, 7
      %v299 = vrot.slane %v192, 7
      %v300 = vsel %vm267, %v298, %v299
      %v301 = vrot.slane %v193, 7
      %v302 = vrot.slane %v194, 7
      %v303 = vsel %vm267, %v301, %v302
      %v304 = vrot.slane %v195, 7
      %v305 = vrot.slane %v196, 7
      %v306 = vsel %vm267, %v304, %v305
      %v307 = vrot.slane %v197, 7
      %v308 = vrot.slane %v198, 7
      %v309 = vsel %vm267, %v307, %v308
      %v310 = vrot.slane %v199, 7
      %v311 = vrot.slane %v200, 7
      %v312 = vsel %vm267, %v310, %v311
      %v313 = vrot.slane %v201, 7
      %v314 = vrot.slane %v202, 7
      %v315 = vsel %vm267, %v313, %v314
      %v332 = vsel %vm267, %v219, %v268
      %v333 = vsel %vm267, %v220, %v271
      %v334 = vsel %vm267, %v221, %v274
      %v335 = vsel %vm267, %v222, %v277
      %v336 = vsel %vm267, %v223, %v280
      %v337 = vsel %vm267, %v224, %v283
      %v338 = vsel %vm267, %v225, %v286
      %v339 = vsel %vm267, %v226, %v289
      %v340 = vsel %vm267, %v227, %v292
      %v341 = vsel %vm267, %v228, %v295
      %v342 = vsel %vm267, %v229, %v298
      %v343 = vsel %vm267, %v230, %v301
      %v344 = vsel %vm267, %v231, %v304
      %v345 = vsel %vm267, %v232, %v307
      %v346 = vsel %vm267, %v233, %v310
      %v347 = vsel %vm267, %v234, %v313
      %vm348 = vcmask 1046528
      %v349 = vrot.slane %v172, 1
      %v350 = vsel %vm348, %v219, %v349
      %v351 = vrot.slane %v174, 1
      %v352 = vsel %vm348, %v220, %v351
      %v353 = vrot.slane %v176, 1
      %v354 = vsel %vm348, %v221, %v353
      %v355 = vrot.slane %v178, 1
      %v356 = vsel %vm348, %v222, %v355
      %v357 = vrot.slane %v180, 1
      %v358 = vsel %vm348, %v223, %v357
      %v359 = vrot.slane %v182, 1
      %v360 = vsel %vm348, %v224, %v359
      %v361 = vrot.slane %v184, 1
      %v362 = vsel %vm348, %v225, %v361
      %v363 = vrot.slane %v186, 1
      %v364 = vsel %vm348, %v226, %v363
      %v365 = vrot.slane %v188, 1
      %v366 = vsel %vm348, %v227, %v365
      %v367 = vrot.slane %v190, 1
      %v368 = vsel %vm348, %v228, %v367
      %v369 = vrot.slane %v192, 1
      %v370 = vsel %vm348, %v229, %v369
      %v371 = vrot.slane %v194, 1
      %v372 = vsel %vm348, %v230, %v371
      %v373 = vrot.slane %v196, 1
      %v374 = vsel %vm348, %v231, %v373
      %v375 = vrot.slane %v198, 1
      %v376 = vsel %vm348, %v232, %v375
      %v377 = vrot.slane %v200, 1
      %v378 = vsel %vm348, %v233, %v377
      %v379 = vrot.slane %v202, 1
      %v380 = vsel %vm348, %v234, %v379
      %v413 = vsel %vm348, %v349, %v269
      %v414 = vsel %vm348, %v351, %v272
      %v415 = vsel %vm348, %v353, %v275
      %v416 = vsel %vm348, %v355, %v278
      %v417 = vsel %vm348, %v357, %v281
      %v418 = vsel %vm348, %v359, %v284
      %v419 = vsel %vm348, %v361, %v287
      %v420 = vsel %vm348, %v363, %v290
      %v421 = vsel %vm348, %v365, %v293
      %v422 = vsel %vm348, %v367, %v296
      %v423 = vsel %vm348, %v369, %v299
      %v424 = vsel %vm348, %v371, %v302
      %v425 = vsel %vm348, %v373, %v305
      %v426 = vsel %vm348, %v375, %v308
      %v427 = vsel %vm348, %v377, %v311
      %v428 = vsel %vm348, %v379, %v314
      %v429 = vld [vmem:[%s1] sm:$0xf]
      %s430 = scalar_lea.vmem %s1, 12
      %v431 = vld [vmem:[%s430] sm:$0xf]
      %vm432 = vcmask 31744
      %v434 = vsel %vm432, %v332, 0
      %v436 = vsel %vm432, %v270, 0
      %v439 = vsel %vm432, %v333, 0
      %v441 = vsel %vm432, %v273, 0
      %v444 = vsel %vm432, %v334, 0
      %v446 = vsel %vm432, %v276, 0
      %v449 = vsel %vm432, %v335, 0
      %v451 = vsel %vm432, %v279, 0
      %v454 = vsel %vm432, %v336, 0
      %v456 = vsel %vm432, %v282, 0
      %v459 = vsel %vm432, %v337, 0
      %v461 = vsel %vm432, %v285, 0
      %v464 = vsel %vm432, %v338, 0
      %v466 = vsel %vm432, %v288, 0
      %v469 = vsel %vm432, %v339, 0
      %v471 = vsel %vm432, %v291, 0
      %v474 = vsel %vm432, %v340, 0
      %v476 = vsel %vm432, %v294, 0
      %v479 = vsel %vm432, %v341, 0
      %v481 = vsel %vm432, %v297, 0
      %v484 = vsel %vm432, %v342, 0
      %v486 = vsel %vm432, %v300, 0
      %v489 = vsel %vm432, %v343, 0
      %v491 = vsel %vm432, %v303, 0
      %v494 = vsel %vm432, %v344, 0
      %v496 = vsel %vm432, %v306, 0
      %v499 = vsel %vm432, %v345, 0
      %v501 = vsel %vm432, %v309, 0
      %v504 = vsel %vm432, %v346, 0
      %v506 = vsel %vm432, %v312, 0
      %v509 = vsel %vm432, %v347, 0
      %v511 = vsel %vm432, %v315, 0
      %vm513 = vcmask 1043456
      %v515 = vsel %vm513, %v431, 0
      %517 = vmatprep.subr.mxu0 0.0
      %518 = vmatpush1.msra.mxu0 0.0
      %519 = vmatprep.subr.mxu0 0.0
      %520 = vmatpush1.msra.mxu0 0.0
      %521 = vmatprep.subr.mxu0 0.0
      %522 = vmatpush1.msra.mxu0 0.0
      %523 = vmatprep.subr.mxu0 0.0
      %524 = vmatpush1.msra.mxu0 0.0
      %525 = vmatprep.subr.mxu0 0.0
      %526 = vmatpush1.msra.mxu0 0.0
      %527 = vmatprep.subr.mxu0 0.0
      %528 = vmatpush1.msra.mxu0 0.0
      %529 = vmatprep.subr.mxu0 0.0
      %530 = vmatpush1.msra.mxu0 0.0
      %531 = vmatprep.subr.mxu0 0.0
      %532 = vmatpush1.msra.mxu0 0.0
      %533 = vmatprep.subr.mxu0 0.0
      %534 = vmatpush1.msra.mxu0 0.0
      %535 = vmatprep.subr.mxu0 0.0
      %536 = vmatpush1.msra.mxu0 0.0
      %537 = vmatprep.subr.mxu0 0.0
      %538 = vmatpush1.msra.mxu0 0.0
      %539 = vmatprep.subr.mxu0 0.0
      %540 = vmatpush1.msra.mxu0 0.0
      %541 = vmatprep.subr.mxu0 0.0
      %542 = vmatpush1.msra.mxu0 0.0
      %543 = vmatprep.subr.mxu0 0.0
      %544 = vmatpush1.msra.mxu0 0.0
      %545 = vmatprep.subr.mxu0 0.0
      %546 = vmatpush1.msra.mxu0 0.0
      %547 = vmatprep.subr.mxu0 0.0
      %548 = vmatpush1.msra.mxu0 %v515
      %549 = vmatprep.subr.mxu0 0.0
      %550 = vmatpush2.msra.mxu0 0.0
      %551 = vmatprep.subr.mxu0 0.0
      %552 = vmatpush2.msra.mxu0 0.0
      %553 = vmatprep.subr.mxu0 0.0
      %554 = vmatpush2.msra.mxu0 0.0
      %555 = vmatprep.subr.mxu0 0.0
      %556 = vmatpush2.msra.mxu0 0.0
      %557 = vmatprep.subr.mxu0 0.0
      %558 = vmatpush2.msra.mxu0 0.0
      %559 = vmatprep.subr.mxu0 0.0
      %560 = vmatpush2.msra.mxu0 0.0
      %561 = vmatprep.subr.mxu0 0.0
      %562 = vmatpush2.msra.mxu0 0.0
      %563 = vmatprep.subr.mxu0 0.0
      %564 = vmatpush2.msra.mxu0 0.0
      %565 = vmatprep.subr.mxu0 0.0
      %566 = vmatpush2.msra.mxu0 0.0
      %567 = vmatprep.subr.mxu0 0.0
      %568 = vmatpush2.msra.mxu0 0.0
      %569 = vmatprep.subr.mxu0 0.0
      %570 = vmatpush2.msra.mxu0 0.0
      %571 = vmatprep.subr.mxu0 0.0
      %572 = vmatpush2.msra.mxu0 0.0
      %573 = vmatprep.subr.mxu0 0.0
      %574 = vmatpush2.msra.mxu0 0.0
      %575 = vmatprep.subr.mxu0 0.0
      %576 = vmatpush2.msra.mxu0 0.0
      %577 = vmatprep.subr.mxu0 0.0
      %578 = vmatpush2.msra.mxu0 0.0
      %579 = vmatprep.subr.mxu0 0.0
      %580 = vmatpush2.msra.mxu0 0.0
      %581 = vmatprep.mubr.f32.mxu0 0.0
      %582 = vmatmul.mubr.f32.gmra.mxu0 %v434
      %v583 = vpop.f32.mrf.mxu0
      %v584 = vadd.f32 0.0, %v583
      %v585 = vpop.f32.mrf.mxu0
      %586 = vmatprep.mubr.f32.mxu0 0.0
      %587 = vmatmul.mubr.f32.gmra.mxu0 %v436
      %v588 = vpop.f32.mrf.mxu0
      %v589 = vadd.f32 0.0, %v588
      %v590 = vpop.f32.mrf.mxu0
      %591 = vmatprep.mubr.f32.mxu0 0.0
      %592 = vmatmul.mubr.f32.gmra.mxu0 %v439
      %v593 = vpop.f32.mrf.mxu0
      %v594 = vadd.f32 0.0, %v593
      %v595 = vpop.f32.mrf.mxu0
      %596 = vmatprep.mubr.f32.mxu0 0.0
      %597 = vmatmul.mubr.f32.gmra.mxu0 %v441
      %v598 = vpop.f32.mrf.mxu0
      %v599 = vadd.f32 0.0, %v598
      %v600 = vpop.f32.mrf.mxu0
      %601 = vmatprep.mubr.f32.mxu0 0.0
      %602 = vmatmul.mubr.f32.gmra.mxu0 %v444
      %v603 = vpop.f32.mrf.mxu0
      %v604 = vadd.f32 0.0, %v603
      %v605 = vpop.f32.mrf.mxu0
      %606 = vmatprep.mubr.f32.mxu0 0.0
      %607 = vmatmul.mubr.f32.gmra.mxu0 %v446
      %v608 = vpop.f32.mrf.mxu0
      %v609 = vadd.f32 0.0, %v608
      %v610 = vpop.f32.mrf.mxu0
      %611 = vmatprep.mubr.f32.mxu0 0.0
      %612 = vmatmul.mubr.f32.gmra.mxu0 %v449
      %v613 = vpop.f32.mrf.mxu0
      %v614 = vadd.f32 0.0, %v613
      %v615 = vpop.f32.mrf.mxu0
      %616 = vmatprep.mubr.f32.mxu0 0.0
      %617 = vmatmul.mubr.f32.gmra.mxu0 %v451
      %v618 = vpop.f32.mrf.mxu0
      %v619 = vadd.f32 0.0, %v618
      %v620 = vpop.f32.mrf.mxu0
      %621 = vmatprep.mubr.f32.mxu0 0.0
      %622 = vmatmul.mubr.f32.gmra.mxu0 %v454
      %v623 = vpop.f32.mrf.mxu0
      %v624 = vadd.f32 0.0, %v623
      %v625 = vpop.f32.mrf.mxu0
      %626 = vmatprep.mubr.f32.mxu0 0.0
      %627 = vmatmul.mubr.f32.gmra.mxu0 %v456
      %v628 = vpop.f32.mrf.mxu0
      %v629 = vadd.f32 0.0, %v628
      %v630 = vpop.f32.mrf.mxu0
      %631 = vmatprep.mubr.f32.mxu0 0.0
      %632 = vmatmul.mubr.f32.gmra.mxu0 %v459
      %v633 = vpop.f32.mrf.mxu0
      %v634 = vadd.f32 0.0, %v633
      %v635 = vpop.f32.mrf.mxu0
      %636 = vmatprep.mubr.f32.mxu0 0.0
      %637 = vmatmul.mubr.f32.gmra.mxu0 %v461
      %v638 = vpop.f32.mrf.mxu0
      %v639 = vadd.f32 0.0, %v638
      %v640 = vpop.f32.mrf.mxu0
      %641 = vmatprep.mubr.f32.mxu0 0.0
      %642 = vmatmul.mubr.f32.gmra.mxu0 %v464
      %v643 = vpop.f32.mrf.mxu0
      %v644 = vadd.f32 0.0, %v643
      %v645 = vpop.f32.mrf.mxu0
      %646 = vmatprep.mubr.f32.mxu0 0.0
      %647 = vmatmul.mubr.f32.gmra.mxu0 %v466
      %v648 = vpop.f32.mrf.mxu0
      %v649 = vadd.f32 0.0, %v648
      %v650 = vpop.f32.mrf.mxu0
      %651 = vmatprep.mubr.f32.mxu0 0.0
      %652 = vmatmul.mubr.f32.gmra.mxu0 %v469
      %v653 = vpop.f32.mrf.mxu0
      %v654 = vadd.f32 0.0, %v653
      %v655 = vpop.f32.mrf.mxu0
      %656 = vmatprep.mubr.f32.mxu0 0.0
      %657 = vmatmul.mubr.f32.gmra.mxu0 %v471
      %v658 = vpop.f32.mrf.mxu0
      %v659 = vadd.f32 0.0, %v658
      %v660 = vpop.f32.mrf.mxu0
      %661 = vmatprep.mubr.f32.mxu0 0.0
      %662 = vmatmul.mubr.f32.gmra.mxu0 %v474
      %v663 = vpop.f32.mrf.mxu0
      %v664 = vadd.f32 0.0, %v663
      %v665 = vpop.f32.mrf.mxu0
      %666 = vmatprep.mubr.f32.mxu0 0.0
      %667 = vmatmul.mubr.f32.gmra.mxu0 %v476
      %v668 = vpop.f32.mrf.mxu0
      %v669 = vadd.f32 0.0, %v668
      %v670 = vpop.f32.mrf.mxu0
      %671 = vmatprep.mubr.f32.mxu0 0.0
      %672 = vmatmul.mubr.f32.gmra.mxu0 %v479
      %v673 = vpop.f32.mrf.mxu0
      %v674 = vadd.f32 0.0, %v673
      %v675 = vpop.f32.mrf.mxu0
      %676 = vmatprep.mubr.f32.mxu0 0.0
      %677 = vmatmul.mubr.f32.gmra.mxu0 %v481
      %v678 = vpop.f32.mrf.mxu0
      %v679 = vadd.f32 0.0, %v678
      %v680 = vpop.f32.mrf.mxu0
      %681 = vmatprep.mubr.f32.mxu0 0.0
      %682 = vmatmul.mubr.f32.gmra.mxu0 %v484
      %v683 = vpop.f32.mrf.mxu0
      %v684 = vadd.f32 0.0, %v683
      %v685 = vpop.f32.mrf.mxu0
      %686 = vmatprep.mubr.f32.mxu0 0.0
      %687 = vmatmul.mubr.f32.gmra.mxu0 %v486
      %v688 = vpop.f32.mrf.mxu0
      %v689 = vadd.f32 0.0, %v688
      %v690 = vpop.f32.mrf.mxu0
      %691 = vmatprep.mubr.f32.mxu0 0.0
      %692 = vmatmul.mubr.f32.gmra.mxu0 %v489
      %v693 = vpop.f32.mrf.mxu0
      %v694 = vadd.f32 0.0, %v693
      %v695 = vpop.f32.mrf.mxu0
      %696 = vmatprep.mubr.f32.mxu0 0.0
      %697 = vmatmul.mubr.f32.gmra.mxu0 %v491
      %v698 = vpop.f32.mrf.mxu0
      %v699 = vadd.f32 0.0, %v698
      %v700 = vpop.f32.mrf.mxu0
      %701 = vmatprep.mubr.f32.mxu0 0.0
      %702 = vmatmul.mubr.f32.gmra.mxu0 %v494
      %v703 = vpop.f32.mrf.mxu0
      %v704 = vadd.f32 0.0, %v703
      %v705 = vpop.f32.mrf.mxu0
      %706 = vmatprep.mubr.f32.mxu0 0.0
      %707 = vmatmul.mubr.f32.gmra.mxu0 %v496
      %v708 = vpop.f32.mrf.mxu0
      %v709 = vadd.f32 0.0, %v708
      %v710 = vpop.f32.mrf.mxu0
      %711 = vmatprep.mubr.f32.mxu0 0.0
      %712 = vmatmul.mubr.f32.gmra.mxu0 %v499
      %v713 = vpop.f32.mrf.mxu0
      %v714 = vadd.f32 0.0, %v713
      %v715 = vpop.f32.mrf.mxu0
      %716 = vmatprep.mubr.f32.mxu0 0.0
      %717 = vmatmul.mubr.f32.gmra.mxu0 %v501
      %v718 = vpop.f32.mrf.mxu0
      %v719 = vadd.f32 0.0, %v718
      %v720 = vpop.f32.mrf.mxu0
      %721 = vmatprep.mubr.f32.mxu0 0.0
      %722 = vmatmul.mubr.f32.gmra.mxu0 %v504
      %v723 = vpop.f32.mrf.mxu0
      %v724 = vadd.f32 0.0, %v723
      %v725 = vpop.f32.mrf.mxu0
      %726 = vmatprep.mubr.f32.mxu0 0.0
      %727 = vmatmul.mubr.f32.gmra.mxu0 %v506
      %v728 = vpop.f32.mrf.mxu0
      %v729 = vadd.f32 0.0, %v728
      %v730 = vpop.f32.mrf.mxu0
      %731 = vmatprep.mubr.f32.mxu0 0.0
      %732 = vmatmul.mubr.f32.gmra.mxu0 %v509
      %v733 = vpop.f32.mrf.mxu0
      %v734 = vadd.f32 0.0, %v733
      %v735 = vpop.f32.mrf.mxu0
      %736 = vmatprep.mubr.f32.mxu0 0.0
      %737 = vmatmul.mubr.f32.gmra.mxu0 %v511
      %v738 = vpop.f32.mrf.mxu0
      %v739 = vadd.f32 0.0, %v738
      %v740 = vpop.f32.mrf.mxu0
      %741 = vdwg.mxu0
      %v743 = vsel %vm513, %v429, 0
      %745 = vmatprep.subr.mxu0 0.0
      %746 = vmatpush1.msra.mxu0 0.0
      %747 = vmatprep.subr.mxu0 0.0
      %748 = vmatpush1.msra.mxu0 0.0
      %749 = vmatprep.subr.mxu0 0.0
      %750 = vmatpush1.msra.mxu0 0.0
      %751 = vmatprep.subr.mxu0 0.0
      %752 = vmatpush1.msra.mxu0 0.0
      %753 = vmatprep.subr.mxu0 0.0
      %754 = vmatpush1.msra.mxu0 0.0
      %755 = vmatprep.subr.mxu0 0.0
      %756 = vmatpush1.msra.mxu0 0.0
      %757 = vmatprep.subr.mxu0 0.0
      %758 = vmatpush1.msra.mxu0 0.0
      %759 = vmatprep.subr.mxu0 0.0
      %760 = vmatpush1.msra.mxu0 0.0
      %761 = vmatprep.subr.mxu0 0.0
      %762 = vmatpush1.msra.mxu0 0.0
      %763 = vmatprep.subr.mxu0 0.0
      %764 = vmatpush1.msra.mxu0 0.0
      %765 = vmatprep.subr.mxu0 0.0
      %766 = vmatpush1.msra.mxu0 0.0
      %767 = vmatprep.subr.mxu0 0.0
      %768 = vmatpush1.msra.mxu0 0.0
      %769 = vmatprep.subr.mxu0 0.0
      %770 = vmatpush1.msra.mxu0 0.0
      %771 = vmatprep.subr.mxu0 0.0
      %772 = vmatpush1.msra.mxu0 0.0
      %773 = vmatprep.subr.mxu0 0.0
      %774 = vmatpush1.msra.mxu0 0.0
      %775 = vmatprep.subr.mxu0 0.0
      %776 = vmatpush1.msra.mxu0 %v743
      %777 = vmatprep.subr.mxu0 0.0
      %778 = vmatpush2.msra.mxu0 0.0
      %779 = vmatprep.subr.mxu0 0.0
      %780 = vmatpush2.msra.mxu0 0.0
      %781 = vmatprep.subr.mxu0 0.0
      %782 = vmatpush2.msra.mxu0 0.0
      %783 = vmatprep.subr.mxu0 0.0
      %784 = vmatpush2.msra.mxu0 0.0
      %785 = vmatprep.subr.mxu0 0.0
      %786 = vmatpush2.msra.mxu0 0.0
      %787 = vmatprep.subr.mxu0 0.0
      %788 = vmatpush2.msra.mxu0 0.0
      %789 = vmatprep.subr.mxu0 0.0
      %790 = vmatpush2.msra.mxu0 0.0
      %791 = vmatprep.subr.mxu0 0.0
      %792 = vmatpush2.msra.mxu0 0.0
      %793 = vmatprep.subr.mxu0 0.0
      %794 = vmatpush2.msra.mxu0 0.0
      %795 = vmatprep.subr.mxu0 0.0
      %796 = vmatpush2.msra.mxu0 0.0
      %797 = vmatprep.subr.mxu0 0.0
      %798 = vmatpush2.msra.mxu0 0.0
      %799 = vmatprep.subr.mxu0 0.0
      %800 = vmatpush2.msra.mxu0 0.0
      %801 = vmatprep.subr.mxu0 0.0
      %802 = vmatpush2.msra.mxu0 0.0
      %803 = vmatprep.subr.mxu0 0.0
      %804 = vmatpush2.msra.mxu0 0.0
      %805 = vmatprep.subr.mxu0 0.0
      %806 = vmatpush2.msra.mxu0 0.0
      %807 = vmatprep.subr.mxu0 0.0
      %808 = vmatpush2.msra.mxu0 0.0
      %809 = vmatprep.mubr.f32.mxu0 0.0
      %810 = vmatmul.mubr.f32.gmra.mxu0 %v439
      %v811 = vpop.f32.mrf.mxu0
      %v812 = vadd.f32 %v584, %v811
      %v813 = vpop.f32.mrf.mxu0
      %814 = vmatprep.mubr.f32.mxu0 0.0
      %815 = vmatmul.mubr.f32.gmra.mxu0 %v441
      %v816 = vpop.f32.mrf.mxu0
      %v817 = vadd.f32 %v589, %v816
      %v818 = vpop.f32.mrf.mxu0
      %819 = vmatprep.mubr.f32.mxu0 0.0
      %820 = vmatmul.mubr.f32.gmra.mxu0 %v434
      %v821 = vpop.f32.mrf.mxu0
      %v822 = vadd.f32 %v594, %v821
      %v823 = vpop.f32.mrf.mxu0
      %824 = vmatprep.mubr.f32.mxu0 0.0
      %825 = vmatmul.mubr.f32.gmra.mxu0 %v436
      %v826 = vpop.f32.mrf.mxu0
      %v827 = vadd.f32 %v599, %v826
      %v828 = vpop.f32.mrf.mxu0
      %829 = vmatprep.mubr.f32.mxu0 0.0
      %830 = vmatmul.mubr.f32.gmra.mxu0 %v439
      %v831 = vpop.f32.mrf.mxu0
      %v832 = vadd.f32 %v604, %v831
      %v833 = vpop.f32.mrf.mxu0
      %834 = vmatprep.mubr.f32.mxu0 0.0
      %835 = vmatmul.mubr.f32.gmra.mxu0 %v441
      %v836 = vpop.f32.mrf.mxu0
      %v837 = vadd.f32 %v609, %v836
      %v838 = vpop.f32.mrf.mxu0
      %839 = vmatprep.mubr.f32.mxu0 0.0
      %840 = vmatmul.mubr.f32.gmra.mxu0 %v444
      %v841 = vpop.f32.mrf.mxu0
      %v842 = vadd.f32 %v614, %v841
      %v843 = vpop.f32.mrf.mxu0
      %844 = vmatprep.mubr.f32.mxu0 0.0
      %845 = vmatmul.mubr.f32.gmra.mxu0 %v446
      %v846 = vpop.f32.mrf.mxu0
      %v847 = vadd.f32 %v619, %v846
      %v848 = vpop.f32.mrf.mxu0
      %849 = vmatprep.mubr.f32.mxu0 0.0
      %850 = vmatmul.mubr.f32.gmra.mxu0 %v449
      %v851 = vpop.f32.mrf.mxu0
      %v852 = vadd.f32 %v624, %v851
      %v853 = vpop.f32.mrf.mxu0
      %854 = vmatprep.mubr.f32.mxu0 0.0
      %855 = vmatmul.mubr.f32.gmra.mxu0 %v451
      %v856 = vpop.f32.mrf.mxu0
      %v857 = vadd.f32 %v629, %v856
      %v858 = vpop.f32.mrf.mxu0
      %859 = vmatprep.mubr.f32.mxu0 0.0
      %860 = vmatmul.mubr.f32.gmra.mxu0 %v454
      %v861 = vpop.f32.mrf.mxu0
      %v862 = vadd.f32 %v634, %v861
      %v863 = vpop.f32.mrf.mxu0
      %864 = vmatprep.mubr.f32.mxu0 0.0
      %865 = vmatmul.mubr.f32.gmra.mxu0 %v456
      %v866 = vpop.f32.mrf.mxu0
      %v867 = vadd.f32 %v639, %v866
      %v868 = vpop.f32.mrf.mxu0
      %869 = vmatprep.mubr.f32.mxu0 0.0
      %870 = vmatmul.mubr.f32.gmra.mxu0 %v459
      %v871 = vpop.f32.mrf.mxu0
      %v872 = vadd.f32 %v644, %v871
      %v873 = vpop.f32.mrf.mxu0
      %874 = vmatprep.mubr.f32.mxu0 0.0
      %875 = vmatmul.mubr.f32.gmra.mxu0 %v461
      %v876 = vpop.f32.mrf.mxu0
      %v877 = vadd.f32 %v649, %v876
      %v878 = vpop.f32.mrf.mxu0
      %879 = vmatprep.mubr.f32.mxu0 0.0
      %880 = vmatmul.mubr.f32.gmra.mxu0 %v464
      %v881 = vpop.f32.mrf.mxu0
      %v882 = vadd.f32 %v654, %v881
      %v883 = vpop.f32.mrf.mxu0
      %884 = vmatprep.mubr.f32.mxu0 0.0
      %885 = vmatmul.mubr.f32.gmra.mxu0 %v466
      %v886 = vpop.f32.mrf.mxu0
      %v887 = vadd.f32 %v659, %v886
      %v888 = vpop.f32.mrf.mxu0
      %889 = vmatprep.mubr.f32.mxu0 0.0
      %890 = vmatmul.mubr.f32.gmra.mxu0 %v469
      %v891 = vpop.f32.mrf.mxu0
      %v892 = vadd.f32 %v664, %v891
      %v893 = vpop.f32.mrf.mxu0
      %894 = vmatprep.mubr.f32.mxu0 0.0
      %895 = vmatmul.mubr.f32.gmra.mxu0 %v471
      %v896 = vpop.f32.mrf.mxu0
      %v897 = vadd.f32 %v669, %v896
      %v898 = vpop.f32.mrf.mxu0
      %899 = vmatprep.mubr.f32.mxu0 0.0
      %900 = vmatmul.mubr.f32.gmra.mxu0 %v474
      %v901 = vpop.f32.mrf.mxu0
      %v902 = vadd.f32 %v674, %v901
      %v903 = vpop.f32.mrf.mxu0
      %904 = vmatprep.mubr.f32.mxu0 0.0
      %905 = vmatmul.mubr.f32.gmra.mxu0 %v476
      %v906 = vpop.f32.mrf.mxu0
      %v907 = vadd.f32 %v679, %v906
      %v908 = vpop.f32.mrf.mxu0
      %909 = vmatprep.mubr.f32.mxu0 0.0
      %910 = vmatmul.mubr.f32.gmra.mxu0 %v479
      %v911 = vpop.f32.mrf.mxu0
      %v912 = vadd.f32 %v684, %v911
      %v913 = vpop.f32.mrf.mxu0
      %914 = vmatprep.mubr.f32.mxu0 0.0
      %915 = vmatmul.mubr.f32.gmra.mxu0 %v481
      %v916 = vpop.f32.mrf.mxu0
      %v917 = vadd.f32 %v689, %v916
      %v918 = vpop.f32.mrf.mxu0
      %919 = vmatprep.mubr.f32.mxu0 0.0
      %920 = vmatmul.mubr.f32.gmra.mxu0 %v484
      %v921 = vpop.f32.mrf.mxu0
      %v922 = vadd.f32 %v694, %v921
      %v923 = vpop.f32.mrf.mxu0
      %924 = vmatprep.mubr.f32.mxu0 0.0
      %925 = vmatmul.mubr.f32.gmra.mxu0 %v486
      %v926 = vpop.f32.mrf.mxu0
      %v927 = vadd.f32 %v699, %v926
      %v928 = vpop.f32.mrf.mxu0
      %929 = vmatprep.mubr.f32.mxu0 0.0
      %930 = vmatmul.mubr.f32.gmra.mxu0 %v489
      %v931 = vpop.f32.mrf.mxu0
      %v932 = vadd.f32 %v704, %v931
      %v933 = vpop.f32.mrf.mxu0
      %934 = vmatprep.mubr.f32.mxu0 0.0
      %935 = vmatmul.mubr.f32.gmra.mxu0 %v491
      %v936 = vpop.f32.mrf.mxu0
      %v937 = vadd.f32 %v709, %v936
      %v938 = vpop.f32.mrf.mxu0
      %939 = vmatprep.mubr.f32.mxu0 0.0
      %940 = vmatmul.mubr.f32.gmra.mxu0 %v494
      %v941 = vpop.f32.mrf.mxu0
      %v942 = vadd.f32 %v714, %v941
      %v943 = vpop.f32.mrf.mxu0
      %944 = vmatprep.mubr.f32.mxu0 0.0
      %945 = vmatmul.mubr.f32.gmra.mxu0 %v496
      %v946 = vpop.f32.mrf.mxu0
      %v947 = vadd.f32 %v719, %v946
      %v948 = vpop.f32.mrf.mxu0
      %949 = vmatprep.mubr.f32.mxu0 0.0
      %950 = vmatmul.mubr.f32.gmra.mxu0 %v499
      %v951 = vpop.f32.mrf.mxu0
      %v952 = vadd.f32 %v724, %v951
      %v953 = vpop.f32.mrf.mxu0
      %954 = vmatprep.mubr.f32.mxu0 0.0
      %955 = vmatmul.mubr.f32.gmra.mxu0 %v501
      %v956 = vpop.f32.mrf.mxu0
      %v957 = vadd.f32 %v729, %v956
      %v958 = vpop.f32.mrf.mxu0
      %959 = vmatprep.mubr.f32.mxu0 0.0
      %960 = vmatmul.mubr.f32.gmra.mxu0 %v504
      %v961 = vpop.f32.mrf.mxu0
      %v962 = vadd.f32 %v734, %v961
      %v963 = vpop.f32.mrf.mxu0
      %964 = vmatprep.mubr.f32.mxu0 0.0
      %965 = vmatmul.mubr.f32.gmra.mxu0 %v506
      %v966 = vpop.f32.mrf.mxu0
      %v967 = vadd.f32 %v739, %v966
      %v968 = vpop.f32.mrf.mxu0
      %969 = vdwg.mxu0
      %s970 = scalar_lea.vmem %s1, 24
      %v971 = vld [vmem:[%s970] sm:$0xf]
      %v973 = vsel %vm513, %v971, 0
      %975 = vmatprep.subr.mxu0 0.0
      %976 = vmatpush1.msra.mxu0 0.0
      %977 = vmatprep.subr.mxu0 0.0
      %978 = vmatpush1.msra.mxu0 0.0
      %979 = vmatprep.subr.mxu0 0.0
      %980 = vmatpush1.msra.mxu0 0.0
      %981 = vmatprep.subr.mxu0 0.0
      %982 = vmatpush1.msra.mxu0 0.0
      %983 = vmatprep.subr.mxu0 0.0
      %984 = vmatpush1.msra.mxu0 0.0
      %985 = vmatprep.subr.mxu0 0.0
      %986 = vmatpush1.msra.mxu0 0.0
      %987 = vmatprep.subr.mxu0 0.0
      %988 = vmatpush1.msra.mxu0 0.0
      %989 = vmatprep.subr.mxu0 0.0
      %990 = vmatpush1.msra.mxu0 0.0
      %991 = vmatprep.subr.mxu0 0.0
      %992 = vmatpush1.msra.mxu0 0.0
      %993 = vmatprep.subr.mxu0 0.0
      %994 = vmatpush1.msra.mxu0 0.0
      %995 = vmatprep.subr.mxu0 0.0
      %996 = vmatpush1.msra.mxu0 0.0
      %997 = vmatprep.subr.mxu0 0.0
      %998 = vmatpush1.msra.mxu0 0.0
      %999 = vmatprep.subr.mxu0 0.0
      %1000 = vmatpush1.msra.mxu0 0.0
      %1001 = vmatprep.subr.mxu0 0.0
      %1002 = vmatpush1.msra.mxu0 0.0
      %1003 = vmatprep.subr.mxu0 0.0
      %1004 = vmatpush1.msra.mxu0 0.0
      %1005 = vmatprep.subr.mxu0 0.0
      %1006 = vmatpush1.msra.mxu0 %v973
      %1007 = vmatprep.subr.mxu0 0.0
      %1008 = vmatpush2.msra.mxu0 0.0
      %1009 = vmatprep.subr.mxu0 0.0
      %1010 = vmatpush2.msra.mxu0 0.0
      %1011 = vmatprep.subr.mxu0 0.0
      %1012 = vmatpush2.msra.mxu0 0.0
      %1013 = vmatprep.subr.mxu0 0.0
      %1014 = vmatpush2.msra.mxu0 0.0
      %1015 = vmatprep.subr.mxu0 0.0
      %1016 = vmatpush2.msra.mxu0 0.0
      %1017 = vmatprep.subr.mxu0 0.0
      %1018 = vmatpush2.msra.mxu0 0.0
      %1019 = vmatprep.subr.mxu0 0.0
      %1020 = vmatpush2.msra.mxu0 0.0
      %1021 = vmatprep.subr.mxu0 0.0
      %1022 = vmatpush2.msra.mxu0 0.0
      %1023 = vmatprep.subr.mxu0 0.0
      %1024 = vmatpush2.msra.mxu0 0.0
      %1025 = vmatprep.subr.mxu0 0.0
      %1026 = vmatpush2.msra.mxu0 0.0
      %1027 = vmatprep.subr.mxu0 0.0
      %1028 = vmatpush2.msra.mxu0 0.0
      %1029 = vmatprep.subr.mxu0 0.0
      %1030 = vmatpush2.msra.mxu0 0.0
      %1031 = vmatprep.subr.mxu0 0.0
      %1032 = vmatpush2.msra.mxu0 0.0
      %1033 = vmatprep.subr.mxu0 0.0
      %1034 = vmatpush2.msra.mxu0 0.0
      %1035 = vmatprep.subr.mxu0 0.0
      %1036 = vmatpush2.msra.mxu0 0.0
      %1037 = vmatprep.subr.mxu0 0.0
      %1038 = vmatpush2.msra.mxu0 0.0
      %1039 = vmatprep.mubr.f32.mxu0 0.0
      %1040 = vmatmul.mubr.f32.gmra.mxu0 %v439
      %v1041 = vpop.f32.mrf.mxu0
      %v1042 = vadd.f32 0.0, %v1041
      %v1043 = vpop.f32.mrf.mxu0
      %1044 = vmatprep.mubr.f32.mxu0 0.0
      %1045 = vmatmul.mubr.f32.gmra.mxu0 %v441
      %v1046 = vpop.f32.mrf.mxu0
      %v1047 = vadd.f32 0.0, %v1046
      %v1048 = vpop.f32.mrf.mxu0
      %1049 = vmatprep.mubr.f32.mxu0 0.0
      %1050 = vmatmul.mubr.f32.gmra.mxu0 %v444
      %v1051 = vpop.f32.mrf.mxu0
      %v1052 = vadd.f32 0.0, %v1051
      %v1053 = vpop.f32.mrf.mxu0
      %1054 = vmatprep.mubr.f32.mxu0 0.0
      %1055 = vmatmul.mubr.f32.gmra.mxu0 %v446
      %v1056 = vpop.f32.mrf.mxu0
      %v1057 = vadd.f32 0.0, %v1056
      %v1058 = vpop.f32.mrf.mxu0
      %1059 = vmatprep.mubr.f32.mxu0 0.0
      %1060 = vmatmul.mubr.f32.gmra.mxu0 %v449
      %v1061 = vpop.f32.mrf.mxu0
      %v1062 = vadd.f32 0.0, %v1061
      %v1063 = vpop.f32.mrf.mxu0
      %1064 = vmatprep.mubr.f32.mxu0 0.0
      %1065 = vmatmul.mubr.f32.gmra.mxu0 %v451
      %v1066 = vpop.f32.mrf.mxu0
      %v1067 = vadd.f32 0.0, %v1066
      %v1068 = vpop.f32.mrf.mxu0
      %1069 = vmatprep.mubr.f32.mxu0 0.0
      %1070 = vmatmul.mubr.f32.gmra.mxu0 %v454
      %v1071 = vpop.f32.mrf.mxu0
      %v1072 = vadd.f32 0.0, %v1071
      %v1073 = vpop.f32.mrf.mxu0
      %1074 = vmatprep.mubr.f32.mxu0 0.0
      %1075 = vmatmul.mubr.f32.gmra.mxu0 %v456
      %v1076 = vpop.f32.mrf.mxu0
      %v1077 = vadd.f32 0.0, %v1076
      %v1078 = vpop.f32.mrf.mxu0
      %1079 = vmatprep.mubr.f32.mxu0 0.0
      %1080 = vmatmul.mubr.f32.gmra.mxu0 %v459
      %v1081 = vpop.f32.mrf.mxu0
      %v1082 = vadd.f32 0.0, %v1081
      %v1083 = vpop.f32.mrf.mxu0
      %1084 = vmatprep.mubr.f32.mxu0 0.0
      %1085 = vmatmul.mubr.f32.gmra.mxu0 %v461
      %v1086 = vpop.f32.mrf.mxu0
      %v1087 = vadd.f32 0.0, %v1086
      %v1088 = vpop.f32.mrf.mxu0
      %1089 = vmatprep.mubr.f32.mxu0 0.0
      %1090 = vmatmul.mubr.f32.gmra.mxu0 %v464
      %v1091 = vpop.f32.mrf.mxu0
      %v1092 = vadd.f32 0.0, %v1091
      %v1093 = vpop.f32.mrf.mxu0
      %1094 = vmatprep.mubr.f32.mxu0 0.0
      %1095 = vmatmul.mubr.f32.gmra.mxu0 %v466
      %v1096 = vpop.f32.mrf.mxu0
      %v1097 = vadd.f32 0.0, %v1096
      %v1098 = vpop.f32.mrf.mxu0
      %1099 = vmatprep.mubr.f32.mxu0 0.0
      %1100 = vmatmul.mubr.f32.gmra.mxu0 %v469
      %v1101 = vpop.f32.mrf.mxu0
      %v1102 = vadd.f32 0.0, %v1101
      %v1103 = vpop.f32.mrf.mxu0
      %1104 = vmatprep.mubr.f32.mxu0 0.0
      %1105 = vmatmul.mubr.f32.gmra.mxu0 %v471
      %v1106 = vpop.f32.mrf.mxu0
      %v1107 = vadd.f32 0.0, %v1106
      %v1108 = vpop.f32.mrf.mxu0
      %1109 = vmatprep.mubr.f32.mxu0 0.0
      %1110 = vmatmul.mubr.f32.gmra.mxu0 %v474
      %v1111 = vpop.f32.mrf.mxu0
      %v1112 = vadd.f32 0.0, %v1111
      %v1113 = vpop.f32.mrf.mxu0
      %1114 = vmatprep.mubr.f32.mxu0 0.0
      %1115 = vmatmul.mubr.f32.gmra.mxu0 %v476
      %v1116 = vpop.f32.mrf.mxu0
      %v1117 = vadd.f32 0.0, %v1116
      %v1118 = vpop.f32.mrf.mxu0
      %1119 = vmatprep.mubr.f32.mxu0 0.0
      %1120 = vmatmul.mubr.f32.gmra.mxu0 %v479
      %v1121 = vpop.f32.mrf.mxu0
      %v1122 = vadd.f32 0.0, %v1121
      %v1123 = vpop.f32.mrf.mxu0
      %1124 = vmatprep.mubr.f32.mxu0 0.0
      %1125 = vmatmul.mubr.f32.gmra.mxu0 %v481
      %v1126 = vpop.f32.mrf.mxu0
      %v1127 = vadd.f32 0.0, %v1126
      %v1128 = vpop.f32.mrf.mxu0
      %1129 = vmatprep.mubr.f32.mxu0 0.0
      %1130 = vmatmul.mubr.f32.gmra.mxu0 %v484
      %v1131 = vpop.f32.mrf.mxu0
      %v1132 = vadd.f32 0.0, %v1131
      %v1133 = vpop.f32.mrf.mxu0
      %1134 = vmatprep.mubr.f32.mxu0 0.0
      %1135 = vmatmul.mubr.f32.gmra.mxu0 %v486
      %v1136 = vpop.f32.mrf.mxu0
      %v1137 = vadd.f32 0.0, %v1136
      %v1138 = vpop.f32.mrf.mxu0
      %1139 = vmatprep.mubr.f32.mxu0 0.0
      %1140 = vmatmul.mubr.f32.gmra.mxu0 %v489
      %v1141 = vpop.f32.mrf.mxu0
      %v1142 = vadd.f32 0.0, %v1141
      %v1143 = vpop.f32.mrf.mxu0
      %1144 = vmatprep.mubr.f32.mxu0 0.0
      %1145 = vmatmul.mubr.f32.gmra.mxu0 %v491
      %v1146 = vpop.f32.mrf.mxu0
      %v1147 = vadd.f32 0.0, %v1146
      %v1148 = vpop.f32.mrf.mxu0
      %1149 = vmatprep.mubr.f32.mxu0 0.0
      %1150 = vmatmul.mubr.f32.gmra.mxu0 %v494
      %v1151 = vpop.f32.mrf.mxu0
      %v1152 = vadd.f32 0.0, %v1151
      %v1153 = vpop.f32.mrf.mxu0
      %1154 = vmatprep.mubr.f32.mxu0 0.0
      %1155 = vmatmul.mubr.f32.gmra.mxu0 %v496
      %v1156 = vpop.f32.mrf.mxu0
      %v1157 = vadd.f32 0.0, %v1156
      %v1158 = vpop.f32.mrf.mxu0
      %1159 = vmatprep.mubr.f32.mxu0 0.0
      %1160 = vmatmul.mubr.f32.gmra.mxu0 %v499
      %v1161 = vpop.f32.mrf.mxu0
      %v1162 = vadd.f32 0.0, %v1161
      %v1163 = vpop.f32.mrf.mxu0
      %1164 = vmatprep.mubr.f32.mxu0 0.0
      %1165 = vmatmul.mubr.f32.gmra.mxu0 %v501
      %v1166 = vpop.f32.mrf.mxu0
      %v1167 = vadd.f32 0.0, %v1166
      %v1168 = vpop.f32.mrf.mxu0
      %1169 = vmatprep.mubr.f32.mxu0 0.0
      %1170 = vmatmul.mubr.f32.gmra.mxu0 %v504
      %v1171 = vpop.f32.mrf.mxu0
      %v1172 = vadd.f32 0.0, %v1171
      %v1173 = vpop.f32.mrf.mxu0
      %1174 = vmatprep.mubr.f32.mxu0 0.0
      %1175 = vmatmul.mubr.f32.gmra.mxu0 %v506
      %v1176 = vpop.f32.mrf.mxu0
      %v1177 = vadd.f32 0.0, %v1176
      %v1178 = vpop.f32.mrf.mxu0
      %1179 = vmatprep.mubr.f32.mxu0 0.0
      %1180 = vmatmul.mubr.f32.gmra.mxu0 %v509
      %v1181 = vpop.f32.mrf.mxu0
      %v1182 = vadd.f32 0.0, %v1181
      %v1183 = vpop.f32.mrf.mxu0
      %1184 = vmatprep.mubr.f32.mxu0 0.0
      %1185 = vmatmul.mubr.f32.gmra.mxu0 %v511
      %v1186 = vpop.f32.mrf.mxu0
      %v1187 = vadd.f32 0.0, %v1186
      %v1188 = vpop.f32.mrf.mxu0
      %1189 = vmatprep.mubr.f32.mxu0 0.0
      %1190 = vmatmul.mubr.f32.gmra.mxu0 %v504
      %v1191 = vpop.f32.mrf.mxu0
      %v1192 = vadd.f32 0.0, %v1191
      %v1193 = vpop.f32.mrf.mxu0
      %1194 = vmatprep.mubr.f32.mxu0 0.0
      %1195 = vmatmul.mubr.f32.gmra.mxu0 %v506
      %v1196 = vpop.f32.mrf.mxu0
      %v1197 = vadd.f32 0.0, %v1196
      %v1198 = vpop.f32.mrf.mxu0
      %1199 = vdwg.mxu0
      %v1200 = vadd.f32 %v812, %v1042
      %v1201 = vadd.f32 %v817, %v1047
      %v1202 = vadd.f32 %v822, %v1052
      %v1203 = vadd.f32 %v827, %v1057
      %v1204 = vadd.f32 %v832, %v1062
      %v1205 = vadd.f32 %v837, %v1067
      %v1206 = vadd.f32 %v842, %v1072
      %v1207 = vadd.f32 %v847, %v1077
      %v1208 = vadd.f32 %v852, %v1082
      %v1209 = vadd.f32 %v857, %v1087
      %v1210 = vadd.f32 %v862, %v1092
      %v1211 = vadd.f32 %v867, %v1097
      %v1212 = vadd.f32 %v872, %v1102
      %v1213 = vadd.f32 %v877, %v1107
      %v1214 = vadd.f32 %v882, %v1112
      %v1215 = vadd.f32 %v887, %v1117
      %v1216 = vadd.f32 %v892, %v1122
      %v1217 = vadd.f32 %v897, %v1127
      %v1218 = vadd.f32 %v902, %v1132
      %v1219 = vadd.f32 %v907, %v1137
      %v1220 = vadd.f32 %v912, %v1142
      %v1221 = vadd.f32 %v917, %v1147
      %v1222 = vadd.f32 %v922, %v1152
      %v1223 = vadd.f32 %v927, %v1157
      %v1224 = vadd.f32 %v932, %v1162
      %v1225 = vadd.f32 %v937, %v1167
      %v1226 = vadd.f32 %v942, %v1172
      %v1227 = vadd.f32 %v947, %v1177
      %v1228 = vadd.f32 %v952, %v1182
      %v1229 = vadd.f32 %v957, %v1187
      %v1230 = vadd.f32 %v962, %v1192
      %v1231 = vadd.f32 %v967, %v1197
      %s1232 = scalar_lea.vmem %s1, 4
      %v1233 = vld [vmem:[%s1232] sm:$0xf]
      %v1234 = vsel %vm432, %v173, 0
      %v1236 = vsel %vm432, %v174, 0
      %v1238 = vsel %vm432, %v171, 0
      %v1240 = vsel %vm432, %v172, 0
      %v1242 = vsel %vm432, %v175, 0
      %v1244 = vsel %vm432, %v176, 0
      %v1246 = vsel %vm432, %v177, 0
      %v1248 = vsel %vm432, %v178, 0
      %v1250 = vsel %vm432, %v179, 0
      %v1252 = vsel %vm432, %v180, 0
      %v1254 = vsel %vm432, %v181, 0
      %v1256 = vsel %vm432, %v182, 0
      %v1258 = vsel %vm432, %v183, 0
      %v1260 = vsel %vm432, %v184, 0
      %v1262 = vsel %vm432, %v185, 0
      %v1264 = vsel %vm432, %v186, 0
      %v1266 = vsel %vm432, %v187, 0
      %v1268 = vsel %vm432, %v188, 0
      %v1270 = vsel %vm432, %v189, 0
      %v1272 = vsel %vm432, %v190, 0
      %v1274 = vsel %vm432, %v191, 0
      %v1276 = vsel %vm432, %v192, 0
      %v1278 = vsel %vm432, %v193, 0
      %v1280 = vsel %vm432, %v194, 0
      %v1282 = vsel %vm432, %v195, 0
      %v1284 = vsel %vm432, %v196, 0
      %v1286 = vsel %vm432, %v197, 0
      %v1288 = vsel %vm432, %v198, 0
      %v1290 = vsel %vm432, %v199, 0
      %v1292 = vsel %vm432, %v200, 0
      %v1295 = vsel %vm513, %v1233, 0
      %1297 = vmatprep.subr.mxu0 0.0
      %1298 = vmatpush1.msra.mxu0 0.0
      %1299 = vmatprep.subr.mxu0 0.0
      %1300 = vmatpush1.msra.mxu0 0.0
      %1301 = vmatprep.subr.mxu0 0.0
      %1302 = vmatpush1.msra.mxu0 0.0
      %1303 = vmatprep.subr.mxu0 0.0
      %1304 = vmatpush1.msra.mxu0 0.0
      %1305 = vmatprep.subr.mxu0 0.0
      %1306 = vmatpush1.msra.mxu0 0.0
      %1307 = vmatprep.subr.mxu0 0.0
      %1308 = vmatpush1.msra.mxu0 0.0
      %1309 = vmatprep.subr.mxu0 0.0
      %1310 = vmatpush1.msra.mxu0 0.0
      %1311 = vmatprep.subr.mxu0 0.0
      %1312 = vmatpush1.msra.mxu0 0.0
      %1313 = vmatprep.subr.mxu0 0.0
      %1314 = vmatpush1.msra.mxu0 0.0
      %1315 = vmatprep.subr.mxu0 0.0
      %1316 = vmatpush1.msra.mxu0 0.0
      %1317 = vmatprep.subr.mxu0 0.0
      %1318 = vmatpush1.msra.mxu0 0.0
      %1319 = vmatprep.subr.mxu0 0.0
      %1320 = vmatpush1.msra.mxu0 0.0
      %1321 = vmatprep.subr.mxu0 0.0
      %1322 = vmatpush1.msra.mxu0 0.0
      %1323 = vmatprep.subr.mxu0 0.0
      %1324 = vmatpush1.msra.mxu0 0.0
      %1325 = vmatprep.subr.mxu0 0.0
      %1326 = vmatpush1.msra.mxu0 0.0
      %1327 = vmatprep.subr.mxu0 0.0
      %1328 = vmatpush1.msra.mxu0 %v1295
      %1329 = vmatprep.subr.mxu0 0.0
      %1330 = vmatpush2.msra.mxu0 0.0
      %1331 = vmatprep.subr.mxu0 0.0
      %1332 = vmatpush2.msra.mxu0 0.0
      %1333 = vmatprep.subr.mxu0 0.0
      %1334 = vmatpush2.msra.mxu0 0.0
      %1335 = vmatprep.subr.mxu0 0.0
      %1336 = vmatpush2.msra.mxu0 0.0
      %1337 = vmatprep.subr.mxu0 0.0
      %1338 = vmatpush2.msra.mxu0 0.0
      %1339 = vmatprep.subr.mxu0 0.0
      %1340 = vmatpush2.msra.mxu0 0.0
      %1341 = vmatprep.subr.mxu0 0.0
      %1342 = vmatpush2.msra.mxu0 0.0
      %1343 = vmatprep.subr.mxu0 0.0
      %1344 = vmatpush2.msra.mxu0 0.0
      %1345 = vmatprep.subr.mxu0 0.0
      %1346 = vmatpush2.msra.mxu0 0.0
      %1347 = vmatprep.subr.mxu0 0.0
      %1348 = vmatpush2.msra.mxu0 0.0
      %1349 = vmatprep.subr.mxu0 0.0
      %1350 = vmatpush2.msra.mxu0 0.0
      %1351 = vmatprep.subr.mxu0 0.0
      %1352 = vmatpush2.msra.mxu0 0.0
      %1353 = vmatprep.subr.mxu0 0.0
      %1354 = vmatpush2.msra.mxu0 0.0
      %1355 = vmatprep.subr.mxu0 0.0
      %1356 = vmatpush2.msra.mxu0 0.0
      %1357 = vmatprep.subr.mxu0 0.0
      %1358 = vmatpush2.msra.mxu0 0.0
      %1359 = vmatprep.subr.mxu0 0.0
      %1360 = vmatpush2.msra.mxu0 0.0
      %1361 = vmatprep.mubr.f32.mxu0 0.0
      %1362 = vmatmul.mubr.f32.gmra.mxu0 %v1234
      %v1363 = vpop.f32.mrf.mxu0
      %v1364 = vadd.f32 0.0, %v1363
      %v1365 = vpop.f32.mrf.mxu0
      %1366 = vmatprep.mubr.f32.mxu0 0.0
      %1367 = vmatmul.mubr.f32.gmra.mxu0 %v1236
      %v1368 = vpop.f32.mrf.mxu0
      %v1369 = vadd.f32 0.0, %v1368
      %v1370 = vpop.f32.mrf.mxu0
      %1371 = vmatprep.mubr.f32.mxu0 0.0
      %1372 = vmatmul.mubr.f32.gmra.mxu0 %v1238
      %v1373 = vpop.f32.mrf.mxu0
      %v1374 = vadd.f32 0.0, %v1373
      %v1375 = vpop.f32.mrf.mxu0
      %1376 = vmatprep.mubr.f32.mxu0 0.0
      %1377 = vmatmul.mubr.f32.gmra.mxu0 %v1240
      %v1378 = vpop.f32.mrf.mxu0
      %v1379 = vadd.f32 0.0, %v1378
      %v1380 = vpop.f32.mrf.mxu0
      %1381 = vmatprep.mubr.f32.mxu0 0.0
      %1382 = vmatmul.mubr.f32.gmra.mxu0 %v1234
      %v1383 = vpop.f32.mrf.mxu0
      %v1384 = vadd.f32 0.0, %v1383
      %v1385 = vpop.f32.mrf.mxu0
      %1386 = vmatprep.mubr.f32.mxu0 0.0
      %1387 = vmatmul.mubr.f32.gmra.mxu0 %v1236
      %v1388 = vpop.f32.mrf.mxu0
      %v1389 = vadd.f32 0.0, %v1388
      %v1390 = vpop.f32.mrf.mxu0
      %1391 = vmatprep.mubr.f32.mxu0 0.0
      %1392 = vmatmul.mubr.f32.gmra.mxu0 %v1242
      %v1393 = vpop.f32.mrf.mxu0
      %v1394 = vadd.f32 0.0, %v1393
      %v1395 = vpop.f32.mrf.mxu0
      %1396 = vmatprep.mubr.f32.mxu0 0.0
      %1397 = vmatmul.mubr.f32.gmra.mxu0 %v1244
      %v1398 = vpop.f32.mrf.mxu0
      %v1399 = vadd.f32 0.0, %v1398
      %v1400 = vpop.f32.mrf.mxu0
      %1401 = vmatprep.mubr.f32.mxu0 0.0
      %1402 = vmatmul.mubr.f32.gmra.mxu0 %v1246
      %v1403 = vpop.f32.mrf.mxu0
      %v1404 = vadd.f32 0.0, %v1403
      %v1405 = vpop.f32.mrf.mxu0
      %1406 = vmatprep.mubr.f32.mxu0 0.0
      %1407 = vmatmul.mubr.f32.gmra.mxu0 %v1248
      %v1408 = vpop.f32.mrf.mxu0
      %v1409 = vadd.f32 0.0, %v1408
      %v1410 = vpop.f32.mrf.mxu0
      %1411 = vmatprep.mubr.f32.mxu0 0.0
      %1412 = vmatmul.mubr.f32.gmra.mxu0 %v1250
      %v1413 = vpop.f32.mrf.mxu0
      %v1414 = vadd.f32 0.0, %v1413
      %v1415 = vpop.f32.mrf.mxu0
      %1416 = vmatprep.mubr.f32.mxu0 0.0
      %1417 = vmatmul.mubr.f32.gmra.mxu0 %v1252
      %v1418 = vpop.f32.mrf.mxu0
      %v1419 = vadd.f32 0.0, %v1418
      %v1420 = vpop.f32.mrf.mxu0
      %1421 = vmatprep.mubr.f32.mxu0 0.0
      %1422 = vmatmul.mubr.f32.gmra.mxu0 %v1254
      %v1423 = vpop.f32.mrf.mxu0
      %v1424 = vadd.f32 0.0, %v1423
      %v1425 = vpop.f32.mrf.mxu0
      %1426 = vmatprep.mubr.f32.mxu0 0.0
      %1427 = vmatmul.mubr.f32.gmra.mxu0 %v1256
      %v1428 = vpop.f32.mrf.mxu0
      %v1429 = vadd.f32 0.0, %v1428
      %v1430 = vpop.f32.mrf.mxu0
      %1431 = vmatprep.mubr.f32.mxu0 0.0
      %1432 = vmatmul.mubr.f32.gmra.mxu0 %v1258
      %v1433 = vpop.f32.mrf.mxu0
      %v1434 = vadd.f32 0.0, %v1433
      %v1435 = vpop.f32.mrf.mxu0
      %1436 = vmatprep.mubr.f32.mxu0 0.0
      %1437 = vmatmul.mubr.f32.gmra.mxu0 %v1260
      %v1438 = vpop.f32.mrf.mxu0
      %v1439 = vadd.f32 0.0, %v1438
      %v1440 = vpop.f32.mrf.mxu0
      %1441 = vmatprep.mubr.f32.mxu0 0.0
      %1442 = vmatmul.mubr.f32.gmra.mxu0 %v1262
      %v1443 = vpop.f32.mrf.mxu0
      %v1444 = vadd.f32 0.0, %v1443
      %v1445 = vpop.f32.mrf.mxu0
      %1446 = vmatprep.mubr.f32.mxu0 0.0
      %1447 = vmatmul.mubr.f32.gmra.mxu0 %v1264
      %v1448 = vpop.f32.mrf.mxu0
      %v1449 = vadd.f32 0.0, %v1448
      %v1450 = vpop.f32.mrf.mxu0
      %1451 = vmatprep.mubr.f32.mxu0 0.0
      %1452 = vmatmul.mubr.f32.gmra.mxu0 %v1266
      %v1453 = vpop.f32.mrf.mxu0
      %v1454 = vadd.f32 0.0, %v1453
      %v1455 = vpop.f32.mrf.mxu0
      %1456 = vmatprep.mubr.f32.mxu0 0.0
      %1457 = vmatmul.mubr.f32.gmra.mxu0 %v1268
      %v1458 = vpop.f32.mrf.mxu0
      %v1459 = vadd.f32 0.0, %v1458
      %v1460 = vpop.f32.mrf.mxu0
      %1461 = vmatprep.mubr.f32.mxu0 0.0
      %1462 = vmatmul.mubr.f32.gmra.mxu0 %v1270
      %v1463 = vpop.f32.mrf.mxu0
      %v1464 = vadd.f32 0.0, %v1463
      %v1465 = vpop.f32.mrf.mxu0
      %1466 = vmatprep.mubr.f32.mxu0 0.0
      %1467 = vmatmul.mubr.f32.gmra.mxu0 %v1272
      %v1468 = vpop.f32.mrf.mxu0
      %v1469 = vadd.f32 0.0, %v1468
      %v1470 = vpop.f32.mrf.mxu0
      %1471 = vmatprep.mubr.f32.mxu0 0.0
      %1472 = vmatmul.mubr.f32.gmra.mxu0 %v1274
      %v1473 = vpop.f32.mrf.mxu0
      %v1474 = vadd.f32 0.0, %v1473
      %v1475 = vpop.f32.mrf.mxu0
      %1476 = vmatprep.mubr.f32.mxu0 0.0
      %1477 = vmatmul.mubr.f32.gmra.mxu0 %v1276
      %v1478 = vpop.f32.mrf.mxu0
      %v1479 = vadd.f32 0.0, %v1478
      %v1480 = vpop.f32.mrf.mxu0
      %1481 = vmatprep.mubr.f32.mxu0 0.0
      %1482 = vmatmul.mubr.f32.gmra.mxu0 %v1278
      %v1483 = vpop.f32.mrf.mxu0
      %v1484 = vadd.f32 0.0, %v1483
      %v1485 = vpop.f32.mrf.mxu0
      %1486 = vmatprep.mubr.f32.mxu0 0.0
      %1487 = vmatmul.mubr.f32.gmra.mxu0 %v1280
      %v1488 = vpop.f32.mrf.mxu0
      %v1489 = vadd.f32 0.0, %v1488
      %v1490 = vpop.f32.mrf.mxu0
      %1491 = vmatprep.mubr.f32.mxu0 0.0
      %1492 = vmatmul.mubr.f32.gmra.mxu0 %v1282
      %v1493 = vpop.f32.mrf.mxu0
      %v1494 = vadd.f32 0.0, %v1493
      %v1495 = vpop.f32.mrf.mxu0
      %1496 = vmatprep.mubr.f32.mxu0 0.0
      %1497 = vmatmul.mubr.f32.gmra.mxu0 %v1284
      %v1498 = vpop.f32.mrf.mxu0
      %v1499 = vadd.f32 0.0, %v1498
      %v1500 = vpop.f32.mrf.mxu0
      %1501 = vmatprep.mubr.f32.mxu0 0.0
      %1502 = vmatmul.mubr.f32.gmra.mxu0 %v1286
      %v1503 = vpop.f32.mrf.mxu0
      %v1504 = vadd.f32 0.0, %v1503
      %v1505 = vpop.f32.mrf.mxu0
      %1506 = vmatprep.mubr.f32.mxu0 0.0
      %1507 = vmatmul.mubr.f32.gmra.mxu0 %v1288
      %v1508 = vpop.f32.mrf.mxu0
      %v1509 = vadd.f32 0.0, %v1508
      %v1510 = vpop.f32.mrf.mxu0
      %1511 = vmatprep.mubr.f32.mxu0 0.0
      %1512 = vmatmul.mubr.f32.gmra.mxu0 %v1290
      %v1513 = vpop.f32.mrf.mxu0
      %v1514 = vadd.f32 0.0, %v1513
      %v1515 = vpop.f32.mrf.mxu0
      %1516 = vmatprep.mubr.f32.mxu0 0.0
      %1517 = vmatmul.mubr.f32.gmra.mxu0 %v1292
      %v1518 = vpop.f32.mrf.mxu0
      %v1519 = vadd.f32 0.0, %v1518
      %v1520 = vpop.f32.mrf.mxu0
      %1521 = vdwg.mxu0
      %v1522 = vadd.f32 %v1200, %v1364
      %v1523 = vadd.f32 %v1201, %v1369
      %v1524 = vadd.f32 %v1202, %v1374
      %v1525 = vadd.f32 %v1203, %v1379
      %v1526 = vadd.f32 %v1204, %v1384
      %v1527 = vadd.f32 %v1205, %v1389
      %v1528 = vadd.f32 %v1206, %v1394
      %v1529 = vadd.f32 %v1207, %v1399
      %v1530 = vadd.f32 %v1208, %v1404
      %v1531 = vadd.f32 %v1209, %v1409
      %v1532 = vadd.f32 %v1210, %v1414
      %v1533 = vadd.f32 %v1211, %v1419
      %v1534 = vadd.f32 %v1212, %v1424
      %v1535 = vadd.f32 %v1213, %v1429
      %v1536 = vadd.f32 %v1214, %v1434
      %v1537 = vadd.f32 %v1215, %v1439
      %v1538 = vadd.f32 %v1216, %v1444
      %v1539 = vadd.f32 %v1217, %v1449
      %v1540 = vadd.f32 %v1218, %v1454
      %v1541 = vadd.f32 %v1219, %v1459
      %v1542 = vadd.f32 %v1220, %v1464
      %v1543 = vadd.f32 %v1221, %v1469
      %v1544 = vadd.f32 %v1222, %v1474
      %v1545 = vadd.f32 %v1223, %v1479
      %v1546 = vadd.f32 %v1224, %v1484
      %v1547 = vadd.f32 %v1225, %v1489
      %v1548 = vadd.f32 %v1226, %v1494
      %v1549 = vadd.f32 %v1227, %v1499
      %v1550 = vadd.f32 %v1228, %v1504
      %v1551 = vadd.f32 %v1229, %v1509
      %v1552 = vadd.f32 %v1230, %v1514
      %v1553 = vadd.f32 %v1231, %v1519
      %s1554 = scalar_lea.vmem %s1, 16
      %v1555 = vld [vmem:[%s1554] sm:$0xf]
      %v1556 = vsel %vm432, %v201, 0
      %v1558 = vsel %vm432, %v202, 0
      %v1561 = vsel %vm513, %v1555, 0
      %1563 = vmatprep.subr.mxu0 0.0
      %1564 = vmatpush1.msra.mxu0 0.0
      %1565 = vmatprep.subr.mxu0 0.0
      %1566 = vmatpush1.msra.mxu0 0.0
      %1567 = vmatprep.subr.mxu0 0.0
      %1568 = vmatpush1.msra.mxu0 0.0
      %1569 = vmatprep.subr.mxu0 0.0
      %1570 = vmatpush1.msra.mxu0 0.0
      %1571 = vmatprep.subr.mxu0 0.0
      %1572 = vmatpush1.msra.mxu0 0.0
      %1573 = vmatprep.subr.mxu0 0.0
      %1574 = vmatpush1.msra.mxu0 0.0
      %1575 = vmatprep.subr.mxu0 0.0
      %1576 = vmatpush1.msra.mxu0 0.0
      %1577 = vmatprep.subr.mxu0 0.0
      %1578 = vmatpush1.msra.mxu0 0.0
      %1579 = vmatprep.subr.mxu0 0.0
      %1580 = vmatpush1.msra.mxu0 0.0
      %1581 = vmatprep.subr.mxu0 0.0
      %1582 = vmatpush1.msra.mxu0 0.0
      %1583 = vmatprep.subr.mxu0 0.0
      %1584 = vmatpush1.msra.mxu0 0.0
      %1585 = vmatprep.subr.mxu0 0.0
      %1586 = vmatpush1.msra.mxu0 0.0
      %1587 = vmatprep.subr.mxu0 0.0
      %1588 = vmatpush1.msra.mxu0 0.0
      %1589 = vmatprep.subr.mxu0 0.0
      %1590 = vmatpush1.msra.mxu0 0.0
      %1591 = vmatprep.subr.mxu0 0.0
      %1592 = vmatpush1.msra.mxu0 0.0
      %1593 = vmatprep.subr.mxu0 0.0
      %1594 = vmatpush1.msra.mxu0 %v1561
      %1595 = vmatprep.subr.mxu0 0.0
      %1596 = vmatpush2.msra.mxu0 0.0
      %1597 = vmatprep.subr.mxu0 0.0
      %1598 = vmatpush2.msra.mxu0 0.0
      %1599 = vmatprep.subr.mxu0 0.0
      %1600 = vmatpush2.msra.mxu0 0.0
      %1601 = vmatprep.subr.mxu0 0.0
      %1602 = vmatpush2.msra.mxu0 0.0
      %1603 = vmatprep.subr.mxu0 0.0
      %1604 = vmatpush2.msra.mxu0 0.0
      %1605 = vmatprep.subr.mxu0 0.0
      %1606 = vmatpush2.msra.mxu0 0.0
      %1607 = vmatprep.subr.mxu0 0.0
      %1608 = vmatpush2.msra.mxu0 0.0
      %1609 = vmatprep.subr.mxu0 0.0
      %1610 = vmatpush2.msra.mxu0 0.0
      %1611 = vmatprep.subr.mxu0 0.0
      %1612 = vmatpush2.msra.mxu0 0.0
      %1613 = vmatprep.subr.mxu0 0.0
      %1614 = vmatpush2.msra.mxu0 0.0
      %1615 = vmatprep.subr.mxu0 0.0
      %1616 = vmatpush2.msra.mxu0 0.0
      %1617 = vmatprep.subr.mxu0 0.0
      %1618 = vmatpush2.msra.mxu0 0.0
      %1619 = vmatprep.subr.mxu0 0.0
      %1620 = vmatpush2.msra.mxu0 0.0
      %1621 = vmatprep.subr.mxu0 0.0
      %1622 = vmatpush2.msra.mxu0 0.0
      %1623 = vmatprep.subr.mxu0 0.0
      %1624 = vmatpush2.msra.mxu0 0.0
      %1625 = vmatprep.subr.mxu0 0.0
      %1626 = vmatpush2.msra.mxu0 0.0
      %1627 = vmatprep.mubr.f32.mxu0 0.0
      %1628 = vmatmul.mubr.f32.gmra.mxu0 %v1238
      %v1629 = vpop.f32.mrf.mxu0
      %v1630 = vadd.f32 0.0, %v1629
      %v1631 = vpop.f32.mrf.mxu0
      %1632 = vmatprep.mubr.f32.mxu0 0.0
      %1633 = vmatmul.mubr.f32.gmra.mxu0 %v1240
      %v1634 = vpop.f32.mrf.mxu0
      %v1635 = vadd.f32 0.0, %v1634
      %v1636 = vpop.f32.mrf.mxu0
      %1637 = vmatprep.mubr.f32.mxu0 0.0
      %1638 = vmatmul.mubr.f32.gmra.mxu0 %v1234
      %v1639 = vpop.f32.mrf.mxu0
      %v1640 = vadd.f32 0.0, %v1639
      %v1641 = vpop.f32.mrf.mxu0
      %1642 = vmatprep.mubr.f32.mxu0 0.0
      %1643 = vmatmul.mubr.f32.gmra.mxu0 %v1236
      %v1644 = vpop.f32.mrf.mxu0
      %v1645 = vadd.f32 0.0, %v1644
      %v1646 = vpop.f32.mrf.mxu0
      %1647 = vmatprep.mubr.f32.mxu0 0.0
      %1648 = vmatmul.mubr.f32.gmra.mxu0 %v1242
      %v1649 = vpop.f32.mrf.mxu0
      %v1650 = vadd.f32 0.0, %v1649
      %v1651 = vpop.f32.mrf.mxu0
      %1652 = vmatprep.mubr.f32.mxu0 0.0
      %1653 = vmatmul.mubr.f32.gmra.mxu0 %v1244
      %v1654 = vpop.f32.mrf.mxu0
      %v1655 = vadd.f32 0.0, %v1654
      %v1656 = vpop.f32.mrf.mxu0
      %1657 = vmatprep.mubr.f32.mxu0 0.0
      %1658 = vmatmul.mubr.f32.gmra.mxu0 %v1246
      %v1659 = vpop.f32.mrf.mxu0
      %v1660 = vadd.f32 0.0, %v1659
      %v1661 = vpop.f32.mrf.mxu0
      %1662 = vmatprep.mubr.f32.mxu0 0.0
      %1663 = vmatmul.mubr.f32.gmra.mxu0 %v1248
      %v1664 = vpop.f32.mrf.mxu0
      %v1665 = vadd.f32 0.0, %v1664
      %v1666 = vpop.f32.mrf.mxu0
      %1667 = vmatprep.mubr.f32.mxu0 0.0
      %1668 = vmatmul.mubr.f32.gmra.mxu0 %v1250
      %v1669 = vpop.f32.mrf.mxu0
      %v1670 = vadd.f32 0.0, %v1669
      %v1671 = vpop.f32.mrf.mxu0
      %1672 = vmatprep.mubr.f32.mxu0 0.0
      %1673 = vmatmul.mubr.f32.gmra.mxu0 %v1252
      %v1674 = vpop.f32.mrf.mxu0
      %v1675 = vadd.f32 0.0, %v1674
      %v1676 = vpop.f32.mrf.mxu0
      %1677 = vmatprep.mubr.f32.mxu0 0.0
      %1678 = vmatmul.mubr.f32.gmra.mxu0 %v1254
      %v1679 = vpop.f32.mrf.mxu0
      %v1680 = vadd.f32 0.0, %v1679
      %v1681 = vpop.f32.mrf.mxu0
      %1682 = vmatprep.mubr.f32.mxu0 0.0
      %1683 = vmatmul.mubr.f32.gmra.mxu0 %v1256
      %v1684 = vpop.f32.mrf.mxu0
      %v1685 = vadd.f32 0.0, %v1684
      %v1686 = vpop.f32.mrf.mxu0
      %1687 = vmatprep.mubr.f32.mxu0 0.0
      %1688 = vmatmul.mubr.f32.gmra.mxu0 %v1258
      %v1689 = vpop.f32.mrf.mxu0
      %v1690 = vadd.f32 0.0, %v1689
      %v1691 = vpop.f32.mrf.mxu0
      %1692 = vmatprep.mubr.f32.mxu0 0.0
      %1693 = vmatmul.mubr.f32.gmra.mxu0 %v1260
      %v1694 = vpop.f32.mrf.mxu0
      %v1695 = vadd.f32 0.0, %v1694
      %v1696 = vpop.f32.mrf.mxu0
      %1697 = vmatprep.mubr.f32.mxu0 0.0
      %1698 = vmatmul.mubr.f32.gmra.mxu0 %v1262
      %v1699 = vpop.f32.mrf.mxu0
      %v1700 = vadd.f32 0.0, %v1699
      %v1701 = vpop.f32.mrf.mxu0
      %1702 = vmatprep.mubr.f32.mxu0 0.0
      %1703 = vmatmul.mubr.f32.gmra.mxu0 %v1264
      %v1704 = vpop.f32.mrf.mxu0
      %v1705 = vadd.f32 0.0, %v1704
      %v1706 = vpop.f32.mrf.mxu0
      %1707 = vmatprep.mubr.f32.mxu0 0.0
      %1708 = vmatmul.mubr.f32.gmra.mxu0 %v1266
      %v1709 = vpop.f32.mrf.mxu0
      %v1710 = vadd.f32 0.0, %v1709
      %v1711 = vpop.f32.mrf.mxu0
      %1712 = vmatprep.mubr.f32.mxu0 0.0
      %1713 = vmatmul.mubr.f32.gmra.mxu0 %v1268
      %v1714 = vpop.f32.mrf.mxu0
      %v1715 = vadd.f32 0.0, %v1714
      %v1716 = vpop.f32.mrf.mxu0
      %1717 = vmatprep.mubr.f32.mxu0 0.0
      %1718 = vmatmul.mubr.f32.gmra.mxu0 %v1270
      %v1719 = vpop.f32.mrf.mxu0
      %v1720 = vadd.f32 0.0, %v1719
      %v1721 = vpop.f32.mrf.mxu0
      %1722 = vmatprep.mubr.f32.mxu0 0.0
      %1723 = vmatmul.mubr.f32.gmra.mxu0 %v1272
      %v1724 = vpop.f32.mrf.mxu0
      %v1725 = vadd.f32 0.0, %v1724
      %v1726 = vpop.f32.mrf.mxu0
      %1727 = vmatprep.mubr.f32.mxu0 0.0
      %1728 = vmatmul.mubr.f32.gmra.mxu0 %v1274
      %v1729 = vpop.f32.mrf.mxu0
      %v1730 = vadd.f32 0.0, %v1729
      %v1731 = vpop.f32.mrf.mxu0
      %1732 = vmatprep.mubr.f32.mxu0 0.0
      %1733 = vmatmul.mubr.f32.gmra.mxu0 %v1276
      %v1734 = vpop.f32.mrf.mxu0
      %v1735 = vadd.f32 0.0, %v1734
      %v1736 = vpop.f32.mrf.mxu0
      %1737 = vmatprep.mubr.f32.mxu0 0.0
      %1738 = vmatmul.mubr.f32.gmra.mxu0 %v1278
      %v1739 = vpop.f32.mrf.mxu0
      %v1740 = vadd.f32 0.0, %v1739
      %v1741 = vpop.f32.mrf.mxu0
      %1742 = vmatprep.mubr.f32.mxu0 0.0
      %1743 = vmatmul.mubr.f32.gmra.mxu0 %v1280
      %v1744 = vpop.f32.mrf.mxu0
      %v1745 = vadd.f32 0.0, %v1744
      %v1746 = vpop.f32.mrf.mxu0
      %1747 = vmatprep.mubr.f32.mxu0 0.0
      %1748 = vmatmul.mubr.f32.gmra.mxu0 %v1282
      %v1749 = vpop.f32.mrf.mxu0
      %v1750 = vadd.f32 0.0, %v1749
      %v1751 = vpop.f32.mrf.mxu0
      %1752 = vmatprep.mubr.f32.mxu0 0.0
      %1753 = vmatmul.mubr.f32.gmra.mxu0 %v1284
      %v1754 = vpop.f32.mrf.mxu0
      %v1755 = vadd.f32 0.0, %v1754
      %v1756 = vpop.f32.mrf.mxu0
      %1757 = vmatprep.mubr.f32.mxu0 0.0
      %1758 = vmatmul.mubr.f32.gmra.mxu0 %v1286
      %v1759 = vpop.f32.mrf.mxu0
      %v1760 = vadd.f32 0.0, %v1759
      %v1761 = vpop.f32.mrf.mxu0
      %1762 = vmatprep.mubr.f32.mxu0 0.0
      %1763 = vmatmul.mubr.f32.gmra.mxu0 %v1288
      %v1764 = vpop.f32.mrf.mxu0
      %v1765 = vadd.f32 0.0, %v1764
      %v1766 = vpop.f32.mrf.mxu0
      %1767 = vmatprep.mubr.f32.mxu0 0.0
      %1768 = vmatmul.mubr.f32.gmra.mxu0 %v1290
      %v1769 = vpop.f32.mrf.mxu0
      %v1770 = vadd.f32 0.0, %v1769
      %v1771 = vpop.f32.mrf.mxu0
      %1772 = vmatprep.mubr.f32.mxu0 0.0
      %1773 = vmatmul.mubr.f32.gmra.mxu0 %v1292
      %v1774 = vpop.f32.mrf.mxu0
      %v1775 = vadd.f32 0.0, %v1774
      %v1776 = vpop.f32.mrf.mxu0
      %1777 = vmatprep.mubr.f32.mxu0 0.0
      %1778 = vmatmul.mubr.f32.gmra.mxu0 %v1556
      %v1779 = vpop.f32.mrf.mxu0
      %v1780 = vadd.f32 0.0, %v1779
      %v1781 = vpop.f32.mrf.mxu0
      %1782 = vmatprep.mubr.f32.mxu0 0.0
      %1783 = vmatmul.mubr.f32.gmra.mxu0 %v1558
      %v1784 = vpop.f32.mrf.mxu0
      %v1785 = vadd.f32 0.0, %v1784
      %v1786 = vpop.f32.mrf.mxu0
      %1787 = vdwg.mxu0
      %v1788 = vadd.f32 %v1522, %v1630
      %v1789 = vadd.f32 %v1523, %v1635
      %v1790 = vadd.f32 %v1524, %v1640
      %v1791 = vadd.f32 %v1525, %v1645
      %v1792 = vadd.f32 %v1526, %v1650
      %v1793 = vadd.f32 %v1527, %v1655
      %v1794 = vadd.f32 %v1528, %v1660
      %v1795 = vadd.f32 %v1529, %v1665
      %v1796 = vadd.f32 %v1530, %v1670
      %v1797 = vadd.f32 %v1531, %v1675
      %v1798 = vadd.f32 %v1532, %v1680
      %v1799 = vadd.f32 %v1533, %v1685
      %v1800 = vadd.f32 %v1534, %v1690
      %v1801 = vadd.f32 %v1535, %v1695
      %v1802 = vadd.f32 %v1536, %v1700
      %v1803 = vadd.f32 %v1537, %v1705
      %v1804 = vadd.f32 %v1538, %v1710
      %v1805 = vadd.f32 %v1539, %v1715
      %v1806 = vadd.f32 %v1540, %v1720
      %v1807 = vadd.f32 %v1541, %v1725
      %v1808 = vadd.f32 %v1542, %v1730
      %v1809 = vadd.f32 %v1543, %v1735
      %v1810 = vadd.f32 %v1544, %v1740
      %v1811 = vadd.f32 %v1545, %v1745
      %v1812 = vadd.f32 %v1546, %v1750
      %v1813 = vadd.f32 %v1547, %v1755
      %v1814 = vadd.f32 %v1548, %v1760
      %v1815 = vadd.f32 %v1549, %v1765
      %v1816 = vadd.f32 %v1550, %v1770
      %v1817 = vadd.f32 %v1551, %v1775
      %v1818 = vadd.f32 %v1552, %v1780
      %v1819 = vadd.f32 %v1553, %v1785
      %s1820 = scalar_lea.vmem %s1, 28
      %v1821 = vld [vmem:[%s1820] sm:$0xf]
      %v1823 = vsel %vm513, %v1821, 0
      %1825 = vmatprep.subr.mxu0 0.0
      %1826 = vmatpush1.msra.mxu0 0.0
      %1827 = vmatprep.subr.mxu0 0.0
      %1828 = vmatpush1.msra.mxu0 0.0
      %1829 = vmatprep.subr.mxu0 0.0
      %1830 = vmatpush1.msra.mxu0 0.0
      %1831 = vmatprep.subr.mxu0 0.0
      %1832 = vmatpush1.msra.mxu0 0.0
      %1833 = vmatprep.subr.mxu0 0.0
      %1834 = vmatpush1.msra.mxu0 0.0
      %1835 = vmatprep.subr.mxu0 0.0
      %1836 = vmatpush1.msra.mxu0 0.0
      %1837 = vmatprep.subr.mxu0 0.0
      %1838 = vmatpush1.msra.mxu0 0.0
      %1839 = vmatprep.subr.mxu0 0.0
      %1840 = vmatpush1.msra.mxu0 0.0
      %1841 = vmatprep.subr.mxu0 0.0
      %1842 = vmatpush1.msra.mxu0 0.0
      %1843 = vmatprep.subr.mxu0 0.0
      %1844 = vmatpush1.msra.mxu0 0.0
      %1845 = vmatprep.subr.mxu0 0.0
      %1846 = vmatpush1.msra.mxu0 0.0
      %1847 = vmatprep.subr.mxu0 0.0
      %1848 = vmatpush1.msra.mxu0 0.0
      %1849 = vmatprep.subr.mxu0 0.0
      %1850 = vmatpush1.msra.mxu0 0.0
      %1851 = vmatprep.subr.mxu0 0.0
      %1852 = vmatpush1.msra.mxu0 0.0
      %1853 = vmatprep.subr.mxu0 0.0
      %1854 = vmatpush1.msra.mxu0 0.0
      %1855 = vmatprep.subr.mxu0 0.0
      %1856 = vmatpush1.msra.mxu0 %v1823
      %1857 = vmatprep.subr.mxu0 0.0
      %1858 = vmatpush2.msra.mxu0 0.0
      %1859 = vmatprep.subr.mxu0 0.0
      %1860 = vmatpush2.msra.mxu0 0.0
      %1861 = vmatprep.subr.mxu0 0.0
      %1862 = vmatpush2.msra.mxu0 0.0
      %1863 = vmatprep.subr.mxu0 0.0
      %1864 = vmatpush2.msra.mxu0 0.0
      %1865 = vmatprep.subr.mxu0 0.0
      %1866 = vmatpush2.msra.mxu0 0.0
      %1867 = vmatprep.subr.mxu0 0.0
      %1868 = vmatpush2.msra.mxu0 0.0
      %1869 = vmatprep.subr.mxu0 0.0
      %1870 = vmatpush2.msra.mxu0 0.0
      %1871 = vmatprep.subr.mxu0 0.0
      %1872 = vmatpush2.msra.mxu0 0.0
      %1873 = vmatprep.subr.mxu0 0.0
      %1874 = vmatpush2.msra.mxu0 0.0
      %1875 = vmatprep.subr.mxu0 0.0
      %1876 = vmatpush2.msra.mxu0 0.0
      %1877 = vmatprep.subr.mxu0 0.0
      %1878 = vmatpush2.msra.mxu0 0.0
      %1879 = vmatprep.subr.mxu0 0.0
      %1880 = vmatpush2.msra.mxu0 0.0
      %1881 = vmatprep.subr.mxu0 0.0
      %1882 = vmatpush2.msra.mxu0 0.0
      %1883 = vmatprep.subr.mxu0 0.0
      %1884 = vmatpush2.msra.mxu0 0.0
      %1885 = vmatprep.subr.mxu0 0.0
      %1886 = vmatpush2.msra.mxu0 0.0
      %1887 = vmatprep.subr.mxu0 0.0
      %1888 = vmatpush2.msra.mxu0 0.0
      %1889 = vmatprep.mubr.f32.mxu0 0.0
      %1890 = vmatmul.mubr.f32.gmra.mxu0 %v1234
      %v1891 = vpop.f32.mrf.mxu0
      %v1892 = vadd.f32 0.0, %v1891
      %v1893 = vpop.f32.mrf.mxu0
      %1894 = vmatprep.mubr.f32.mxu0 0.0
      %1895 = vmatmul.mubr.f32.gmra.mxu0 %v1236
      %v1896 = vpop.f32.mrf.mxu0
      %v1897 = vadd.f32 0.0, %v1896
      %v1898 = vpop.f32.mrf.mxu0
      %1899 = vmatprep.mubr.f32.mxu0 0.0
      %1900 = vmatmul.mubr.f32.gmra.mxu0 %v1242
      %v1901 = vpop.f32.mrf.mxu0
      %v1902 = vadd.f32 0.0, %v1901
      %v1903 = vpop.f32.mrf.mxu0
      %1904 = vmatprep.mubr.f32.mxu0 0.0
      %1905 = vmatmul.mubr.f32.gmra.mxu0 %v1244
      %v1906 = vpop.f32.mrf.mxu0
      %v1907 = vadd.f32 0.0, %v1906
      %v1908 = vpop.f32.mrf.mxu0
      %1909 = vmatprep.mubr.f32.mxu0 0.0
      %1910 = vmatmul.mubr.f32.gmra.mxu0 %v1246
      %v1911 = vpop.f32.mrf.mxu0
      %v1912 = vadd.f32 0.0, %v1911
      %v1913 = vpop.f32.mrf.mxu0
      %1914 = vmatprep.mubr.f32.mxu0 0.0
      %1915 = vmatmul.mubr.f32.gmra.mxu0 %v1248
      %v1916 = vpop.f32.mrf.mxu0
      %v1917 = vadd.f32 0.0, %v1916
      %v1918 = vpop.f32.mrf.mxu0
      %1919 = vmatprep.mubr.f32.mxu0 0.0
      %1920 = vmatmul.mubr.f32.gmra.mxu0 %v1250
      %v1921 = vpop.f32.mrf.mxu0
      %v1922 = vadd.f32 0.0, %v1921
      %v1923 = vpop.f32.mrf.mxu0
      %1924 = vmatprep.mubr.f32.mxu0 0.0
      %1925 = vmatmul.mubr.f32.gmra.mxu0 %v1252
      %v1926 = vpop.f32.mrf.mxu0
      %v1927 = vadd.f32 0.0, %v1926
      %v1928 = vpop.f32.mrf.mxu0
      %1929 = vmatprep.mubr.f32.mxu0 0.0
      %1930 = vmatmul.mubr.f32.gmra.mxu0 %v1254
      %v1931 = vpop.f32.mrf.mxu0
      %v1932 = vadd.f32 0.0, %v1931
      %v1933 = vpop.f32.mrf.mxu0
      %1934 = vmatprep.mubr.f32.mxu0 0.0
      %1935 = vmatmul.mubr.f32.gmra.mxu0 %v1256
      %v1936 = vpop.f32.mrf.mxu0
      %v1937 = vadd.f32 0.0, %v1936
      %v1938 = vpop.f32.mrf.mxu0
      %1939 = vmatprep.mubr.f32.mxu0 0.0
      %1940 = vmatmul.mubr.f32.gmra.mxu0 %v1258
      %v1941 = vpop.f32.mrf.mxu0
      %v1942 = vadd.f32 0.0, %v1941
      %v1943 = vpop.f32.mrf.mxu0
      %1944 = vmatprep.mubr.f32.mxu0 0.0
      %1945 = vmatmul.mubr.f32.gmra.mxu0 %v1260
      %v1946 = vpop.f32.mrf.mxu0
      %v1947 = vadd.f32 0.0, %v1946
      %v1948 = vpop.f32.mrf.mxu0
      %1949 = vmatprep.mubr.f32.mxu0 0.0
      %1950 = vmatmul.mubr.f32.gmra.mxu0 %v1262
      %v1951 = vpop.f32.mrf.mxu0
      %v1952 = vadd.f32 0.0, %v1951
      %v1953 = vpop.f32.mrf.mxu0
      %1954 = vmatprep.mubr.f32.mxu0 0.0
      %1955 = vmatmul.mubr.f32.gmra.mxu0 %v1264
      %v1956 = vpop.f32.mrf.mxu0
      %v1957 = vadd.f32 0.0, %v1956
      %v1958 = vpop.f32.mrf.mxu0
      %1959 = vmatprep.mubr.f32.mxu0 0.0
      %1960 = vmatmul.mubr.f32.gmra.mxu0 %v1266
      %v1961 = vpop.f32.mrf.mxu0
      %v1962 = vadd.f32 0.0, %v1961
      %v1963 = vpop.f32.mrf.mxu0
      %1964 = vmatprep.mubr.f32.mxu0 0.0
      %1965 = vmatmul.mubr.f32.gmra.mxu0 %v1268
      %v1966 = vpop.f32.mrf.mxu0
      %v1967 = vadd.f32 0.0, %v1966
      %v1968 = vpop.f32.mrf.mxu0
      %1969 = vmatprep.mubr.f32.mxu0 0.0
      %1970 = vmatmul.mubr.f32.gmra.mxu0 %v1270
      %v1971 = vpop.f32.mrf.mxu0
      %v1972 = vadd.f32 0.0, %v1971
      %v1973 = vpop.f32.mrf.mxu0
      %1974 = vmatprep.mubr.f32.mxu0 0.0
      %1975 = vmatmul.mubr.f32.gmra.mxu0 %v1272
      %v1976 = vpop.f32.mrf.mxu0
      %v1977 = vadd.f32 0.0, %v1976
      %v1978 = vpop.f32.mrf.mxu0
      %1979 = vmatprep.mubr.f32.mxu0 0.0
      %1980 = vmatmul.mubr.f32.gmra.mxu0 %v1274
      %v1981 = vpop.f32.mrf.mxu0
      %v1982 = vadd.f32 0.0, %v1981
      %v1983 = vpop.f32.mrf.mxu0
      %1984 = vmatprep.mubr.f32.mxu0 0.0
      %1985 = vmatmul.mubr.f32.gmra.mxu0 %v1276
      %v1986 = vpop.f32.mrf.mxu0
      %v1987 = vadd.f32 0.0, %v1986
      %v1988 = vpop.f32.mrf.mxu0
      %1989 = vmatprep.mubr.f32.mxu0 0.0
      %1990 = vmatmul.mubr.f32.gmra.mxu0 %v1278
      %v1991 = vpop.f32.mrf.mxu0
      %v1992 = vadd.f32 0.0, %v1991
      %v1993 = vpop.f32.mrf.mxu0
      %1994 = vmatprep.mubr.f32.mxu0 0.0
      %1995 = vmatmul.mubr.f32.gmra.mxu0 %v1280
      %v1996 = vpop.f32.mrf.mxu0
      %v1997 = vadd.f32 0.0, %v1996
      %v1998 = vpop.f32.mrf.mxu0
      %1999 = vmatprep.mubr.f32.mxu0 0.0
      %2000 = vmatmul.mubr.f32.gmra.mxu0 %v1282
      %v2001 = vpop.f32.mrf.mxu0
      %v2002 = vadd.f32 0.0, %v2001
      %v2003 = vpop.f32.mrf.mxu0
      %2004 = vmatprep.mubr.f32.mxu0 0.0
      %2005 = vmatmul.mubr.f32.gmra.mxu0 %v1284
      %v2006 = vpop.f32.mrf.mxu0
      %v2007 = vadd.f32 0.0, %v2006
      %v2008 = vpop.f32.mrf.mxu0
      %2009 = vmatprep.mubr.f32.mxu0 0.0
      %2010 = vmatmul.mubr.f32.gmra.mxu0 %v1286
      %v2011 = vpop.f32.mrf.mxu0
      %v2012 = vadd.f32 0.0, %v2011
      %v2013 = vpop.f32.mrf.mxu0
      %2014 = vmatprep.mubr.f32.mxu0 0.0
      %2015 = vmatmul.mubr.f32.gmra.mxu0 %v1288
      %v2016 = vpop.f32.mrf.mxu0
      %v2017 = vadd.f32 0.0, %v2016
      %v2018 = vpop.f32.mrf.mxu0
      %2019 = vmatprep.mubr.f32.mxu0 0.0
      %2020 = vmatmul.mubr.f32.gmra.mxu0 %v1290
      %v2021 = vpop.f32.mrf.mxu0
      %v2022 = vadd.f32 0.0, %v2021
      %v2023 = vpop.f32.mrf.mxu0
      %2024 = vmatprep.mubr.f32.mxu0 0.0
      %2025 = vmatmul.mubr.f32.gmra.mxu0 %v1292
      %v2026 = vpop.f32.mrf.mxu0
      %v2027 = vadd.f32 0.0, %v2026
      %v2028 = vpop.f32.mrf.mxu0
      %2029 = vmatprep.mubr.f32.mxu0 0.0
      %2030 = vmatmul.mubr.f32.gmra.mxu0 %v1556
      %v2031 = vpop.f32.mrf.mxu0
      %v2032 = vadd.f32 0.0, %v2031
      %v2033 = vpop.f32.mrf.mxu0
      %2034 = vmatprep.mubr.f32.mxu0 0.0
      %2035 = vmatmul.mubr.f32.gmra.mxu0 %v1558
      %v2036 = vpop.f32.mrf.mxu0
      %v2037 = vadd.f32 0.0, %v2036
      %v2038 = vpop.f32.mrf.mxu0
      %2039 = vmatprep.mubr.f32.mxu0 0.0
      %2040 = vmatmul.mubr.f32.gmra.mxu0 %v1290
      %v2041 = vpop.f32.mrf.mxu0
      %v2042 = vadd.f32 0.0, %v2041
      %v2043 = vpop.f32.mrf.mxu0
      %2044 = vmatprep.mubr.f32.mxu0 0.0
      %2045 = vmatmul.mubr.f32.gmra.mxu0 %v1292
      %v2046 = vpop.f32.mrf.mxu0
      %v2047 = vadd.f32 0.0, %v2046
      %v2048 = vpop.f32.mrf.mxu0
      %2049 = vdwg.mxu0
      %v2050 = vadd.f32 %v1788, %v1892
      %v2051 = vadd.f32 %v1789, %v1897
      %v2052 = vadd.f32 %v1790, %v1902
      %v2053 = vadd.f32 %v1791, %v1907
      %v2054 = vadd.f32 %v1792, %v1912
      %v2055 = vadd.f32 %v1793, %v1917
      %v2056 = vadd.f32 %v1794, %v1922
      %v2057 = vadd.f32 %v1795, %v1927
      %v2058 = vadd.f32 %v1796, %v1932
      %v2059 = vadd.f32 %v1797, %v1937
      %v2060 = vadd.f32 %v1798, %v1942
      %v2061 = vadd.f32 %v1799, %v1947
      %v2062 = vadd.f32 %v1800, %v1952
      %v2063 = vadd.f32 %v1801, %v1957
      %v2064 = vadd.f32 %v1802, %v1962
      %v2065 = vadd.f32 %v1803, %v1967
      %v2066 = vadd.f32 %v1804, %v1972
      %v2067 = vadd.f32 %v1805, %v1977
      %v2068 = vadd.f32 %v1806, %v1982
      %v2069 = vadd.f32 %v1807, %v1987
      %v2070 = vadd.f32 %v1808, %v1992
      %v2071 = vadd.f32 %v1809, %v1997
      %v2072 = vadd.f32 %v1810, %v2002
      %v2073 = vadd.f32 %v1811, %v2007
      %v2074 = vadd.f32 %v1812, %v2012
      %v2075 = vadd.f32 %v1813, %v2017
      %v2076 = vadd.f32 %v1814, %v2022
      %v2077 = vadd.f32 %v1815, %v2027
      %v2078 = vadd.f32 %v1816, %v2032
      %v2079 = vadd.f32 %v1817, %v2037
      %v2080 = vadd.f32 %v1818, %v2042
      %v2081 = vadd.f32 %v1819, %v2047
      %s2082 = scalar_lea.vmem %s1, 8
      %v2083 = vld [vmem:[%s2082] sm:$0xf]
      %v2084 = vsel %vm432, %v352, 0
      %v2087 = vsel %vm432, %v414, 0
      %v2089 = vsel %vm432, %v350, 0
      %v2092 = vsel %vm432, %v413, 0
      %v2094 = vsel %vm432, %v354, 0
      %v2097 = vsel %vm432, %v415, 0
      %v2099 = vsel %vm432, %v356, 0
      %v2102 = vsel %vm432, %v416, 0
      %v2104 = vsel %vm432, %v358, 0
      %v2107 = vsel %vm432, %v417, 0
      %v2109 = vsel %vm432, %v360, 0
      %v2112 = vsel %vm432, %v418, 0
      %v2114 = vsel %vm432, %v362, 0
      %v2117 = vsel %vm432, %v419, 0
      %v2119 = vsel %vm432, %v364, 0
      %v2122 = vsel %vm432, %v420, 0
      %v2124 = vsel %vm432, %v366, 0
      %v2127 = vsel %vm432, %v421, 0
      %v2129 = vsel %vm432, %v368, 0
      %v2132 = vsel %vm432, %v422, 0
      %v2134 = vsel %vm432, %v370, 0
      %v2137 = vsel %vm432, %v423, 0
      %v2139 = vsel %vm432, %v372, 0
      %v2142 = vsel %vm432, %v424, 0
      %v2144 = vsel %vm432, %v374, 0
      %v2147 = vsel %vm432, %v425, 0
      %v2149 = vsel %vm432, %v376, 0
      %v2152 = vsel %vm432, %v426, 0
      %v2154 = vsel %vm432, %v378, 0
      %v2157 = vsel %vm432, %v427, 0
      %v2160 = vsel %vm513, %v2083, 0
      %2162 = vmatprep.subr.mxu0 0.0
      %2163 = vmatpush1.msra.mxu0 0.0
      %2164 = vmatprep.subr.mxu0 0.0
      %2165 = vmatpush1.msra.mxu0 0.0
      %2166 = vmatprep.subr.mxu0 0.0
      %2167 = vmatpush1.msra.mxu0 0.0
      %2168 = vmatprep.subr.mxu0 0.0
      %2169 = vmatpush1.msra.mxu0 0.0
      %2170 = vmatprep.subr.mxu0 0.0
      %2171 = vmatpush1.msra.mxu0 0.0
      %2172 = vmatprep.subr.mxu0 0.0
      %2173 = vmatpush1.msra.mxu0 0.0
      %2174 = vmatprep.subr.mxu0 0.0
      %2175 = vmatpush1.msra.mxu0 0.0
      %2176 = vmatprep.subr.mxu0 0.0
      %2177 = vmatpush1.msra.mxu0 0.0
      %2178 = vmatprep.subr.mxu0 0.0
      %2179 = vmatpush1.msra.mxu0 0.0
      %2180 = vmatprep.subr.mxu0 0.0
      %2181 = vmatpush1.msra.mxu0 0.0
      %2182 = vmatprep.subr.mxu0 0.0
      %2183 = vmatpush1.msra.mxu0 0.0
      %2184 = vmatprep.subr.mxu0 0.0
      %2185 = vmatpush1.msra.mxu0 0.0
      %2186 = vmatprep.subr.mxu0 0.0
      %2187 = vmatpush1.msra.mxu0 0.0
      %2188 = vmatprep.subr.mxu0 0.0
      %2189 = vmatpush1.msra.mxu0 0.0
      %2190 = vmatprep.subr.mxu0 0.0
      %2191 = vmatpush1.msra.mxu0 0.0
      %2192 = vmatprep.subr.mxu0 0.0
      %2193 = vmatpush1.msra.mxu0 %v2160
      %2194 = vmatprep.subr.mxu0 0.0
      %2195 = vmatpush2.msra.mxu0 0.0
      %2196 = vmatprep.subr.mxu0 0.0
      %2197 = vmatpush2.msra.mxu0 0.0
      %2198 = vmatprep.subr.mxu0 0.0
      %2199 = vmatpush2.msra.mxu0 0.0
      %2200 = vmatprep.subr.mxu0 0.0
      %2201 = vmatpush2.msra.mxu0 0.0
      %2202 = vmatprep.subr.mxu0 0.0
      %2203 = vmatpush2.msra.mxu0 0.0
      %2204 = vmatprep.subr.mxu0 0.0
      %2205 = vmatpush2.msra.mxu0 0.0
      %2206 = vmatprep.subr.mxu0 0.0
      %2207 = vmatpush2.msra.mxu0 0.0
      %2208 = vmatprep.subr.mxu0 0.0
      %2209 = vmatpush2.msra.mxu0 0.0
      %2210 = vmatprep.subr.mxu0 0.0
      %2211 = vmatpush2.msra.mxu0 0.0
      %2212 = vmatprep.subr.mxu0 0.0
      %2213 = vmatpush2.msra.mxu0 0.0
      %2214 = vmatprep.subr.mxu0 0.0
      %2215 = vmatpush2.msra.mxu0 0.0
      %2216 = vmatprep.subr.mxu0 0.0
      %2217 = vmatpush2.msra.mxu0 0.0
      %2218 = vmatprep.subr.mxu0 0.0
      %2219 = vmatpush2.msra.mxu0 0.0
      %2220 = vmatprep.subr.mxu0 0.0
      %2221 = vmatpush2.msra.mxu0 0.0
      %2222 = vmatprep.subr.mxu0 0.0
      %2223 = vmatpush2.msra.mxu0 0.0
      %2224 = vmatprep.subr.mxu0 0.0
      %2225 = vmatpush2.msra.mxu0 0.0
      %2226 = vmatprep.mubr.f32.mxu0 0.0
      %2227 = vmatmul.mubr.f32.gmra.mxu0 %v2084
      %v2228 = vpop.f32.mrf.mxu0
      %v2229 = vadd.f32 0.0, %v2228
      %v2230 = vpop.f32.mrf.mxu0
      %2231 = vmatprep.mubr.f32.mxu0 0.0
      %2232 = vmatmul.mubr.f32.gmra.mxu0 %v2087
      %v2233 = vpop.f32.mrf.mxu0
      %v2234 = vadd.f32 0.0, %v2233
      %v2235 = vpop.f32.mrf.mxu0
      %2236 = vmatprep.mubr.f32.mxu0 0.0
      %2237 = vmatmul.mubr.f32.gmra.mxu0 %v2089
      %v2238 = vpop.f32.mrf.mxu0
      %v2239 = vadd.f32 0.0, %v2238
      %v2240 = vpop.f32.mrf.mxu0
      %2241 = vmatprep.mubr.f32.mxu0 0.0
      %2242 = vmatmul.mubr.f32.gmra.mxu0 %v2092
      %v2243 = vpop.f32.mrf.mxu0
      %v2244 = vadd.f32 0.0, %v2243
      %v2245 = vpop.f32.mrf.mxu0
      %2246 = vmatprep.mubr.f32.mxu0 0.0
      %2247 = vmatmul.mubr.f32.gmra.mxu0 %v2084
      %v2248 = vpop.f32.mrf.mxu0
      %v2249 = vadd.f32 0.0, %v2248
      %v2250 = vpop.f32.mrf.mxu0
      %2251 = vmatprep.mubr.f32.mxu0 0.0
      %2252 = vmatmul.mubr.f32.gmra.mxu0 %v2087
      %v2253 = vpop.f32.mrf.mxu0
      %v2254 = vadd.f32 0.0, %v2253
      %v2255 = vpop.f32.mrf.mxu0
      %2256 = vmatprep.mubr.f32.mxu0 0.0
      %2257 = vmatmul.mubr.f32.gmra.mxu0 %v2094
      %v2258 = vpop.f32.mrf.mxu0
      %v2259 = vadd.f32 0.0, %v2258
      %v2260 = vpop.f32.mrf.mxu0
      %2261 = vmatprep.mubr.f32.mxu0 0.0
      %2262 = vmatmul.mubr.f32.gmra.mxu0 %v2097
      %v2263 = vpop.f32.mrf.mxu0
      %v2264 = vadd.f32 0.0, %v2263
      %v2265 = vpop.f32.mrf.mxu0
      %2266 = vmatprep.mubr.f32.mxu0 0.0
      %2267 = vmatmul.mubr.f32.gmra.mxu0 %v2099
      %v2268 = vpop.f32.mrf.mxu0
      %v2269 = vadd.f32 0.0, %v2268
      %v2270 = vpop.f32.mrf.mxu0
      %2271 = vmatprep.mubr.f32.mxu0 0.0
      %2272 = vmatmul.mubr.f32.gmra.mxu0 %v2102
      %v2273 = vpop.f32.mrf.mxu0
      %v2274 = vadd.f32 0.0, %v2273
      %v2275 = vpop.f32.mrf.mxu0
      %2276 = vmatprep.mubr.f32.mxu0 0.0
      %2277 = vmatmul.mubr.f32.gmra.mxu0 %v2104
      %v2278 = vpop.f32.mrf.mxu0
      %v2279 = vadd.f32 0.0, %v2278
      %v2280 = vpop.f32.mrf.mxu0
      %2281 = vmatprep.mubr.f32.mxu0 0.0
      %2282 = vmatmul.mubr.f32.gmra.mxu0 %v2107
      %v2283 = vpop.f32.mrf.mxu0
      %v2284 = vadd.f32 0.0, %v2283
      %v2285 = vpop.f32.mrf.mxu0
      %2286 = vmatprep.mubr.f32.mxu0 0.0
      %2287 = vmatmul.mubr.f32.gmra.mxu0 %v2109
      %v2288 = vpop.f32.mrf.mxu0
      %v2289 = vadd.f32 0.0, %v2288
      %v2290 = vpop.f32.mrf.mxu0
      %2291 = vmatprep.mubr.f32.mxu0 0.0
      %2292 = vmatmul.mubr.f32.gmra.mxu0 %v2112
      %v2293 = vpop.f32.mrf.mxu0
      %v2294 = vadd.f32 0.0, %v2293
      %v2295 = vpop.f32.mrf.mxu0
      %2296 = vmatprep.mubr.f32.mxu0 0.0
      %2297 = vmatmul.mubr.f32.gmra.mxu0 %v2114
      %v2298 = vpop.f32.mrf.mxu0
      %v2299 = vadd.f32 0.0, %v2298
      %v2300 = vpop.f32.mrf.mxu0
      %2301 = vmatprep.mubr.f32.mxu0 0.0
      %2302 = vmatmul.mubr.f32.gmra.mxu0 %v2117
      %v2303 = vpop.f32.mrf.mxu0
      %v2304 = vadd.f32 0.0, %v2303
      %v2305 = vpop.f32.mrf.mxu0
      %2306 = vmatprep.mubr.f32.mxu0 0.0
      %2307 = vmatmul.mubr.f32.gmra.mxu0 %v2119
      %v2308 = vpop.f32.mrf.mxu0
      %v2309 = vadd.f32 0.0, %v2308
      %v2310 = vpop.f32.mrf.mxu0
      %2311 = vmatprep.mubr.f32.mxu0 0.0
      %2312 = vmatmul.mubr.f32.gmra.mxu0 %v2122
      %v2313 = vpop.f32.mrf.mxu0
      %v2314 = vadd.f32 0.0, %v2313
      %v2315 = vpop.f32.mrf.mxu0
      %2316 = vmatprep.mubr.f32.mxu0 0.0
      %2317 = vmatmul.mubr.f32.gmra.mxu0 %v2124
      %v2318 = vpop.f32.mrf.mxu0
      %v2319 = vadd.f32 0.0, %v2318
      %v2320 = vpop.f32.mrf.mxu0
      %2321 = vmatprep.mubr.f32.mxu0 0.0
      %2322 = vmatmul.mubr.f32.gmra.mxu0 %v2127
      %v2323 = vpop.f32.mrf.mxu0
      %v2324 = vadd.f32 0.0, %v2323
      %v2325 = vpop.f32.mrf.mxu0
      %2326 = vmatprep.mubr.f32.mxu0 0.0
      %2327 = vmatmul.mubr.f32.gmra.mxu0 %v2129
      %v2328 = vpop.f32.mrf.mxu0
      %v2329 = vadd.f32 0.0, %v2328
      %v2330 = vpop.f32.mrf.mxu0
      %2331 = vmatprep.mubr.f32.mxu0 0.0
      %2332 = vmatmul.mubr.f32.gmra.mxu0 %v2132
      %v2333 = vpop.f32.mrf.mxu0
      %v2334 = vadd.f32 0.0, %v2333
      %v2335 = vpop.f32.mrf.mxu0
      %2336 = vmatprep.mubr.f32.mxu0 0.0
      %2337 = vmatmul.mubr.f32.gmra.mxu0 %v2134
      %v2338 = vpop.f32.mrf.mxu0
      %v2339 = vadd.f32 0.0, %v2338
      %v2340 = vpop.f32.mrf.mxu0
      %2341 = vmatprep.mubr.f32.mxu0 0.0
      %2342 = vmatmul.mubr.f32.gmra.mxu0 %v2137
      %v2343 = vpop.f32.mrf.mxu0
      %v2344 = vadd.f32 0.0, %v2343
      %v2345 = vpop.f32.mrf.mxu0
      %2346 = vmatprep.mubr.f32.mxu0 0.0
      %2347 = vmatmul.mubr.f32.gmra.mxu0 %v2139
      %v2348 = vpop.f32.mrf.mxu0
      %v2349 = vadd.f32 0.0, %v2348
      %v2350 = vpop.f32.mrf.mxu0
      %2351 = vmatprep.mubr.f32.mxu0 0.0
      %2352 = vmatmul.mubr.f32.gmra.mxu0 %v2142
      %v2353 = vpop.f32.mrf.mxu0
      %v2354 = vadd.f32 0.0, %v2353
      %v2355 = vpop.f32.mrf.mxu0
      %2356 = vmatprep.mubr.f32.mxu0 0.0
      %2357 = vmatmul.mubr.f32.gmra.mxu0 %v2144
      %v2358 = vpop.f32.mrf.mxu0
      %v2359 = vadd.f32 0.0, %v2358
      %v2360 = vpop.f32.mrf.mxu0
      %2361 = vmatprep.mubr.f32.mxu0 0.0
      %2362 = vmatmul.mubr.f32.gmra.mxu0 %v2147
      %v2363 = vpop.f32.mrf.mxu0
      %v2364 = vadd.f32 0.0, %v2363
      %v2365 = vpop.f32.mrf.mxu0
      %2366 = vmatprep.mubr.f32.mxu0 0.0
      %2367 = vmatmul.mubr.f32.gmra.mxu0 %v2149
      %v2368 = vpop.f32.mrf.mxu0
      %v2369 = vadd.f32 0.0, %v2368
      %v2370 = vpop.f32.mrf.mxu0
      %2371 = vmatprep.mubr.f32.mxu0 0.0
      %2372 = vmatmul.mubr.f32.gmra.mxu0 %v2152
      %v2373 = vpop.f32.mrf.mxu0
      %v2374 = vadd.f32 0.0, %v2373
      %v2375 = vpop.f32.mrf.mxu0
      %2376 = vmatprep.mubr.f32.mxu0 0.0
      %2377 = vmatmul.mubr.f32.gmra.mxu0 %v2154
      %v2378 = vpop.f32.mrf.mxu0
      %v2379 = vadd.f32 0.0, %v2378
      %v2380 = vpop.f32.mrf.mxu0
      %2381 = vmatprep.mubr.f32.mxu0 0.0
      %2382 = vmatmul.mubr.f32.gmra.mxu0 %v2157
      %v2383 = vpop.f32.mrf.mxu0
      %v2384 = vadd.f32 0.0, %v2383
      %v2385 = vpop.f32.mrf.mxu0
      %2386 = vdwg.mxu0
      %v2387 = vadd.f32 %v2050, %v2229
      %v2388 = vadd.f32 %v2051, %v2234
      %v2389 = vadd.f32 %v2052, %v2239
      %v2390 = vadd.f32 %v2053, %v2244
      %v2391 = vadd.f32 %v2054, %v2249
      %v2392 = vadd.f32 %v2055, %v2254
      %v2393 = vadd.f32 %v2056, %v2259
      %v2394 = vadd.f32 %v2057, %v2264
      %v2395 = vadd.f32 %v2058, %v2269
      %v2396 = vadd.f32 %v2059, %v2274
      %v2397 = vadd.f32 %v2060, %v2279
      %v2398 = vadd.f32 %v2061, %v2284
      %v2399 = vadd.f32 %v2062, %v2289
      %v2400 = vadd.f32 %v2063, %v2294
      %v2401 = vadd.f32 %v2064, %v2299
      %v2402 = vadd.f32 %v2065, %v2304
      %v2403 = vadd.f32 %v2066, %v2309
      %v2404 = vadd.f32 %v2067, %v2314
      %v2405 = vadd.f32 %v2068, %v2319
      %v2406 = vadd.f32 %v2069, %v2324
      %v2407 = vadd.f32 %v2070, %v2329
      %v2408 = vadd.f32 %v2071, %v2334
      %v2409 = vadd.f32 %v2072, %v2339
      %v2410 = vadd.f32 %v2073, %v2344
      %v2411 = vadd.f32 %v2074, %v2349
      %v2412 = vadd.f32 %v2075, %v2354
      %v2413 = vadd.f32 %v2076, %v2359
      %v2414 = vadd.f32 %v2077, %v2364
      %v2415 = vadd.f32 %v2078, %v2369
      %v2416 = vadd.f32 %v2079, %v2374
      %v2417 = vadd.f32 %v2080, %v2379
      %v2418 = vadd.f32 %v2081, %v2384
      %s2419 = scalar_lea.vmem %s1, 20
      %v2420 = vld [vmem:[%s2419] sm:$0xf]
      %v2421 = vsel %vm432, %v380, 0
      %v2424 = vsel %vm432, %v428, 0
      %v2427 = vsel %vm513, %v2420, 0
      %2429 = vmatprep.subr.mxu0 0.0
      %2430 = vmatpush1.msra.mxu0 0.0
      %2431 = vmatprep.subr.mxu0 0.0
      %2432 = vmatpush1.msra.mxu0 0.0
      %2433 = vmatprep.subr.mxu0 0.0
      %2434 = vmatpush1.msra.mxu0 0.0
      %2435 = vmatprep.subr.mxu0 0.0
      %2436 = vmatpush1.msra.mxu0 0.0
      %2437 = vmatprep.subr.mxu0 0.0
      %2438 = vmatpush1.msra.mxu0 0.0
      %2439 = vmatprep.subr.mxu0 0.0
      %2440 = vmatpush1.msra.mxu0 0.0
      %2441 = vmatprep.subr.mxu0 0.0
      %2442 = vmatpush1.msra.mxu0 0.0
      %2443 = vmatprep.subr.mxu0 0.0
      %2444 = vmatpush1.msra.mxu0 0.0
      %2445 = vmatprep.subr.mxu0 0.0
      %2446 = vmatpush1.msra.mxu0 0.0
      %2447 = vmatprep.subr.mxu0 0.0
      %2448 = vmatpush1.msra.mxu0 0.0
      %2449 = vmatprep.subr.mxu0 0.0
      %2450 = vmatpush1.msra.mxu0 0.0
      %2451 = vmatprep.subr.mxu0 0.0
      %2452 = vmatpush1.msra.mxu0 0.0
      %2453 = vmatprep.subr.mxu0 0.0
      %2454 = vmatpush1.msra.mxu0 0.0
      %2455 = vmatprep.subr.mxu0 0.0
      %2456 = vmatpush1.msra.mxu0 0.0
      %2457 = vmatprep.subr.mxu0 0.0
      %2458 = vmatpush1.msra.mxu0 0.0
      %2459 = vmatprep.subr.mxu0 0.0
      %2460 = vmatpush1.msra.mxu0 %v2427
      %2461 = vmatprep.subr.mxu0 0.0
      %2462 = vmatpush2.msra.mxu0 0.0
      %2463 = vmatprep.subr.mxu0 0.0
      %2464 = vmatpush2.msra.mxu0 0.0
      %2465 = vmatprep.subr.mxu0 0.0
      %2466 = vmatpush2.msra.mxu0 0.0
      %2467 = vmatprep.subr.mxu0 0.0
      %2468 = vmatpush2.msra.mxu0 0.0
      %2469 = vmatprep.subr.mxu0 0.0
      %2470 = vmatpush2.msra.mxu0 0.0
      %2471 = vmatprep.subr.mxu0 0.0
      %2472 = vmatpush2.msra.mxu0 0.0
      %2473 = vmatprep.subr.mxu0 0.0
      %2474 = vmatpush2.msra.mxu0 0.0
      %2475 = vmatprep.subr.mxu0 0.0
      %2476 = vmatpush2.msra.mxu0 0.0
      %2477 = vmatprep.subr.mxu0 0.0
      %2478 = vmatpush2.msra.mxu0 0.0
      %2479 = vmatprep.subr.mxu0 0.0
      %2480 = vmatpush2.msra.mxu0 0.0
      %2481 = vmatprep.subr.mxu0 0.0
      %2482 = vmatpush2.msra.mxu0 0.0
      %2483 = vmatprep.subr.mxu0 0.0
      %2484 = vmatpush2.msra.mxu0 0.0
      %2485 = vmatprep.subr.mxu0 0.0
      %2486 = vmatpush2.msra.mxu0 0.0
      %2487 = vmatprep.subr.mxu0 0.0
      %2488 = vmatpush2.msra.mxu0 0.0
      %2489 = vmatprep.subr.mxu0 0.0
      %2490 = vmatpush2.msra.mxu0 0.0
      %2491 = vmatprep.subr.mxu0 0.0
      %2492 = vmatpush2.msra.mxu0 0.0
      %2493 = vmatprep.mubr.f32.mxu0 0.0
      %2494 = vmatmul.mubr.f32.gmra.mxu0 %v2089
      %v2495 = vpop.f32.mrf.mxu0
      %v2496 = vadd.f32 0.0, %v2495
      %v2497 = vpop.f32.mrf.mxu0
      %2498 = vmatprep.mubr.f32.mxu0 0.0
      %2499 = vmatmul.mubr.f32.gmra.mxu0 %v2092
      %v2500 = vpop.f32.mrf.mxu0
      %v2501 = vadd.f32 0.0, %v2500
      %v2502 = vpop.f32.mrf.mxu0
      %2503 = vmatprep.mubr.f32.mxu0 0.0
      %2504 = vmatmul.mubr.f32.gmra.mxu0 %v2084
      %v2505 = vpop.f32.mrf.mxu0
      %v2506 = vadd.f32 0.0, %v2505
      %v2507 = vpop.f32.mrf.mxu0
      %2508 = vmatprep.mubr.f32.mxu0 0.0
      %2509 = vmatmul.mubr.f32.gmra.mxu0 %v2087
      %v2510 = vpop.f32.mrf.mxu0
      %v2511 = vadd.f32 0.0, %v2510
      %v2512 = vpop.f32.mrf.mxu0
      %2513 = vmatprep.mubr.f32.mxu0 0.0
      %2514 = vmatmul.mubr.f32.gmra.mxu0 %v2094
      %v2515 = vpop.f32.mrf.mxu0
      %v2516 = vadd.f32 0.0, %v2515
      %v2517 = vpop.f32.mrf.mxu0
      %2518 = vmatprep.mubr.f32.mxu0 0.0
      %2519 = vmatmul.mubr.f32.gmra.mxu0 %v2097
      %v2520 = vpop.f32.mrf.mxu0
      %v2521 = vadd.f32 0.0, %v2520
      %v2522 = vpop.f32.mrf.mxu0
      %2523 = vmatprep.mubr.f32.mxu0 0.0
      %2524 = vmatmul.mubr.f32.gmra.mxu0 %v2099
      %v2525 = vpop.f32.mrf.mxu0
      %v2526 = vadd.f32 0.0, %v2525
      %v2527 = vpop.f32.mrf.mxu0
      %2528 = vmatprep.mubr.f32.mxu0 0.0
      %2529 = vmatmul.mubr.f32.gmra.mxu0 %v2102
      %v2530 = vpop.f32.mrf.mxu0
      %v2531 = vadd.f32 0.0, %v2530
      %v2532 = vpop.f32.mrf.mxu0
      %2533 = vmatprep.mubr.f32.mxu0 0.0
      %2534 = vmatmul.mubr.f32.gmra.mxu0 %v2104
      %v2535 = vpop.f32.mrf.mxu0
      %v2536 = vadd.f32 0.0, %v2535
      %v2537 = vpop.f32.mrf.mxu0
      %2538 = vmatprep.mubr.f32.mxu0 0.0
      %2539 = vmatmul.mubr.f32.gmra.mxu0 %v2107
      %v2540 = vpop.f32.mrf.mxu0
      %v2541 = vadd.f32 0.0, %v2540
      %v2542 = vpop.f32.mrf.mxu0
      %2543 = vmatprep.mubr.f32.mxu0 0.0
      %2544 = vmatmul.mubr.f32.gmra.mxu0 %v2109
      %v2545 = vpop.f32.mrf.mxu0
      %v2546 = vadd.f32 0.0, %v2545
      %v2547 = vpop.f32.mrf.mxu0
      %2548 = vmatprep.mubr.f32.mxu0 0.0
      %2549 = vmatmul.mubr.f32.gmra.mxu0 %v2112
      %v2550 = vpop.f32.mrf.mxu0
      %v2551 = vadd.f32 0.0, %v2550
      %v2552 = vpop.f32.mrf.mxu0
      %2553 = vmatprep.mubr.f32.mxu0 0.0
      %2554 = vmatmul.mubr.f32.gmra.mxu0 %v2114
      %v2555 = vpop.f32.mrf.mxu0
      %v2556 = vadd.f32 0.0, %v2555
      %v2557 = vpop.f32.mrf.mxu0
      %2558 = vmatprep.mubr.f32.mxu0 0.0
      %2559 = vmatmul.mubr.f32.gmra.mxu0 %v2117
      %v2560 = vpop.f32.mrf.mxu0
      %v2561 = vadd.f32 0.0, %v2560
      %v2562 = vpop.f32.mrf.mxu0
      %2563 = vmatprep.mubr.f32.mxu0 0.0
      %2564 = vmatmul.mubr.f32.gmra.mxu0 %v2119
      %v2565 = vpop.f32.mrf.mxu0
      %v2566 = vadd.f32 0.0, %v2565
      %v2567 = vpop.f32.mrf.mxu0
      %2568 = vmatprep.mubr.f32.mxu0 0.0
      %2569 = vmatmul.mubr.f32.gmra.mxu0 %v2122
      %v2570 = vpop.f32.mrf.mxu0
      %v2571 = vadd.f32 0.0, %v2570
      %v2572 = vpop.f32.mrf.mxu0
      %2573 = vmatprep.mubr.f32.mxu0 0.0
      %2574 = vmatmul.mubr.f32.gmra.mxu0 %v2124
      %v2575 = vpop.f32.mrf.mxu0
      %v2576 = vadd.f32 0.0, %v2575
      %v2577 = vpop.f32.mrf.mxu0
      %2578 = vmatprep.mubr.f32.mxu0 0.0
      %2579 = vmatmul.mubr.f32.gmra.mxu0 %v2127
      %v2580 = vpop.f32.mrf.mxu0
      %v2581 = vadd.f32 0.0, %v2580
      %v2582 = vpop.f32.mrf.mxu0
      %2583 = vmatprep.mubr.f32.mxu0 0.0
      %2584 = vmatmul.mubr.f32.gmra.mxu0 %v2129
      %v2585 = vpop.f32.mrf.mxu0
      %v2586 = vadd.f32 0.0, %v2585
      %v2587 = vpop.f32.mrf.mxu0
      %2588 = vmatprep.mubr.f32.mxu0 0.0
      %2589 = vmatmul.mubr.f32.gmra.mxu0 %v2132
      %v2590 = vpop.f32.mrf.mxu0
      %v2591 = vadd.f32 0.0, %v2590
      %v2592 = vpop.f32.mrf.mxu0
      %2593 = vmatprep.mubr.f32.mxu0 0.0
      %2594 = vmatmul.mubr.f32.gmra.mxu0 %v2134
      %v2595 = vpop.f32.mrf.mxu0
      %v2596 = vadd.f32 0.0, %v2595
      %v2597 = vpop.f32.mrf.mxu0
      %2598 = vmatprep.mubr.f32.mxu0 0.0
      %2599 = vmatmul.mubr.f32.gmra.mxu0 %v2137
      %v2600 = vpop.f32.mrf.mxu0
      %v2601 = vadd.f32 0.0, %v2600
      %v2602 = vpop.f32.mrf.mxu0
      %2603 = vmatprep.mubr.f32.mxu0 0.0
      %2604 = vmatmul.mubr.f32.gmra.mxu0 %v2139
      %v2605 = vpop.f32.mrf.mxu0
      %v2606 = vadd.f32 0.0, %v2605
      %v2607 = vpop.f32.mrf.mxu0
      %2608 = vmatprep.mubr.f32.mxu0 0.0
      %2609 = vmatmul.mubr.f32.gmra.mxu0 %v2142
      %v2610 = vpop.f32.mrf.mxu0
      %v2611 = vadd.f32 0.0, %v2610
      %v2612 = vpop.f32.mrf.mxu0
      %2613 = vmatprep.mubr.f32.mxu0 0.0
      %2614 = vmatmul.mubr.f32.gmra.mxu0 %v2144
      %v2615 = vpop.f32.mrf.mxu0
      %v2616 = vadd.f32 0.0, %v2615
      %v2617 = vpop.f32.mrf.mxu0
      %2618 = vmatprep.mubr.f32.mxu0 0.0
      %2619 = vmatmul.mubr.f32.gmra.mxu0 %v2147
      %v2620 = vpop.f32.mrf.mxu0
      %v2621 = vadd.f32 0.0, %v2620
      %v2622 = vpop.f32.mrf.mxu0
      %2623 = vmatprep.mubr.f32.mxu0 0.0
      %2624 = vmatmul.mubr.f32.gmra.mxu0 %v2149
      %v2625 = vpop.f32.mrf.mxu0
      %v2626 = vadd.f32 0.0, %v2625
      %v2627 = vpop.f32.mrf.mxu0
      %2628 = vmatprep.mubr.f32.mxu0 0.0
      %2629 = vmatmul.mubr.f32.gmra.mxu0 %v2152
      %v2630 = vpop.f32.mrf.mxu0
      %v2631 = vadd.f32 0.0, %v2630
      %v2632 = vpop.f32.mrf.mxu0
      %2633 = vmatprep.mubr.f32.mxu0 0.0
      %2634 = vmatmul.mubr.f32.gmra.mxu0 %v2154
      %v2635 = vpop.f32.mrf.mxu0
      %v2636 = vadd.f32 0.0, %v2635
      %v2637 = vpop.f32.mrf.mxu0
      %2638 = vmatprep.mubr.f32.mxu0 0.0
      %2639 = vmatmul.mubr.f32.gmra.mxu0 %v2157
      %v2640 = vpop.f32.mrf.mxu0
      %v2641 = vadd.f32 0.0, %v2640
      %v2642 = vpop.f32.mrf.mxu0
      %2643 = vmatprep.mubr.f32.mxu0 0.0
      %2644 = vmatmul.mubr.f32.gmra.mxu0 %v2421
      %v2645 = vpop.f32.mrf.mxu0
      %v2646 = vadd.f32 0.0, %v2645
      %v2647 = vpop.f32.mrf.mxu0
      %2648 = vmatprep.mubr.f32.mxu0 0.0
      %2649 = vmatmul.mubr.f32.gmra.mxu0 %v2424
      %v2650 = vpop.f32.mrf.mxu0
      %v2651 = vadd.f32 0.0, %v2650
      %v2652 = vpop.f32.mrf.mxu0
      %2653 = vdwg.mxu0
      %v2654 = vadd.f32 %v2387, %v2496
      %v2655 = vadd.f32 %v2388, %v2501
      %v2656 = vadd.f32 %v2389, %v2506
      %v2657 = vadd.f32 %v2390, %v2511
      %v2658 = vadd.f32 %v2391, %v2516
      %v2659 = vadd.f32 %v2392, %v2521
      %v2660 = vadd.f32 %v2393, %v2526
      %v2661 = vadd.f32 %v2394, %v2531
      %v2662 = vadd.f32 %v2395, %v2536
      %v2663 = vadd.f32 %v2396, %v2541
      %v2664 = vadd.f32 %v2397, %v2546
      %v2665 = vadd.f32 %v2398, %v2551
      %v2666 = vadd.f32 %v2399, %v2556
      %v2667 = vadd.f32 %v2400, %v2561
      %v2668 = vadd.f32 %v2401, %v2566
      %v2669 = vadd.f32 %v2402, %v2571
      %v2670 = vadd.f32 %v2403, %v2576
      %v2671 = vadd.f32 %v2404, %v2581
      %v2672 = vadd.f32 %v2405, %v2586
      %v2673 = vadd.f32 %v2406, %v2591
      %v2674 = vadd.f32 %v2407, %v2596
      %v2675 = vadd.f32 %v2408, %v2601
      %v2676 = vadd.f32 %v2409, %v2606
      %v2677 = vadd.f32 %v2410, %v2611
      %v2678 = vadd.f32 %v2411, %v2616
      %v2679 = vadd.f32 %v2412, %v2621
      %v2680 = vadd.f32 %v2413, %v2626
      %v2681 = vadd.f32 %v2414, %v2631
      %v2682 = vadd.f32 %v2415, %v2636
      %v2683 = vadd.f32 %v2416, %v2641
      %v2684 = vadd.f32 %v2417, %v2646
      %v2685 = vadd.f32 %v2418, %v2651
      %s2686 = scalar_lea.vmem %s1, 32
      %v2687 = vld [vmem:[%s2686] sm:$0xf]
      %v2689 = vsel %vm513, %v2687, 0
      %2691 = vmatprep.subr.mxu0 0.0
      %2692 = vmatpush1.msra.mxu0 0.0
      %2693 = vmatprep.subr.mxu0 0.0
      %2694 = vmatpush1.msra.mxu0 0.0
      %2695 = vmatprep.subr.mxu0 0.0
      %2696 = vmatpush1.msra.mxu0 0.0
      %2697 = vmatprep.subr.mxu0 0.0
      %2698 = vmatpush1.msra.mxu0 0.0
      %2699 = vmatprep.subr.mxu0 0.0
      %2700 = vmatpush1.msra.mxu0 0.0
      %2701 = vmatprep.subr.mxu0 0.0
      %2702 = vmatpush1.msra.mxu0 0.0
      %2703 = vmatprep.subr.mxu0 0.0
      %2704 = vmatpush1.msra.mxu0 0.0
      %2705 = vmatprep.subr.mxu0 0.0
      %2706 = vmatpush1.msra.mxu0 0.0
      %2707 = vmatprep.subr.mxu0 0.0
      %2708 = vmatpush1.msra.mxu0 0.0
      %2709 = vmatprep.subr.mxu0 0.0
      %2710 = vmatpush1.msra.mxu0 0.0
      %2711 = vmatprep.subr.mxu0 0.0
      %2712 = vmatpush1.msra.mxu0 0.0
      %2713 = vmatprep.subr.mxu0 0.0
      %2714 = vmatpush1.msra.mxu0 0.0
      %2715 = vmatprep.subr.mxu0 0.0
      %2716 = vmatpush1.msra.mxu0 0.0
      %2717 = vmatprep.subr.mxu0 0.0
      %2718 = vmatpush1.msra.mxu0 0.0
      %2719 = vmatprep.subr.mxu0 0.0
      %2720 = vmatpush1.msra.mxu0 0.0
      %2721 = vmatprep.subr.mxu0 0.0
      %2722 = vmatpush1.msra.mxu0 %v2689
      %2723 = vmatprep.subr.mxu0 0.0
      %2724 = vmatpush2.msra.mxu0 0.0
      %2725 = vmatprep.subr.mxu0 0.0
      %2726 = vmatpush2.msra.mxu0 0.0
      %2727 = vmatprep.subr.mxu0 0.0
      %2728 = vmatpush2.msra.mxu0 0.0
      %2729 = vmatprep.subr.mxu0 0.0
      %2730 = vmatpush2.msra.mxu0 0.0
      %2731 = vmatprep.subr.mxu0 0.0
      %2732 = vmatpush2.msra.mxu0 0.0
      %2733 = vmatprep.subr.mxu0 0.0
      %2734 = vmatpush2.msra.mxu0 0.0
      %2735 = vmatprep.subr.mxu0 0.0
      %2736 = vmatpush2.msra.mxu0 0.0
      %2737 = vmatprep.subr.mxu0 0.0
      %2738 = vmatpush2.msra.mxu0 0.0
      %2739 = vmatprep.subr.mxu0 0.0
      %2740 = vmatpush2.msra.mxu0 0.0
      %2741 = vmatprep.subr.mxu0 0.0
      %2742 = vmatpush2.msra.mxu0 0.0
      %2743 = vmatprep.subr.mxu0 0.0
      %2744 = vmatpush2.msra.mxu0 0.0
      %2745 = vmatprep.subr.mxu0 0.0
      %2746 = vmatpush2.msra.mxu0 0.0
      %2747 = vmatprep.subr.mxu0 0.0
      %2748 = vmatpush2.msra.mxu0 0.0
      %2749 = vmatprep.subr.mxu0 0.0
      %2750 = vmatpush2.msra.mxu0 0.0
      %2751 = vmatprep.subr.mxu0 0.0
      %2752 = vmatpush2.msra.mxu0 0.0
      %2753 = vmatprep.subr.mxu0 0.0
      %2754 = vmatpush2.msra.mxu0 0.0
      %2755 = vmatprep.mubr.f32.mxu0 0.0
      %2756 = vmatmul.mubr.f32.gmra.mxu0 %v2084
      %v2757 = vpop.f32.mrf.mxu0
      %v2758 = vadd.f32 0.0, %v2757
      %v2759 = vpop.f32.mrf.mxu0
      %2760 = vmatprep.mubr.f32.mxu0 0.0
      %2761 = vmatmul.mubr.f32.gmra.mxu0 %v2087
      %v2762 = vpop.f32.mrf.mxu0
      %v2763 = vadd.f32 0.0, %v2762
      %v2764 = vpop.f32.mrf.mxu0
      %2765 = vmatprep.mubr.f32.mxu0 0.0
      %2766 = vmatmul.mubr.f32.gmra.mxu0 %v2094
      %v2767 = vpop.f32.mrf.mxu0
      %v2768 = vadd.f32 0.0, %v2767
      %v2769 = vpop.f32.mrf.mxu0
      %2770 = vmatprep.mubr.f32.mxu0 0.0
      %2771 = vmatmul.mubr.f32.gmra.mxu0 %v2097
      %v2772 = vpop.f32.mrf.mxu0
      %v2773 = vadd.f32 0.0, %v2772
      %v2774 = vpop.f32.mrf.mxu0
      %2775 = vmatprep.mubr.f32.mxu0 0.0
      %2776 = vmatmul.mubr.f32.gmra.mxu0 %v2099
      %v2777 = vpop.f32.mrf.mxu0
      %v2778 = vadd.f32 0.0, %v2777
      %v2779 = vpop.f32.mrf.mxu0
      %2780 = vmatprep.mubr.f32.mxu0 0.0
      %2781 = vmatmul.mubr.f32.gmra.mxu0 %v2102
      %v2782 = vpop.f32.mrf.mxu0
      %v2783 = vadd.f32 0.0, %v2782
      %v2784 = vpop.f32.mrf.mxu0
      %2785 = vmatprep.mubr.f32.mxu0 0.0
      %2786 = vmatmul.mubr.f32.gmra.mxu0 %v2104
      %v2787 = vpop.f32.mrf.mxu0
      %v2788 = vadd.f32 0.0, %v2787
      %v2789 = vpop.f32.mrf.mxu0
      %2790 = vmatprep.mubr.f32.mxu0 0.0
      %2791 = vmatmul.mubr.f32.gmra.mxu0 %v2107
      %v2792 = vpop.f32.mrf.mxu0
      %v2793 = vadd.f32 0.0, %v2792
      %v2794 = vpop.f32.mrf.mxu0
      %2795 = vmatprep.mubr.f32.mxu0 0.0
      %2796 = vmatmul.mubr.f32.gmra.mxu0 %v2109
      %v2797 = vpop.f32.mrf.mxu0
      %v2798 = vadd.f32 0.0, %v2797
      %v2799 = vpop.f32.mrf.mxu0
      %2800 = vmatprep.mubr.f32.mxu0 0.0
      %2801 = vmatmul.mubr.f32.gmra.mxu0 %v2112
      %v2802 = vpop.f32.mrf.mxu0
      %v2803 = vadd.f32 0.0, %v2802
      %v2804 = vpop.f32.mrf.mxu0
      %2805 = vmatprep.mubr.f32.mxu0 0.0
      %2806 = vmatmul.mubr.f32.gmra.mxu0 %v2114
      %v2807 = vpop.f32.mrf.mxu0
      %v2808 = vadd.f32 0.0, %v2807
      %v2809 = vpop.f32.mrf.mxu0
      %2810 = vmatprep.mubr.f32.mxu0 0.0
      %2811 = vmatmul.mubr.f32.gmra.mxu0 %v2117
      %v2812 = vpop.f32.mrf.mxu0
      %v2813 = vadd.f32 0.0, %v2812
      %v2814 = vpop.f32.mrf.mxu0
      %2815 = vmatprep.mubr.f32.mxu0 0.0
      %2816 = vmatmul.mubr.f32.gmra.mxu0 %v2119
      %v2817 = vpop.f32.mrf.mxu0
      %v2818 = vadd.f32 0.0, %v2817
      %v2819 = vpop.f32.mrf.mxu0
      %2820 = vmatprep.mubr.f32.mxu0 0.0
      %2821 = vmatmul.mubr.f32.gmra.mxu0 %v2122
      %v2822 = vpop.f32.mrf.mxu0
      %v2823 = vadd.f32 0.0, %v2822
      %v2824 = vpop.f32.mrf.mxu0
      %2825 = vmatprep.mubr.f32.mxu0 0.0
      %2826 = vmatmul.mubr.f32.gmra.mxu0 %v2124
      %v2827 = vpop.f32.mrf.mxu0
      %v2828 = vadd.f32 0.0, %v2827
      %v2829 = vpop.f32.mrf.mxu0
      %2830 = vmatprep.mubr.f32.mxu0 0.0
      %2831 = vmatmul.mubr.f32.gmra.mxu0 %v2127
      %v2832 = vpop.f32.mrf.mxu0
      %v2833 = vadd.f32 0.0, %v2832
      %v2834 = vpop.f32.mrf.mxu0
      %2835 = vmatprep.mubr.f32.mxu0 0.0
      %2836 = vmatmul.mubr.f32.gmra.mxu0 %v2129
      %v2837 = vpop.f32.mrf.mxu0
      %v2838 = vadd.f32 0.0, %v2837
      %v2839 = vpop.f32.mrf.mxu0
      %2840 = vmatprep.mubr.f32.mxu0 0.0
      %2841 = vmatmul.mubr.f32.gmra.mxu0 %v2132
      %v2842 = vpop.f32.mrf.mxu0
      %v2843 = vadd.f32 0.0, %v2842
      %v2844 = vpop.f32.mrf.mxu0
      %2845 = vmatprep.mubr.f32.mxu0 0.0
      %2846 = vmatmul.mubr.f32.gmra.mxu0 %v2134
      %v2847 = vpop.f32.mrf.mxu0
      %v2848 = vadd.f32 0.0, %v2847
      %v2849 = vpop.f32.mrf.mxu0
      %2850 = vmatprep.mubr.f32.mxu0 0.0
      %2851 = vmatmul.mubr.f32.gmra.mxu0 %v2137
      %v2852 = vpop.f32.mrf.mxu0
      %v2853 = vadd.f32 0.0, %v2852
      %v2854 = vpop.f32.mrf.mxu0
      %2855 = vmatprep.mubr.f32.mxu0 0.0
      %2856 = vmatmul.mubr.f32.gmra.mxu0 %v2139
      %v2857 = vpop.f32.mrf.mxu0
      %v2858 = vadd.f32 0.0, %v2857
      %v2859 = vpop.f32.mrf.mxu0
      %2860 = vmatprep.mubr.f32.mxu0 0.0
      %2861 = vmatmul.mubr.f32.gmra.mxu0 %v2142
      %v2862 = vpop.f32.mrf.mxu0
      %v2863 = vadd.f32 0.0, %v2862
      %v2864 = vpop.f32.mrf.mxu0
      %2865 = vmatprep.mubr.f32.mxu0 0.0
      %2866 = vmatmul.mubr.f32.gmra.mxu0 %v2144
      %v2867 = vpop.f32.mrf.mxu0
      %v2868 = vadd.f32 0.0, %v2867
      %v2869 = vpop.f32.mrf.mxu0
      %2870 = vmatprep.mubr.f32.mxu0 0.0
      %2871 = vmatmul.mubr.f32.gmra.mxu0 %v2147
      %v2872 = vpop.f32.mrf.mxu0
      %v2873 = vadd.f32 0.0, %v2872
      %v2874 = vpop.f32.mrf.mxu0
      %2875 = vmatprep.mubr.f32.mxu0 0.0
      %2876 = vmatmul.mubr.f32.gmra.mxu0 %v2149
      %v2877 = vpop.f32.mrf.mxu0
      %v2878 = vadd.f32 0.0, %v2877
      %v2879 = vpop.f32.mrf.mxu0
      %2880 = vmatprep.mubr.f32.mxu0 0.0
      %2881 = vmatmul.mubr.f32.gmra.mxu0 %v2152
      %v2882 = vpop.f32.mrf.mxu0
      %v2883 = vadd.f32 0.0, %v2882
      %v2884 = vpop.f32.mrf.mxu0
      %2885 = vmatprep.mubr.f32.mxu0 0.0
      %2886 = vmatmul.mubr.f32.gmra.mxu0 %v2154
      %v2887 = vpop.f32.mrf.mxu0
      %v2888 = vadd.f32 0.0, %v2887
      %v2889 = vpop.f32.mrf.mxu0
      %2890 = vmatprep.mubr.f32.mxu0 0.0
      %2891 = vmatmul.mubr.f32.gmra.mxu0 %v2157
      %v2892 = vpop.f32.mrf.mxu0
      %v2893 = vadd.f32 0.0, %v2892
      %v2894 = vpop.f32.mrf.mxu0
      %2895 = vmatprep.mubr.f32.mxu0 0.0
      %2896 = vmatmul.mubr.f32.gmra.mxu0 %v2421
      %v2897 = vpop.f32.mrf.mxu0
      %v2898 = vadd.f32 0.0, %v2897
      %v2899 = vpop.f32.mrf.mxu0
      %2900 = vmatprep.mubr.f32.mxu0 0.0
      %2901 = vmatmul.mubr.f32.gmra.mxu0 %v2424
      %v2902 = vpop.f32.mrf.mxu0
      %v2903 = vadd.f32 0.0, %v2902
      %v2904 = vpop.f32.mrf.mxu0
      %2905 = vmatprep.mubr.f32.mxu0 0.0
      %2906 = vmatmul.mubr.f32.gmra.mxu0 %v2154
      %v2907 = vpop.f32.mrf.mxu0
      %v2908 = vadd.f32 0.0, %v2907
      %v2909 = vpop.f32.mrf.mxu0
      %2910 = vmatprep.mubr.f32.mxu0 0.0
      %2911 = vmatmul.mubr.f32.gmra.mxu0 %v2157
      %v2912 = vpop.f32.mrf.mxu0
      %v2913 = vadd.f32 0.0, %v2912
      %v2914 = vpop.f32.mrf.mxu0
      %2915 = vdwg.mxu0
      %v2916 = vadd.f32 %v2654, %v2758
      %v2917 = vadd.f32 %v2655, %v2763
      %v2918 = vadd.f32 %v2656, %v2768
      %v2919 = vadd.f32 %v2657, %v2773
      %v2920 = vadd.f32 %v2658, %v2778
      %v2921 = vadd.f32 %v2659, %v2783
      %v2922 = vadd.f32 %v2660, %v2788
      %v2923 = vadd.f32 %v2661, %v2793
      %v2924 = vadd.f32 %v2662, %v2798
      %v2925 = vadd.f32 %v2663, %v2803
      %v2926 = vadd.f32 %v2664, %v2808
      %v2927 = vadd.f32 %v2665, %v2813
      %v2928 = vadd.f32 %v2666, %v2818
      %v2929 = vadd.f32 %v2667, %v2823
      %v2930 = vadd.f32 %v2668, %v2828
      %v2931 = vadd.f32 %v2669, %v2833
      %v2932 = vadd.f32 %v2670, %v2838
      %v2933 = vadd.f32 %v2671, %v2843
      %v2934 = vadd.f32 %v2672, %v2848
      %v2935 = vadd.f32 %v2673, %v2853
      %v2936 = vadd.f32 %v2674, %v2858
      %v2937 = vadd.f32 %v2675, %v2863
      %v2938 = vadd.f32 %v2676, %v2868
      %v2939 = vadd.f32 %v2677, %v2873
      %v2940 = vadd.f32 %v2678, %v2878
      %v2941 = vadd.f32 %v2679, %v2883
      %v2942 = vadd.f32 %v2680, %v2888
      %v2943 = vadd.f32 %v2681, %v2893
      %v2944 = vadd.f32 %v2682, %v2898
      %v2945 = vadd.f32 %v2683, %v2903
      %v2946 = vadd.f32 %v2684, %v2908
      %v2947 = vadd.f32 %v2685, %v2913
      %v2948 = vsel %vm432, %v2916, 0.0
      %v2949 = vsel %vm432, %v2917, 0.0
      %v2950 = vadd.f32 %v2948, %v2949
      %v2951 = vsel %vm432, %v2918, 0.0
      %v2952 = vadd.f32 %v2950, %v2951
      %v2953 = vsel %vm432, %v2919, 0.0
      %v2954 = vadd.f32 %v2952, %v2953
      %v2955 = vsel %vm432, %v2920, 0.0
      %v2956 = vadd.f32 %v2954, %v2955
      %v2957 = vsel %vm432, %v2921, 0.0
      %v2958 = vadd.f32 %v2956, %v2957
      %v2959 = vsel %vm432, %v2922, 0.0
      %v2960 = vadd.f32 %v2958, %v2959
      %v2961 = vsel %vm432, %v2923, 0.0
      %v2962 = vadd.f32 %v2960, %v2961
      %v2963 = vsel %vm432, %v2924, 0.0
      %v2964 = vadd.f32 %v2962, %v2963
      %v2965 = vsel %vm432, %v2925, 0.0
      %v2966 = vadd.f32 %v2964, %v2965
      %v2967 = vsel %vm432, %v2926, 0.0
      %v2968 = vadd.f32 %v2966, %v2967
      %v2969 = vsel %vm432, %v2927, 0.0
      %v2970 = vadd.f32 %v2968, %v2969
      %v2971 = vsel %vm432, %v2928, 0.0
      %v2972 = vadd.f32 %v2970, %v2971
      %v2973 = vsel %vm432, %v2929, 0.0
      %v2974 = vadd.f32 %v2972, %v2973
      %v2975 = vsel %vm432, %v2930, 0.0
      %v2976 = vadd.f32 %v2974, %v2975
      %v2977 = vsel %vm432, %v2931, 0.0
      %v2978 = vadd.f32 %v2976, %v2977
      %v2979 = vsel %vm432, %v2932, 0.0
      %v2980 = vadd.f32 %v2978, %v2979
      %v2981 = vsel %vm432, %v2933, 0.0
      %v2982 = vadd.f32 %v2980, %v2981
      %v2983 = vsel %vm432, %v2934, 0.0
      %v2984 = vadd.f32 %v2982, %v2983
      %v2985 = vsel %vm432, %v2935, 0.0
      %v2986 = vadd.f32 %v2984, %v2985
      %v2987 = vsel %vm432, %v2936, 0.0
      %v2988 = vadd.f32 %v2986, %v2987
      %v2989 = vsel %vm432, %v2937, 0.0
      %v2990 = vadd.f32 %v2988, %v2989
      %v2991 = vsel %vm432, %v2938, 0.0
      %v2992 = vadd.f32 %v2990, %v2991
      %v2993 = vsel %vm432, %v2939, 0.0
      %v2994 = vadd.f32 %v2992, %v2993
      %v2995 = vsel %vm432, %v2940, 0.0
      %v2996 = vadd.f32 %v2994, %v2995
      %v2997 = vsel %vm432, %v2941, 0.0
      %v2998 = vadd.f32 %v2996, %v2997
      %v2999 = vsel %vm432, %v2942, 0.0
      %v3000 = vadd.f32 %v2998, %v2999
      %v3001 = vsel %vm432, %v2943, 0.0
      %v3002 = vadd.f32 %v3000, %v3001
      %v3003 = vsel %vm432, %v2944, 0.0
      %v3004 = vadd.f32 %v3002, %v3003
      %v3005 = vsel %vm432, %v2945, 0.0
      %v3006 = vadd.f32 %v3004, %v3005
      %v3007 = vsel %vm432, %v2946, 0.0
      %v3008 = vadd.f32 %v3006, %v3007
      %v3009 = vsel %vm432, %v2947, 0.0
      %v3010 = vadd.f32 %v3008, %v3009
      %v3011 = vrot.slane %v3010, 4
      %v3012 = vadd.f32 %v3010, %v3011
      %v3013 = vrot.slane %v3012, 2
      %v3014 = vadd.f32 %v3012, %v3013
      %v3015 = vrot.slane %v3014, 1
      %v3016 = vadd.f32 %v3014, %v3015
      %v3017 = vmul.f32 %v3016, 0.00390625
      %v3018 = vsub.f32 %v2916, %v3017
      %v3019 = vsub.f32 %v2917, %v3017
      %v3020 = vsub.f32 %v2918, %v3017
      %v3021 = vsub.f32 %v2919, %v3017
      %v3022 = vsub.f32 %v2920, %v3017
      %v3023 = vsub.f32 %v2921, %v3017
      %v3024 = vsub.f32 %v2922, %v3017
      %v3025 = vsub.f32 %v2923, %v3017
      %v3026 = vsub.f32 %v2924, %v3017
      %v3027 = vsub.f32 %v2925, %v3017
      %v3028 = vsub.f32 %v2926, %v3017
      %v3029 = vsub.f32 %v2927, %v3017
      %v3030 = vsub.f32 %v2928, %v3017
      %v3031 = vsub.f32 %v2929, %v3017
      %v3032 = vsub.f32 %v2930, %v3017
      %v3033 = vsub.f32 %v2931, %v3017
      %v3034 = vsub.f32 %v2932, %v3017
      %v3035 = vsub.f32 %v2933, %v3017
      %v3036 = vsub.f32 %v2934, %v3017
      %v3037 = vsub.f32 %v2935, %v3017
      %v3038 = vsub.f32 %v2936, %v3017
      %v3039 = vsub.f32 %v2937, %v3017
      %v3040 = vsub.f32 %v2938, %v3017
      %v3041 = vsub.f32 %v2939, %v3017
      %v3042 = vsub.f32 %v2940, %v3017
      %v3043 = vsub.f32 %v2941, %v3017
      %v3044 = vsub.f32 %v2942, %v3017
      %v3045 = vsub.f32 %v2943, %v3017
      %v3046 = vsub.f32 %v2944, %v3017
      %v3047 = vsub.f32 %v2945, %v3017
      %v3048 = vsub.f32 %v2946, %v3017
      %v3049 = vsub.f32 %v2947, %v3017
      %v3050 = vmul.f32 %v3018, %v3018
      %v3051 = vmul.f32 %v3019, %v3019
      %v3052 = vmul.f32 %v3020, %v3020
      %v3053 = vmul.f32 %v3021, %v3021
      %v3054 = vmul.f32 %v3022, %v3022
      %v3055 = vmul.f32 %v3023, %v3023
      %v3056 = vmul.f32 %v3024, %v3024
      %v3057 = vmul.f32 %v3025, %v3025
      %v3058 = vmul.f32 %v3026, %v3026
      %v3059 = vmul.f32 %v3027, %v3027
      %v3060 = vmul.f32 %v3028, %v3028
      %v3061 = vmul.f32 %v3029, %v3029
      %v3062 = vmul.f32 %v3030, %v3030
      %v3063 = vmul.f32 %v3031, %v3031
      %v3064 = vmul.f32 %v3032, %v3032
      %v3065 = vmul.f32 %v3033, %v3033
      %v3066 = vmul.f32 %v3034, %v3034
      %v3067 = vmul.f32 %v3035, %v3035
      %v3068 = vmul.f32 %v3036, %v3036
      %v3069 = vmul.f32 %v3037, %v3037
      %v3070 = vmul.f32 %v3038, %v3038
      %v3071 = vmul.f32 %v3039, %v3039
      %v3072 = vmul.f32 %v3040, %v3040
      %v3073 = vmul.f32 %v3041, %v3041
      %v3074 = vmul.f32 %v3042, %v3042
      %v3075 = vmul.f32 %v3043, %v3043
      %v3076 = vmul.f32 %v3044, %v3044
      %v3077 = vmul.f32 %v3045, %v3045
      %v3078 = vmul.f32 %v3046, %v3046
      %v3079 = vmul.f32 %v3047, %v3047
      %v3080 = vmul.f32 %v3048, %v3048
      %v3081 = vmul.f32 %v3049, %v3049
      %v3082 = vsel %vm432, %v3050, 0.0
      %v3083 = vsel %vm432, %v3051, 0.0
      %v3084 = vadd.f32 %v3082, %v3083
      %v3085 = vsel %vm432, %v3052, 0.0
      %v3086 = vadd.f32 %v3084, %v3085
      %v3087 = vsel %vm432, %v3053, 0.0
      %v3088 = vadd.f32 %v3086, %v3087
      %v3089 = vsel %vm432, %v3054, 0.0
      %v3090 = vadd.f32 %v3088, %v3089
      %v3091 = vsel %vm432, %v3055, 0.0
      %v3092 = vadd.f32 %v3090, %v3091
      %v3093 = vsel %vm432, %v3056, 0.0
      %v3094 = vadd.f32 %v3092, %v3093
      %v3095 = vsel %vm432, %v3057, 0.0
      %v3096 = vadd.f32 %v3094, %v3095
      %v3097 = vsel %vm432, %v3058, 0.0
      %v3098 = vadd.f32 %v3096, %v3097
      %v3099 = vsel %vm432, %v3059, 0.0
      %v3100 = vadd.f32 %v3098, %v3099
      %v3101 = vsel %vm432, %v3060, 0.0
      %v3102 = vadd.f32 %v3100, %v3101
      %v3103 = vsel %vm432, %v3061, 0.0
      %v3104 = vadd.f32 %v3102, %v3103
      %v3105 = vsel %vm432, %v3062, 0.0
      %v3106 = vadd.f32 %v3104, %v3105
      %v3107 = vsel %vm432, %v3063, 0.0
      %v3108 = vadd.f32 %v3106, %v3107
      %v3109 = vsel %vm432, %v3064, 0.0
      %v3110 = vadd.f32 %v3108, %v3109
      %v3111 = vsel %vm432, %v3065, 0.0
      %v3112 = vadd.f32 %v3110, %v3111
      %v3113 = vsel %vm432, %v3066, 0.0
      %v3114 = vadd.f32 %v3112, %v3113
      %v3115 = vsel %vm432, %v3067, 0.0
      %v3116 = vadd.f32 %v3114, %v3115
      %v3117 = vsel %vm432, %v3068, 0.0
      %v3118 = vadd.f32 %v3116, %v3117
      %v3119 = vsel %vm432, %v3069, 0.0
      %v3120 = vadd.f32 %v3118, %v3119
      %v3121 = vsel %vm432, %v3070, 0.0
      %v3122 = vadd.f32 %v3120, %v3121
      %v3123 = vsel %vm432, %v3071, 0.0
      %v3124 = vadd.f32 %v3122, %v3123
      %v3125 = vsel %vm432, %v3072, 0.0
      %v3126 = vadd.f32 %v3124, %v3125
      %v3127 = vsel %vm432, %v3073, 0.0
      %v3128 = vadd.f32 %v3126, %v3127
      %v3129 = vsel %vm432, %v3074, 0.0
      %v3130 = vadd.f32 %v3128, %v3129
      %v3131 = vsel %vm432, %v3075, 0.0
      %v3132 = vadd.f32 %v3130, %v3131
      %v3133 = vsel %vm432, %v3076, 0.0
      %v3134 = vadd.f32 %v3132, %v3133
      %v3135 = vsel %vm432, %v3077, 0.0
      %v3136 = vadd.f32 %v3134, %v3135
      %v3137 = vsel %vm432, %v3078, 0.0
      %v3138 = vadd.f32 %v3136, %v3137
      %v3139 = vsel %vm432, %v3079, 0.0
      %v3140 = vadd.f32 %v3138, %v3139
      %v3141 = vsel %vm432, %v3080, 0.0
      %v3142 = vadd.f32 %v3140, %v3141
      %v3143 = vsel %vm432, %v3081, 0.0
      %v3144 = vadd.f32 %v3142, %v3143
      %v3145 = vrot.slane %v3144, 4
      %v3146 = vadd.f32 %v3144, %v3145
      %v3147 = vrot.slane %v3146, 2
      %v3148 = vadd.f32 %v3146, %v3147
      %v3149 = vrot.slane %v3148, 1
      %v3150 = vadd.f32 %v3148, %v3149
      %v3151 = vmul.f32 %v3150, 0.00390625
      %v3152 = vadd.f32 %v3151, 1e-05
      %v3153 = vrsqrt.pop %v3152
      %v3154 = vmul.f32 %v3018, %v3153
      %v3155 = vmul.f32 %v3019, %v3153
      %v3156 = vmul.f32 %v3020, %v3153
      %v3157 = vmul.f32 %v3021, %v3153
      %v3158 = vmul.f32 %v3022, %v3153
      %v3159 = vmul.f32 %v3023, %v3153
      %v3160 = vmul.f32 %v3024, %v3153
      %v3161 = vmul.f32 %v3025, %v3153
      %v3162 = vmul.f32 %v3026, %v3153
      %v3163 = vmul.f32 %v3027, %v3153
      %v3164 = vmul.f32 %v3028, %v3153
      %v3165 = vmul.f32 %v3029, %v3153
      %v3166 = vmul.f32 %v3030, %v3153
      %v3167 = vmul.f32 %v3031, %v3153
      %v3168 = vmul.f32 %v3032, %v3153
      %v3169 = vmul.f32 %v3033, %v3153
      %v3170 = vmul.f32 %v3034, %v3153
      %v3171 = vmul.f32 %v3035, %v3153
      %v3172 = vmul.f32 %v3036, %v3153
      %v3173 = vmul.f32 %v3037, %v3153
      %v3174 = vmul.f32 %v3038, %v3153
      %v3175 = vmul.f32 %v3039, %v3153
      %v3176 = vmul.f32 %v3040, %v3153
      %v3177 = vmul.f32 %v3041, %v3153
      %v3178 = vmul.f32 %v3042, %v3153
      %v3179 = vmul.f32 %v3043, %v3153
      %v3180 = vmul.f32 %v3044, %v3153
      %v3181 = vmul.f32 %v3045, %v3153
      %v3182 = vmul.f32 %v3046, %v3153
      %v3183 = vmul.f32 %v3047, %v3153
      %v3184 = vmul.f32 %v3048, %v3153
      %v3185 = vmul.f32 %v3049, %v3153
      %v3186 = vmax.f32 %v3154, 0.0
      %v3187 = vmax.f32 %v3155, 0.0
      %v3188 = vmax.f32 %v3156, 0.0
      %v3189 = vmax.f32 %v3157, 0.0
      %v3190 = vmax.f32 %v3158, 0.0
      %v3191 = vmax.f32 %v3159, 0.0
      %v3192 = vmax.f32 %v3160, 0.0
      %v3193 = vmax.f32 %v3161, 0.0
      %v3194 = vmax.f32 %v3162, 0.0
      %v3195 = vmax.f32 %v3163, 0.0
      %v3196 = vmax.f32 %v3164, 0.0
      %v3197 = vmax.f32 %v3165, 0.0
      %v3198 = vmax.f32 %v3166, 0.0
      %v3199 = vmax.f32 %v3167, 0.0
      %v3200 = vmax.f32 %v3168, 0.0
      %v3201 = vmax.f32 %v3169, 0.0
      %v3202 = vmax.f32 %v3170, 0.0
      %v3203 = vmax.f32 %v3171, 0.0
      %v3204 = vmax.f32 %v3172, 0.0
      %v3205 = vmax.f32 %v3173, 0.0
      %v3206 = vmax.f32 %v3174, 0.0
      %v3207 = vmax.f32 %v3175, 0.0
      %v3208 = vmax.f32 %v3176, 0.0
      %v3209 = vmax.f32 %v3177, 0.0
      %v3210 = vmax.f32 %v3178, 0.0
      %v3211 = vmax.f32 %v3179, 0.0
      %v3212 = vmax.f32 %v3180, 0.0
      %v3213 = vmax.f32 %v3181, 0.0
      %v3214 = vmax.f32 %v3182, 0.0
      %v3215 = vmax.f32 %v3183, 0.0
      %v3216 = vmax.f32 %v3184, 0.0
      %v3217 = vmax.f32 %v3185, 0.0
      %v3234 = vrot.slane %v3186, 1
      %v3235 = vrot.slane %v3188, 1
      %v3236 = vrot.slane %v3190, 1
      %v3237 = vrot.slane %v3192, 1
      %v3238 = vrot.slane %v3194, 1
      %v3239 = vrot.slane %v3196, 1
      %v3240 = vrot.slane %v3198, 1
      %v3241 = vrot.slane %v3200, 1
      %v3242 = vrot.slane %v3202, 1
      %v3243 = vrot.slane %v3204, 1
      %v3244 = vrot.slane %v3206, 1
      %v3245 = vrot.slane %v3208, 1
      %v3246 = vrot.slane %v3210, 1
      %v3247 = vrot.slane %v3212, 1
      %v3248 = vrot.slane %v3214, 1
      %v3249 = vrot.slane %v3216, 1
      %v3282 = vrot.slane %v3186, 7
      %v3283 = vrot.slane %v3187, 7
      %v3284 = vsel %vm267, %v3282, %v3283
      %v3285 = vrot.slane %v3188, 7
      %v3286 = vrot.slane %v3189, 7
      %v3287 = vsel %vm267, %v3285, %v3286
      %v3288 = vrot.slane %v3190, 7
      %v3289 = vrot.slane %v3191, 7
      %v3290 = vsel %vm267, %v3288, %v3289
      %v3291 = vrot.slane %v3192, 7
      %v3292 = vrot.slane %v3193, 7
      %v3293 = vsel %vm267, %v3291, %v3292
      %v3294 = vrot.slane %v3194, 7
      %v3295 = vrot.slane %v3195, 7
      %v3296 = vsel %vm267, %v3294, %v3295
      %v3297 = vrot.slane %v3196, 7
      %v3298 = vrot.slane %v3197, 7
      %v3299 = vsel %vm267, %v3297, %v3298
      %v3300 = vrot.slane %v3198, 7
      %v3301 = vrot.slane %v3199, 7
      %v3302 = vsel %vm267, %v3300, %v3301
      %v3303 = vrot.slane %v3200, 7
      %v3304 = vrot.slane %v3201, 7
      %v3305 = vsel %vm267, %v3303, %v3304
      %v3306 = vrot.slane %v3202, 7
      %v3307 = vrot.slane %v3203, 7
      %v3308 = vsel %vm267, %v3306, %v3307
      %v3309 = vrot.slane %v3204, 7
      %v3310 = vrot.slane %v3205, 7
      %v3311 = vsel %vm267, %v3309, %v3310
      %v3312 = vrot.slane %v3206, 7
      %v3313 = vrot.slane %v3207, 7
      %v3314 = vsel %vm267, %v3312, %v3313
      %v3315 = vrot.slane %v3208, 7
      %v3316 = vrot.slane %v3209, 7
      %v3317 = vsel %vm267, %v3315, %v3316
      %v3318 = vrot.slane %v3210, 7
      %v3319 = vrot.slane %v3211, 7
      %v3320 = vsel %vm267, %v3318, %v3319
      %v3321 = vrot.slane %v3212, 7
      %v3322 = vrot.slane %v3213, 7
      %v3323 = vsel %vm267, %v3321, %v3322
      %v3324 = vrot.slane %v3214, 7
      %v3325 = vrot.slane %v3215, 7
      %v3326 = vsel %vm267, %v3324, %v3325
      %v3327 = vrot.slane %v3216, 7
      %v3328 = vrot.slane %v3217, 7
      %v3329 = vsel %vm267, %v3327, %v3328
      %v3346 = vsel %vm267, %v3234, %v3282
      %v3347 = vsel %vm267, %v3235, %v3285
      %v3348 = vsel %vm267, %v3236, %v3288
      %v3349 = vsel %vm267, %v3237, %v3291
      %v3350 = vsel %vm267, %v3238, %v3294
      %v3351 = vsel %vm267, %v3239, %v3297
      %v3352 = vsel %vm267, %v3240, %v3300
      %v3353 = vsel %vm267, %v3241, %v3303
      %v3354 = vsel %vm267, %v3242, %v3306
      %v3355 = vsel %vm267, %v3243, %v3309
      %v3356 = vsel %vm267, %v3244, %v3312
      %v3357 = vsel %vm267, %v3245, %v3315
      %v3358 = vsel %vm267, %v3246, %v3318
      %v3359 = vsel %vm267, %v3247, %v3321
      %v3360 = vsel %vm267, %v3248, %v3324
      %v3361 = vsel %vm267, %v3249, %v3327
      %v3362 = vrot.slane %v3187, 1
      %v3363 = vsel %vm348, %v3234, %v3362
      %v3364 = vrot.slane %v3189, 1
      %v3365 = vsel %vm348, %v3235, %v3364
      %v3366 = vrot.slane %v3191, 1
      %v3367 = vsel %vm348, %v3236, %v3366
      %v3368 = vrot.slane %v3193, 1
      %v3369 = vsel %vm348, %v3237, %v3368
      %v3370 = vrot.slane %v3195, 1
      %v3371 = vsel %vm348, %v3238, %v3370
      %v3372 = vrot.slane %v3197, 1
      %v3373 = vsel %vm348, %v3239, %v3372
      %v3374 = vrot.slane %v3199, 1
      %v3375 = vsel %vm348, %v3240, %v3374
      %v3376 = vrot.slane %v3201, 1
      %v3377 = vsel %vm348, %v3241, %v3376
      %v3378 = vrot.slane %v3203, 1
      %v3379 = vsel %vm348, %v3242, %v3378
      %v3380 = vrot.slane %v3205, 1
      %v3381 = vsel %vm348, %v3243, %v3380
      %v3382 = vrot.slane %v3207, 1
      %v3383 = vsel %vm348, %v3244, %v3382
      %v3384 = vrot.slane %v3209, 1
      %v3385 = vsel %vm348, %v3245, %v3384
      %v3386 = vrot.slane %v3211, 1
      %v3387 = vsel %vm348, %v3246, %v3386
      %v3388 = vrot.slane %v3213, 1
      %v3389 = vsel %vm348, %v3247, %v3388
      %v3390 = vrot.slane %v3215, 1
      %v3391 = vsel %vm348, %v3248, %v3390
      %v3392 = vrot.slane %v3217, 1
      %v3393 = vsel %vm348, %v3249, %v3392
      %v3426 = vsel %vm348, %v3362, %v3283
      %v3427 = vsel %vm348, %v3364, %v3286
      %v3428 = vsel %vm348, %v3366, %v3289
      %v3429 = vsel %vm348, %v3368, %v3292
      %v3430 = vsel %vm348, %v3370, %v3295
      %v3431 = vsel %vm348, %v3372, %v3298
      %v3432 = vsel %vm348, %v3374, %v3301
      %v3433 = vsel %vm348, %v3376, %v3304
      %v3434 = vsel %vm348, %v3378, %v3307
      %v3435 = vsel %vm348, %v3380, %v3310
      %v3436 = vsel %vm348, %v3382, %v3313
      %v3437 = vsel %vm348, %v3384, %v3316
      %v3438 = vsel %vm348, %v3386, %v3319
      %v3439 = vsel %vm348, %v3388, %v3322
      %v3440 = vsel %vm348, %v3390, %v3325
      %v3441 = vsel %vm348, %v3392, %v3328
      %v3442 = vld [vmem:[%s2] sm:$0xf]
      %s3443 = scalar_lea.vmem %s2, 12
      %v3444 = vld [vmem:[%s3443] sm:$0xf]
      %v3446 = vsel %vm432, %v3346, 0
      %v3448 = vsel %vm432, %v3284, 0
      %v3451 = vsel %vm432, %v3347, 0
      %v3453 = vsel %vm432, %v3287, 0
      %v3456 = vsel %vm432, %v3348, 0
      %v3458 = vsel %vm432, %v3290, 0
      %v3461 = vsel %vm432, %v3349, 0
      %v3463 = vsel %vm432, %v3293, 0
      %v3466 = vsel %vm432, %v3350, 0
      %v3468 = vsel %vm432, %v3296, 0
      %v3471 = vsel %vm432, %v3351, 0
      %v3473 = vsel %vm432, %v3299, 0
      %v3476 = vsel %vm432, %v3352, 0
      %v3478 = vsel %vm432, %v3302, 0
      %v3481 = vsel %vm432, %v3353, 0
      %v3483 = vsel %vm432, %v3305, 0
      %v3486 = vsel %vm432, %v3354, 0
      %v3488 = vsel %vm432, %v3308, 0
      %v3491 = vsel %vm432, %v3355, 0
      %v3493 = vsel %vm432, %v3311, 0
      %v3496 = vsel %vm432, %v3356, 0
      %v3498 = vsel %vm432, %v3314, 0
      %v3501 = vsel %vm432, %v3357, 0
      %v3503 = vsel %vm432, %v3317, 0
      %v3506 = vsel %vm432, %v3358, 0
      %v3508 = vsel %vm432, %v3320, 0
      %v3511 = vsel %vm432, %v3359, 0
      %v3513 = vsel %vm432, %v3323, 0
      %v3516 = vsel %vm432, %v3360, 0
      %v3518 = vsel %vm432, %v3326, 0
      %v3521 = vsel %vm432, %v3361, 0
      %v3523 = vsel %vm432, %v3329, 0
      %v3526 = vsel %vm513, %v3444, 0
      %3528 = vmatprep.subr.mxu0 0.0
      %3529 = vmatpush1.msra.mxu0 0.0
      %3530 = vmatprep.subr.mxu0 0.0
      %3531 = vmatpush1.msra.mxu0 0.0
      %3532 = vmatprep.subr.mxu0 0.0
      %3533 = vmatpush1.msra.mxu0 0.0
      %3534 = vmatprep.subr.mxu0 0.0
      %3535 = vmatpush1.msra.mxu0 0.0
      %3536 = vmatprep.subr.mxu0 0.0
      %3537 = vmatpush1.msra.mxu0 0.0
      %3538 = vmatprep.subr.mxu0 0.0
      %3539 = vmatpush1.msra.mxu0 0.0
      %3540 = vmatprep.subr.mxu0 0.0
      %3541 = vmatpush1.msra.mxu0 0.0
      %3542 = vmatprep.subr.mxu0 0.0
      %3543 = vmatpush1.msra.mxu0 0.0
      %3544 = vmatprep.subr.mxu0 0.0
      %3545 = vmatpush1.msra.mxu0 0.0
      %3546 = vmatprep.subr.mxu0 0.0
      %3547 = vmatpush1.msra.mxu0 0.0
      %3548 = vmatprep.subr.mxu0 0.0
      %3549 = vmatpush1.msra.mxu0 0.0
      %3550 = vmatprep.subr.mxu0 0.0
      %3551 = vmatpush1.msra.mxu0 0.0
      %3552 = vmatprep.subr.mxu0 0.0
      %3553 = vmatpush1.msra.mxu0 0.0
      %3554 = vmatprep.subr.mxu0 0.0
      %3555 = vmatpush1.msra.mxu0 0.0
      %3556 = vmatprep.subr.mxu0 0.0
      %3557 = vmatpush1.msra.mxu0 0.0
      %3558 = vmatprep.subr.mxu0 0.0
      %3559 = vmatpush1.msra.mxu0 %v3526
      %3560 = vmatprep.subr.mxu0 0.0
      %3561 = vmatpush2.msra.mxu0 0.0
      %3562 = vmatprep.subr.mxu0 0.0
      %3563 = vmatpush2.msra.mxu0 0.0
      %3564 = vmatprep.subr.mxu0 0.0
      %3565 = vmatpush2.msra.mxu0 0.0
      %3566 = vmatprep.subr.mxu0 0.0
      %3567 = vmatpush2.msra.mxu0 0.0
      %3568 = vmatprep.subr.mxu0 0.0
      %3569 = vmatpush2.msra.mxu0 0.0
      %3570 = vmatprep.subr.mxu0 0.0
      %3571 = vmatpush2.msra.mxu0 0.0
      %3572 = vmatprep.subr.mxu0 0.0
      %3573 = vmatpush2.msra.mxu0 0.0
      %3574 = vmatprep.subr.mxu0 0.0
      %3575 = vmatpush2.msra.mxu0 0.0
      %3576 = vmatprep.subr.mxu0 0.0
      %3577 = vmatpush2.msra.mxu0 0.0
      %3578 = vmatprep.subr.mxu0 0.0
      %3579 = vmatpush2.msra.mxu0 0.0
      %3580 = vmatprep.subr.mxu0 0.0
      %3581 = vmatpush2.msra.mxu0 0.0
      %3582 = vmatprep.subr.mxu0 0.0
      %3583 = vmatpush2.msra.mxu0 0.0
      %3584 = vmatprep.subr.mxu0 0.0
      %3585 = vmatpush2.msra.mxu0 0.0
      %3586 = vmatprep.subr.mxu0 0.0
      %3587 = vmatpush2.msra.mxu0 0.0
      %3588 = vmatprep.subr.mxu0 0.0
      %3589 = vmatpush2.msra.mxu0 0.0
      %3590 = vmatprep.subr.mxu0 0.0
      %3591 = vmatpush2.msra.mxu0 0.0
      %3592 = vmatprep.mubr.f32.mxu0 0.0
      %3593 = vmatmul.mubr.f32.gmra.mxu0 %v3446
      %v3594 = vpop.f32.mrf.mxu0
      %v3595 = vadd.f32 0.0, %v3594
      %v3596 = vpop.f32.mrf.mxu0
      %3597 = vmatprep.mubr.f32.mxu0 0.0
      %3598 = vmatmul.mubr.f32.gmra.mxu0 %v3448
      %v3599 = vpop.f32.mrf.mxu0
      %v3600 = vadd.f32 0.0, %v3599
      %v3601 = vpop.f32.mrf.mxu0
      %3602 = vmatprep.mubr.f32.mxu0 0.0
      %3603 = vmatmul.mubr.f32.gmra.mxu0 %v3451
      %v3604 = vpop.f32.mrf.mxu0
      %v3605 = vadd.f32 0.0, %v3604
      %v3606 = vpop.f32.mrf.mxu0
      %3607 = vmatprep.mubr.f32.mxu0 0.0
      %3608 = vmatmul.mubr.f32.gmra.mxu0 %v3453
      %v3609 = vpop.f32.mrf.mxu0
      %v3610 = vadd.f32 0.0, %v3609
      %v3611 = vpop.f32.mrf.mxu0
      %3612 = vmatprep.mubr.f32.mxu0 0.0
      %3613 = vmatmul.mubr.f32.gmra.mxu0 %v3456
      %v3614 = vpop.f32.mrf.mxu0
      %v3615 = vadd.f32 0.0, %v3614
      %v3616 = vpop.f32.mrf.mxu0
      %3617 = vmatprep.mubr.f32.mxu0 0.0
      %3618 = vmatmul.mubr.f32.gmra.mxu0 %v3458
      %v3619 = vpop.f32.mrf.mxu0
      %v3620 = vadd.f32 0.0, %v3619
      %v3621 = vpop.f32.mrf.mxu0
      %3622 = vmatprep.mubr.f32.mxu0 0.0
      %3623 = vmatmul.mubr.f32.gmra.mxu0 %v3461
      %v3624 = vpop.f32.mrf.mxu0
      %v3625 = vadd.f32 0.0, %v3624
      %v3626 = vpop.f32.mrf.mxu0
      %3627 = vmatprep.mubr.f32.mxu0 0.0
      %3628 = vmatmul.mubr.f32.gmra.mxu0 %v3463
      %v3629 = vpop.f32.mrf.mxu0
      %v3630 = vadd.f32 0.0, %v3629
      %v3631 = vpop.f32.mrf.mxu0
      %3632 = vmatprep.mubr.f32.mxu0 0.0
      %3633 = vmatmul.mubr.f32.gmra.mxu0 %v3466
      %v3634 = vpop.f32.mrf.mxu0
      %v3635 = vadd.f32 0.0, %v3634
      %v3636 = vpop.f32.mrf.mxu0
      %3637 = vmatprep.mubr.f32.mxu0 0.0
      %3638 = vmatmul.mubr.f32.gmra.mxu0 %v3468
      %v3639 = vpop.f32.mrf.mxu0
      %v3640 = vadd.f32 0.0, %v3639
      %v3641 = vpop.f32.mrf.mxu0
      %3642 = vmatprep.mubr.f32.mxu0 0.0
      %3643 = vmatmul.mubr.f32.gmra.mxu0 %v3471
      %v3644 = vpop.f32.mrf.mxu0
      %v3645 = vadd.f32 0.0, %v3644
      %v3646 = vpop.f32.mrf.mxu0
      %3647 = vmatprep.mubr.f32.mxu0 0.0
      %3648 = vmatmul.mubr.f32.gmra.mxu0 %v3473
      %v3649 = vpop.f32.mrf.mxu0
      %v3650 = vadd.f32 0.0, %v3649
      %v3651 = vpop.f32.mrf.mxu0
      %3652 = vmatprep.mubr.f32.mxu0 0.0
      %3653 = vmatmul.mubr.f32.gmra.mxu0 %v3476
      %v3654 = vpop.f32.mrf.mxu0
      %v3655 = vadd.f32 0.0, %v3654
      %v3656 = vpop.f32.mrf.mxu0
      %3657 = vmatprep.mubr.f32.mxu0 0.0
      %3658 = vmatmul.mubr.f32.gmra.mxu0 %v3478
      %v3659 = vpop.f32.mrf.mxu0
      %v3660 = vadd.f32 0.0, %v3659
      %v3661 = vpop.f32.mrf.mxu0
      %3662 = vmatprep.mubr.f32.mxu0 0.0
      %3663 = vmatmul.mubr.f32.gmra.mxu0 %v3481
      %v3664 = vpop.f32.mrf.mxu0
      %v3665 = vadd.f32 0.0, %v3664
      %v3666 = vpop.f32.mrf.mxu0
      %3667 = vmatprep.mubr.f32.mxu0 0.0
      %3668 = vmatmul.mubr.f32.gmra.mxu0 %v3483
      %v3669 = vpop.f32.mrf.mxu0
      %v3670 = vadd.f32 0.0, %v3669
      %v3671 = vpop.f32.mrf.mxu0
      %3672 = vmatprep.mubr.f32.mxu0 0.0
      %3673 = vmatmul.mubr.f32.gmra.mxu0 %v3486
      %v3674 = vpop.f32.mrf.mxu0
      %v3675 = vadd.f32 0.0, %v3674
      %v3676 = vpop.f32.mrf.mxu0
      %3677 = vmatprep.mubr.f32.mxu0 0.0
      %3678 = vmatmul.mubr.f32.gmra.mxu0 %v3488
      %v3679 = vpop.f32.mrf.mxu0
      %v3680 = vadd.f32 0.0, %v3679
      %v3681 = vpop.f32.mrf.mxu0
      %3682 = vmatprep.mubr.f32.mxu0 0.0
      %3683 = vmatmul.mubr.f32.gmra.mxu0 %v3491
      %v3684 = vpop.f32.mrf.mxu0
      %v3685 = vadd.f32 0.0, %v3684
      %v3686 = vpop.f32.mrf.mxu0
      %3687 = vmatprep.mubr.f32.mxu0 0.0
      %3688 = vmatmul.mubr.f32.gmra.mxu0 %v3493
      %v3689 = vpop.f32.mrf.mxu0
      %v3690 = vadd.f32 0.0, %v3689
      %v3691 = vpop.f32.mrf.mxu0
      %3692 = vmatprep.mubr.f32.mxu0 0.0
      %3693 = vmatmul.mubr.f32.gmra.mxu0 %v3496
      %v3694 = vpop.f32.mrf.mxu0
      %v3695 = vadd.f32 0.0, %v3694
      %v3696 = vpop.f32.mrf.mxu0
      %3697 = vmatprep.mubr.f32.mxu0 0.0
      %3698 = vmatmul.mubr.f32.gmra.mxu0 %v3498
      %v3699 = vpop.f32.mrf.mxu0
      %v3700 = vadd.f32 0.0, %v3699
      %v3701 = vpop.f32.mrf.mxu0
      %3702 = vmatprep.mubr.f32.mxu0 0.0
      %3703 = vmatmul.mubr.f32.gmra.mxu0 %v3501
      %v3704 = vpop.f32.mrf.mxu0
      %v3705 = vadd.f32 0.0, %v3704
      %v3706 = vpop.f32.mrf.mxu0
      %3707 = vmatprep.mubr.f32.mxu0 0.0
      %3708 = vmatmul.mubr.f32.gmra.mxu0 %v3503
      %v3709 = vpop.f32.mrf.mxu0
      %v3710 = vadd.f32 0.0, %v3709
      %v3711 = vpop.f32.mrf.mxu0
      %3712 = vmatprep.mubr.f32.mxu0 0.0
      %3713 = vmatmul.mubr.f32.gmra.mxu0 %v3506
      %v3714 = vpop.f32.mrf.mxu0
      %v3715 = vadd.f32 0.0, %v3714
      %v3716 = vpop.f32.mrf.mxu0
      %3717 = vmatprep.mubr.f32.mxu0 0.0
      %3718 = vmatmul.mubr.f32.gmra.mxu0 %v3508
      %v3719 = vpop.f32.mrf.mxu0
      %v3720 = vadd.f32 0.0, %v3719
      %v3721 = vpop.f32.mrf.mxu0
      %3722 = vmatprep.mubr.f32.mxu0 0.0
      %3723 = vmatmul.mubr.f32.gmra.mxu0 %v3511
      %v3724 = vpop.f32.mrf.mxu0
      %v3725 = vadd.f32 0.0, %v3724
      %v3726 = vpop.f32.mrf.mxu0
      %3727 = vmatprep.mubr.f32.mxu0 0.0
      %3728 = vmatmul.mubr.f32.gmra.mxu0 %v3513
      %v3729 = vpop.f32.mrf.mxu0
      %v3730 = vadd.f32 0.0, %v3729
      %v3731 = vpop.f32.mrf.mxu0
      %3732 = vmatprep.mubr.f32.mxu0 0.0
      %3733 = vmatmul.mubr.f32.gmra.mxu0 %v3516
      %v3734 = vpop.f32.mrf.mxu0
      %v3735 = vadd.f32 0.0, %v3734
      %v3736 = vpop.f32.mrf.mxu0
      %3737 = vmatprep.mubr.f32.mxu0 0.0
      %3738 = vmatmul.mubr.f32.gmra.mxu0 %v3518
      %v3739 = vpop.f32.mrf.mxu0
      %v3740 = vadd.f32 0.0, %v3739
      %v3741 = vpop.f32.mrf.mxu0
      %3742 = vmatprep.mubr.f32.mxu0 0.0
      %3743 = vmatmul.mubr.f32.gmra.mxu0 %v3521
      %v3744 = vpop.f32.mrf.mxu0
      %v3745 = vadd.f32 0.0, %v3744
      %v3746 = vpop.f32.mrf.mxu0
      %3747 = vmatprep.mubr.f32.mxu0 0.0
      %3748 = vmatmul.mubr.f32.gmra.mxu0 %v3523
      %v3749 = vpop.f32.mrf.mxu0
      %v3750 = vadd.f32 0.0, %v3749
      %v3751 = vpop.f32.mrf.mxu0
      %3752 = vdwg.mxu0
      %v3754 = vsel %vm513, %v3442, 0
      %3756 = vmatprep.subr.mxu0 0.0
      %3757 = vmatpush1.msra.mxu0 0.0
      %3758 = vmatprep.subr.mxu0 0.0
      %3759 = vmatpush1.msra.mxu0 0.0
      %3760 = vmatprep.subr.mxu0 0.0
      %3761 = vmatpush1.msra.mxu0 0.0
      %3762 = vmatprep.subr.mxu0 0.0
      %3763 = vmatpush1.msra.mxu0 0.0
      %3764 = vmatprep.subr.mxu0 0.0
      %3765 = vmatpush1.msra.mxu0 0.0
      %3766 = vmatprep.subr.mxu0 0.0
      %3767 = vmatpush1.msra.mxu0 0.0
      %3768 = vmatprep.subr.mxu0 0.0
      %3769 = vmatpush1.msra.mxu0 0.0
      %3770 = vmatprep.subr.mxu0 0.0
      %3771 = vmatpush1.msra.mxu0 0.0
      %3772 = vmatprep.subr.mxu0 0.0
      %3773 = vmatpush1.msra.mxu0 0.0
      %3774 = vmatprep.subr.mxu0 0.0
      %3775 = vmatpush1.msra.mxu0 0.0
      %3776 = vmatprep.subr.mxu0 0.0
      %3777 = vmatpush1.msra.mxu0 0.0
      %3778 = vmatprep.subr.mxu0 0.0
      %3779 = vmatpush1.msra.mxu0 0.0
      %3780 = vmatprep.subr.mxu0 0.0
      %3781 = vmatpush1.msra.mxu0 0.0
      %3782 = vmatprep.subr.mxu0 0.0
      %3783 = vmatpush1.msra.mxu0 0.0
      %3784 = vmatprep.subr.mxu0 0.0
      %3785 = vmatpush1.msra.mxu0 0.0
      %3786 = vmatprep.subr.mxu0 0.0
      %3787 = vmatpush1.msra.mxu0 %v3754
      %3788 = vmatprep.subr.mxu0 0.0
      %3789 = vmatpush2.msra.mxu0 0.0
      %3790 = vmatprep.subr.mxu0 0.0
      %3791 = vmatpush2.msra.mxu0 0.0
      %3792 = vmatprep.subr.mxu0 0.0
      %3793 = vmatpush2.msra.mxu0 0.0
      %3794 = vmatprep.subr.mxu0 0.0
      %3795 = vmatpush2.msra.mxu0 0.0
      %3796 = vmatprep.subr.mxu0 0.0
      %3797 = vmatpush2.msra.mxu0 0.0
      %3798 = vmatprep.subr.mxu0 0.0
      %3799 = vmatpush2.msra.mxu0 0.0
      %3800 = vmatprep.subr.mxu0 0.0
      %3801 = vmatpush2.msra.mxu0 0.0
      %3802 = vmatprep.subr.mxu0 0.0
      %3803 = vmatpush2.msra.mxu0 0.0
      %3804 = vmatprep.subr.mxu0 0.0
      %3805 = vmatpush2.msra.mxu0 0.0
      %3806 = vmatprep.subr.mxu0 0.0
      %3807 = vmatpush2.msra.mxu0 0.0
      %3808 = vmatprep.subr.mxu0 0.0
      %3809 = vmatpush2.msra.mxu0 0.0
      %3810 = vmatprep.subr.mxu0 0.0
      %3811 = vmatpush2.msra.mxu0 0.0
      %3812 = vmatprep.subr.mxu0 0.0
      %3813 = vmatpush2.msra.mxu0 0.0
      %3814 = vmatprep.subr.mxu0 0.0
      %3815 = vmatpush2.msra.mxu0 0.0
      %3816 = vmatprep.subr.mxu0 0.0
      %3817 = vmatpush2.msra.mxu0 0.0
      %3818 = vmatprep.subr.mxu0 0.0
      %3819 = vmatpush2.msra.mxu0 0.0
      %3820 = vmatprep.mubr.f32.mxu0 0.0
      %3821 = vmatmul.mubr.f32.gmra.mxu0 %v3451
      %v3822 = vpop.f32.mrf.mxu0
      %v3823 = vadd.f32 %v3595, %v3822
      %v3824 = vpop.f32.mrf.mxu0
      %3825 = vmatprep.mubr.f32.mxu0 0.0
      %3826 = vmatmul.mubr.f32.gmra.mxu0 %v3453
      %v3827 = vpop.f32.mrf.mxu0
      %v3828 = vadd.f32 %v3600, %v3827
      %v3829 = vpop.f32.mrf.mxu0
      %3830 = vmatprep.mubr.f32.mxu0 0.0
      %3831 = vmatmul.mubr.f32.gmra.mxu0 %v3446
      %v3832 = vpop.f32.mrf.mxu0
      %v3833 = vadd.f32 %v3605, %v3832
      %v3834 = vpop.f32.mrf.mxu0
      %3835 = vmatprep.mubr.f32.mxu0 0.0
      %3836 = vmatmul.mubr.f32.gmra.mxu0 %v3448
      %v3837 = vpop.f32.mrf.mxu0
      %v3838 = vadd.f32 %v3610, %v3837
      %v3839 = vpop.f32.mrf.mxu0
      %3840 = vmatprep.mubr.f32.mxu0 0.0
      %3841 = vmatmul.mubr.f32.gmra.mxu0 %v3451
      %v3842 = vpop.f32.mrf.mxu0
      %v3843 = vadd.f32 %v3615, %v3842
      %v3844 = vpop.f32.mrf.mxu0
      %3845 = vmatprep.mubr.f32.mxu0 0.0
      %3846 = vmatmul.mubr.f32.gmra.mxu0 %v3453
      %v3847 = vpop.f32.mrf.mxu0
      %v3848 = vadd.f32 %v3620, %v3847
      %v3849 = vpop.f32.mrf.mxu0
      %3850 = vmatprep.mubr.f32.mxu0 0.0
      %3851 = vmatmul.mubr.f32.gmra.mxu0 %v3456
      %v3852 = vpop.f32.mrf.mxu0
      %v3853 = vadd.f32 %v3625, %v3852
      %v3854 = vpop.f32.mrf.mxu0
      %3855 = vmatprep.mubr.f32.mxu0 0.0
      %3856 = vmatmul.mubr.f32.gmra.mxu0 %v3458
      %v3857 = vpop.f32.mrf.mxu0
      %v3858 = vadd.f32 %v3630, %v3857
      %v3859 = vpop.f32.mrf.mxu0
      %3860 = vmatprep.mubr.f32.mxu0 0.0
      %3861 = vmatmul.mubr.f32.gmra.mxu0 %v3461
      %v3862 = vpop.f32.mrf.mxu0
      %v3863 = vadd.f32 %v3635, %v3862
      %v3864 = vpop.f32.mrf.mxu0
      %3865 = vmatprep.mubr.f32.mxu0 0.0
      %3866 = vmatmul.mubr.f32.gmra.mxu0 %v3463
      %v3867 = vpop.f32.mrf.mxu0
      %v3868 = vadd.f32 %v3640, %v3867
      %v3869 = vpop.f32.mrf.mxu0
      %3870 = vmatprep.mubr.f32.mxu0 0.0
      %3871 = vmatmul.mubr.f32.gmra.mxu0 %v3466
      %v3872 = vpop.f32.mrf.mxu0
      %v3873 = vadd.f32 %v3645, %v3872
      %v3874 = vpop.f32.mrf.mxu0
      %3875 = vmatprep.mubr.f32.mxu0 0.0
      %3876 = vmatmul.mubr.f32.gmra.mxu0 %v3468
      %v3877 = vpop.f32.mrf.mxu0
      %v3878 = vadd.f32 %v3650, %v3877
      %v3879 = vpop.f32.mrf.mxu0
      %3880 = vmatprep.mubr.f32.mxu0 0.0
      %3881 = vmatmul.mubr.f32.gmra.mxu0 %v3471
      %v3882 = vpop.f32.mrf.mxu0
      %v3883 = vadd.f32 %v3655, %v3882
      %v3884 = vpop.f32.mrf.mxu0
      %3885 = vmatprep.mubr.f32.mxu0 0.0
      %3886 = vmatmul.mubr.f32.gmra.mxu0 %v3473
      %v3887 = vpop.f32.mrf.mxu0
      %v3888 = vadd.f32 %v3660, %v3887
      %v3889 = vpop.f32.mrf.mxu0
      %3890 = vmatprep.mubr.f32.mxu0 0.0
      %3891 = vmatmul.mubr.f32.gmra.mxu0 %v3476
      %v3892 = vpop.f32.mrf.mxu0
      %v3893 = vadd.f32 %v3665, %v3892
      %v3894 = vpop.f32.mrf.mxu0
      %3895 = vmatprep.mubr.f32.mxu0 0.0
      %3896 = vmatmul.mubr.f32.gmra.mxu0 %v3478
      %v3897 = vpop.f32.mrf.mxu0
      %v3898 = vadd.f32 %v3670, %v3897
      %v3899 = vpop.f32.mrf.mxu0
      %3900 = vmatprep.mubr.f32.mxu0 0.0
      %3901 = vmatmul.mubr.f32.gmra.mxu0 %v3481
      %v3902 = vpop.f32.mrf.mxu0
      %v3903 = vadd.f32 %v3675, %v3902
      %v3904 = vpop.f32.mrf.mxu0
      %3905 = vmatprep.mubr.f32.mxu0 0.0
      %3906 = vmatmul.mubr.f32.gmra.mxu0 %v3483
      %v3907 = vpop.f32.mrf.mxu0
      %v3908 = vadd.f32 %v3680, %v3907
      %v3909 = vpop.f32.mrf.mxu0
      %3910 = vmatprep.mubr.f32.mxu0 0.0
      %3911 = vmatmul.mubr.f32.gmra.mxu0 %v3486
      %v3912 = vpop.f32.mrf.mxu0
      %v3913 = vadd.f32 %v3685, %v3912
      %v3914 = vpop.f32.mrf.mxu0
      %3915 = vmatprep.mubr.f32.mxu0 0.0
      %3916 = vmatmul.mubr.f32.gmra.mxu0 %v3488
      %v3917 = vpop.f32.mrf.mxu0
      %v3918 = vadd.f32 %v3690, %v3917
      %v3919 = vpop.f32.mrf.mxu0
      %3920 = vmatprep.mubr.f32.mxu0 0.0
      %3921 = vmatmul.mubr.f32.gmra.mxu0 %v3491
      %v3922 = vpop.f32.mrf.mxu0
      %v3923 = vadd.f32 %v3695, %v3922
      %v3924 = vpop.f32.mrf.mxu0
      %3925 = vmatprep.mubr.f32.mxu0 0.0
      %3926 = vmatmul.mubr.f32.gmra.mxu0 %v3493
      %v3927 = vpop.f32.mrf.mxu0
      %v3928 = vadd.f32 %v3700, %v3927
      %v3929 = vpop.f32.mrf.mxu0
      %3930 = vmatprep.mubr.f32.mxu0 0.0
      %3931 = vmatmul.mubr.f32.gmra.mxu0 %v3496
      %v3932 = vpop.f32.mrf.mxu0
      %v3933 = vadd.f32 %v3705, %v3932
      %v3934 = vpop.f32.mrf.mxu0
      %3935 = vmatprep.mubr.f32.mxu0 0.0
      %3936 = vmatmul.mubr.f32.gmra.mxu0 %v3498
      %v3937 = vpop.f32.mrf.mxu0
      %v3938 = vadd.f32 %v3710, %v3937
      %v3939 = vpop.f32.mrf.mxu0
      %3940 = vmatprep.mubr.f32.mxu0 0.0
      %3941 = vmatmul.mubr.f32.gmra.mxu0 %v3501
      %v3942 = vpop.f32.mrf.mxu0
      %v3943 = vadd.f32 %v3715, %v3942
      %v3944 = vpop.f32.mrf.mxu0
      %3945 = vmatprep.mubr.f32.mxu0 0.0
      %3946 = vmatmul.mubr.f32.gmra.mxu0 %v3503
      %v3947 = vpop.f32.mrf.mxu0
      %v3948 = vadd.f32 %v3720, %v3947
      %v3949 = vpop.f32.mrf.mxu0
      %3950 = vmatprep.mubr.f32.mxu0 0.0
      %3951 = vmatmul.mubr.f32.gmra.mxu0 %v3506
      %v3952 = vpop.f32.mrf.mxu0
      %v3953 = vadd.f32 %v3725, %v3952
      %v3954 = vpop.f32.mrf.mxu0
      %3955 = vmatprep.mubr.f32.mxu0 0.0
      %3956 = vmatmul.mubr.f32.gmra.mxu0 %v3508
      %v3957 = vpop.f32.mrf.mxu0
      %v3958 = vadd.f32 %v3730, %v3957
      %v3959 = vpop.f32.mrf.mxu0
      %3960 = vmatprep.mubr.f32.mxu0 0.0
      %3961 = vmatmul.mubr.f32.gmra.mxu0 %v3511
      %v3962 = vpop.f32.mrf.mxu0
      %v3963 = vadd.f32 %v3735, %v3962
      %v3964 = vpop.f32.mrf.mxu0
      %3965 = vmatprep.mubr.f32.mxu0 0.0
      %3966 = vmatmul.mubr.f32.gmra.mxu0 %v3513
      %v3967 = vpop.f32.mrf.mxu0
      %v3968 = vadd.f32 %v3740, %v3967
      %v3969 = vpop.f32.mrf.mxu0
      %3970 = vmatprep.mubr.f32.mxu0 0.0
      %3971 = vmatmul.mubr.f32.gmra.mxu0 %v3516
      %v3972 = vpop.f32.mrf.mxu0
      %v3973 = vadd.f32 %v3745, %v3972
      %v3974 = vpop.f32.mrf.mxu0
      %3975 = vmatprep.mubr.f32.mxu0 0.0
      %3976 = vmatmul.mubr.f32.gmra.mxu0 %v3518
      %v3977 = vpop.f32.mrf.mxu0
      %v3978 = vadd.f32 %v3750, %v3977
      %v3979 = vpop.f32.mrf.mxu0
      %3980 = vdwg.mxu0
      %s3981 = scalar_lea.vmem %s2, 24
      %v3982 = vld [vmem:[%s3981] sm:$0xf]
      %v3984 = vsel %vm513, %v3982, 0
      %3986 = vmatprep.subr.mxu0 0.0
      %3987 = vmatpush1.msra.mxu0 0.0
      %3988 = vmatprep.subr.mxu0 0.0
      %3989 = vmatpush1.msra.mxu0 0.0
      %3990 = vmatprep.subr.mxu0 0.0
      %3991 = vmatpush1.msra.mxu0 0.0
      %3992 = vmatprep.subr.mxu0 0.0
      %3993 = vmatpush1.msra.mxu0 0.0
      %3994 = vmatprep.subr.mxu0 0.0
      %3995 = vmatpush1.msra.mxu0 0.0
      %3996 = vmatprep.subr.mxu0 0.0
      %3997 = vmatpush1.msra.mxu0 0.0
      %3998 = vmatprep.subr.mxu0 0.0
      %3999 = vmatpush1.msra.mxu0 0.0
      %4000 = vmatprep.subr.mxu0 0.0
      %4001 = vmatpush1.msra.mxu0 0.0
      %4002 = vmatprep.subr.mxu0 0.0
      %4003 = vmatpush1.msra.mxu0 0.0
      %4004 = vmatprep.subr.mxu0 0.0
      %4005 = vmatpush1.msra.mxu0 0.0
      %4006 = vmatprep.subr.mxu0 0.0
      %4007 = vmatpush1.msra.mxu0 0.0
      %4008 = vmatprep.subr.mxu0 0.0
      %4009 = vmatpush1.msra.mxu0 0.0
      %4010 = vmatprep.subr.mxu0 0.0
      %4011 = vmatpush1.msra.mxu0 0.0
      %4012 = vmatprep.subr.mxu0 0.0
      %4013 = vmatpush1.msra.mxu0 0.0
      %4014 = vmatprep.subr.mxu0 0.0
      %4015 = vmatpush1.msra.mxu0 0.0
      %4016 = vmatprep.subr.mxu0 0.0
      %4017 = vmatpush1.msra.mxu0 %v3984
      %4018 = vmatprep.subr.mxu0 0.0
      %4019 = vmatpush2.msra.mxu0 0.0
      %4020 = vmatprep.subr.mxu0 0.0
      %4021 = vmatpush2.msra.mxu0 0.0
      %4022 = vmatprep.subr.mxu0 0.0
      %4023 = vmatpush2.msra.mxu0 0.0
      %4024 = vmatprep.subr.mxu0 0.0
      %4025 = vmatpush2.msra.mxu0 0.0
      %4026 = vmatprep.subr.mxu0 0.0
      %4027 = vmatpush2.msra.mxu0 0.0
      %4028 = vmatprep.subr.mxu0 0.0
      %4029 = vmatpush2.msra.mxu0 0.0
      %4030 = vmatprep.subr.mxu0 0.0
      %4031 = vmatpush2.msra.mxu0 0.0
      %4032 = vmatprep.subr.mxu0 0.0
      %4033 = vmatpush2.msra.mxu0 0.0
      %4034 = vmatprep.subr.mxu0 0.0
      %4035 = vmatpush2.msra.mxu0 0.0
      %4036 = vmatprep.subr.mxu0 0.0
      %4037 = vmatpush2.msra.mxu0 0.0
      %4038 = vmatprep.subr.mxu0 0.0
      %4039 = vmatpush2.msra.mxu0 0.0
      %4040 = vmatprep.subr.mxu0 0.0
      %4041 = vmatpush2.msra.mxu0 0.0
      %4042 = vmatprep.subr.mxu0 0.0
      %4043 = vmatpush2.msra.mxu0 0.0
      %4044 = vmatprep.subr.mxu0 0.0
      %4045 = vmatpush2.msra.mxu0 0.0
      %4046 = vmatprep.subr.mxu0 0.0
      %4047 = vmatpush2.msra.mxu0 0.0
      %4048 = vmatprep.subr.mxu0 0.0
      %4049 = vmatpush2.msra.mxu0 0.0
      %4050 = vmatprep.mubr.f32.mxu0 0.0
      %4051 = vmatmul.mubr.f32.gmra.mxu0 %v3451
      %v4052 = vpop.f32.mrf.mxu0
      %v4053 = vadd.f32 0.0, %v4052
      %v4054 = vpop.f32.mrf.mxu0
      %4055 = vmatprep.mubr.f32.mxu0 0.0
      %4056 = vmatmul.mubr.f32.gmra.mxu0 %v3453
      %v4057 = vpop.f32.mrf.mxu0
      %v4058 = vadd.f32 0.0, %v4057
      %v4059 = vpop.f32.mrf.mxu0
      %4060 = vmatprep.mubr.f32.mxu0 0.0
      %4061 = vmatmul.mubr.f32.gmra.mxu0 %v3456
      %v4062 = vpop.f32.mrf.mxu0
      %v4063 = vadd.f32 0.0, %v4062
      %v4064 = vpop.f32.mrf.mxu0
      %4065 = vmatprep.mubr.f32.mxu0 0.0
      %4066 = vmatmul.mubr.f32.gmra.mxu0 %v3458
      %v4067 = vpop.f32.mrf.mxu0
      %v4068 = vadd.f32 0.0, %v4067
      %v4069 = vpop.f32.mrf.mxu0
      %4070 = vmatprep.mubr.f32.mxu0 0.0
      %4071 = vmatmul.mubr.f32.gmra.mxu0 %v3461
      %v4072 = vpop.f32.mrf.mxu0
      %v4073 = vadd.f32 0.0, %v4072
      %v4074 = vpop.f32.mrf.mxu0
      %4075 = vmatprep.mubr.f32.mxu0 0.0
      %4076 = vmatmul.mubr.f32.gmra.mxu0 %v3463
      %v4077 = vpop.f32.mrf.mxu0
      %v4078 = vadd.f32 0.0, %v4077
      %v4079 = vpop.f32.mrf.mxu0
      %4080 = vmatprep.mubr.f32.mxu0 0.0
      %4081 = vmatmul.mubr.f32.gmra.mxu0 %v3466
      %v4082 = vpop.f32.mrf.mxu0
      %v4083 = vadd.f32 0.0, %v4082
      %v4084 = vpop.f32.mrf.mxu0
      %4085 = vmatprep.mubr.f32.mxu0 0.0
      %4086 = vmatmul.mubr.f32.gmra.mxu0 %v3468
      %v4087 = vpop.f32.mrf.mxu0
      %v4088 = vadd.f32 0.0, %v4087
      %v4089 = vpop.f32.mrf.mxu0
      %4090 = vmatprep.mubr.f32.mxu0 0.0
      %4091 = vmatmul.mubr.f32.gmra.mxu0 %v3471
      %v4092 = vpop.f32.mrf.mxu0
      %v4093 = vadd.f32 0.0, %v4092
      %v4094 = vpop.f32.mrf.mxu0
      %4095 = vmatprep.mubr.f32.mxu0 0.0
      %4096 = vmatmul.mubr.f32.gmra.mxu0 %v3473
      %v4097 = vpop.f32.mrf.mxu0
      %v4098 = vadd.f32 0.0, %v4097
      %v4099 = vpop.f32.mrf.mxu0
      %4100 = vmatprep.mubr.f32.mxu0 0.0
      %4101 = vmatmul.mubr.f32.gmra.mxu0 %v3476
      %v4102 = vpop.f32.mrf.mxu0
      %v4103 = vadd.f32 0.0, %v4102
      %v4104 = vpop.f32.mrf.mxu0
      %4105 = vmatprep.mubr.f32.mxu0 0.0
      %4106 = vmatmul.mubr.f32.gmra.mxu0 %v3478
      %v4107 = vpop.f32.mrf.mxu0
      %v4108 = vadd.f32 0.0, %v4107
      %v4109 = vpop.f32.mrf.mxu0
      %4110 = vmatprep.mubr.f32.mxu0 0.0
      %4111 = vmatmul.mubr.f32.gmra.mxu0 %v3481
      %v4112 = vpop.f32.mrf.mxu0
      %v4113 = vadd.f32 0.0, %v4112
      %v4114 = vpop.f32.mrf.mxu0
      %4115 = vmatprep.mubr.f32.mxu0 0.0
      %4116 = vmatmul.mubr.f32.gmra.mxu0 %v3483
      %v4117 = vpop.f32.mrf.mxu0
      %v4118 = vadd.f32 0.0, %v4117
      %v4119 = vpop.f32.mrf.mxu0
      %4120 = vmatprep.mubr.f32.mxu0 0.0
      %4121 = vmatmul.mubr.f32.gmra.mxu0 %v3486
      %v4122 = vpop.f32.mrf.mxu0
      %v4123 = vadd.f32 0.0, %v4122
      %v4124 = vpop.f32.mrf.mxu0
      %4125 = vmatprep.mubr.f32.mxu0 0.0
      %4126 = vmatmul.mubr.f32.gmra.mxu0 %v3488
      %v4127 = vpop.f32.mrf.mxu0
      %v4128 = vadd.f32 0.0, %v4127
      %v4129 = vpop.f32.mrf.mxu0
      %4130 = vmatprep.mubr.f32.mxu0 0.0
      %4131 = vmatmul.mubr.f32.gmra.mxu0 %v3491
      %v4132 = vpop.f32.mrf.mxu0
      %v4133 = vadd.f32 0.0, %v4132
      %v4134 = vpop.f32.mrf.mxu0
      %4135 = vmatprep.mubr.f32.mxu0 0.0
      %4136 = vmatmul.mubr.f32.gmra.mxu0 %v3493
      %v4137 = vpop.f32.mrf.mxu0
      %v4138 = vadd.f32 0.0, %v4137
      %v4139 = vpop.f32.mrf.mxu0
      %4140 = vmatprep.mubr.f32.mxu0 0.0
      %4141 = vmatmul.mubr.f32.gmra.mxu0 %v3496
      %v4142 = vpop.f32.mrf.mxu0
      %v4143 = vadd.f32 0.0, %v4142
      %v4144 = vpop.f32.mrf.mxu0
      %4145 = vmatprep.mubr.f32.mxu0 0.0
      %4146 = vmatmul.mubr.f32.gmra.mxu0 %v3498
      %v4147 = vpop.f32.mrf.mxu0
      %v4148 = vadd.f32 0.0, %v4147
      %v4149 = vpop.f32.mrf.mxu0
      %4150 = vmatprep.mubr.f32.mxu0 0.0
      %4151 = vmatmul.mubr.f32.gmra.mxu0 %v3501
      %v4152 = vpop.f32.mrf.mxu0
      %v4153 = vadd.f32 0.0, %v4152
      %v4154 = vpop.f32.mrf.mxu0
      %4155 = vmatprep.mubr.f32.mxu0 0.0
      %4156 = vmatmul.mubr.f32.gmra.mxu0 %v3503
      %v4157 = vpop.f32.mrf.mxu0
      %v4158 = vadd.f32 0.0, %v4157
      %v4159 = vpop.f32.mrf.mxu0
      %4160 = vmatprep.mubr.f32.mxu0 0.0
      %4161 = vmatmul.mubr.f32.gmra.mxu0 %v3506
      %v4162 = vpop.f32.mrf.mxu0
      %v4163 = vadd.f32 0.0, %v4162
      %v4164 = vpop.f32.mrf.mxu0
      %4165 = vmatprep.mubr.f32.mxu0 0.0
      %4166 = vmatmul.mubr.f32.gmra.mxu0 %v3508
      %v4167 = vpop.f32.mrf.mxu0
      %v4168 = vadd.f32 0.0, %v4167
      %v4169 = vpop.f32.mrf.mxu0
      %4170 = vmatprep.mubr.f32.mxu0 0.0
      %4171 = vmatmul.mubr.f32.gmra.mxu0 %v3511
      %v4172 = vpop.f32.mrf.mxu0
      %v4173 = vadd.f32 0.0, %v4172
      %v4174 = vpop.f32.mrf.mxu0
      %4175 = vmatprep.mubr.f32.mxu0 0.0
      %4176 = vmatmul.mubr.f32.gmra.mxu0 %v3513
      %v4177 = vpop.f32.mrf.mxu0
      %v4178 = vadd.f32 0.0, %v4177
      %v4179 = vpop.f32.mrf.mxu0
      %4180 = vmatprep.mubr.f32.mxu0 0.0
      %4181 = vmatmul.mubr.f32.gmra.mxu0 %v3516
      %v4182 = vpop.f32.mrf.mxu0
      %v4183 = vadd.f32 0.0, %v4182
      %v4184 = vpop.f32.mrf.mxu0
      %4185 = vmatprep.mubr.f32.mxu0 0.0
      %4186 = vmatmul.mubr.f32.gmra.mxu0 %v3518
      %v4187 = vpop.f32.mrf.mxu0
      %v4188 = vadd.f32 0.0, %v4187
      %v4189 = vpop.f32.mrf.mxu0
      %4190 = vmatprep.mubr.f32.mxu0 0.0
      %4191 = vmatmul.mubr.f32.gmra.mxu0 %v3521
      %v4192 = vpop.f32.mrf.mxu0
      %v4193 = vadd.f32 0.0, %v4192
      %v4194 = vpop.f32.mrf.mxu0
      %4195 = vmatprep.mubr.f32.mxu0 0.0
      %4196 = vmatmul.mubr.f32.gmra.mxu0 %v3523
      %v4197 = vpop.f32.mrf.mxu0
      %v4198 = vadd.f32 0.0, %v4197
      %v4199 = vpop.f32.mrf.mxu0
      %4200 = vmatprep.mubr.f32.mxu0 0.0
      %4201 = vmatmul.mubr.f32.gmra.mxu0 %v3516
      %v4202 = vpop.f32.mrf.mxu0
      %v4203 = vadd.f32 0.0, %v4202
      %v4204 = vpop.f32.mrf.mxu0
      %4205 = vmatprep.mubr.f32.mxu0 0.0
      %4206 = vmatmul.mubr.f32.gmra.mxu0 %v3518
      %v4207 = vpop.f32.mrf.mxu0
      %v4208 = vadd.f32 0.0, %v4207
      %v4209 = vpop.f32.mrf.mxu0
      %4210 = vdwg.mxu0
      %v4211 = vadd.f32 %v3823, %v4053
      %v4212 = vadd.f32 %v3828, %v4058
      %v4213 = vadd.f32 %v3833, %v4063
      %v4214 = vadd.f32 %v3838, %v4068
      %v4215 = vadd.f32 %v3843, %v4073
      %v4216 = vadd.f32 %v3848, %v4078
      %v4217 = vadd.f32 %v3853, %v4083
      %v4218 = vadd.f32 %v3858, %v4088
      %v4219 = vadd.f32 %v3863, %v4093
      %v4220 = vadd.f32 %v3868, %v4098
      %v4221 = vadd.f32 %v3873, %v4103
      %v4222 = vadd.f32 %v3878, %v4108
      %v4223 = vadd.f32 %v3883, %v4113
      %v4224 = vadd.f32 %v3888, %v4118
      %v4225 = vadd.f32 %v3893, %v4123
      %v4226 = vadd.f32 %v3898, %v4128
      %v4227 = vadd.f32 %v3903, %v4133
      %v4228 = vadd.f32 %v3908, %v4138
      %v4229 = vadd.f32 %v3913, %v4143
      %v4230 = vadd.f32 %v3918, %v4148
      %v4231 = vadd.f32 %v3923, %v4153
      %v4232 = vadd.f32 %v3928, %v4158
      %v4233 = vadd.f32 %v3933, %v4163
      %v4234 = vadd.f32 %v3938, %v4168
      %v4235 = vadd.f32 %v3943, %v4173
      %v4236 = vadd.f32 %v3948, %v4178
      %v4237 = vadd.f32 %v3953, %v4183
      %v4238 = vadd.f32 %v3958, %v4188
      %v4239 = vadd.f32 %v3963, %v4193
      %v4240 = vadd.f32 %v3968, %v4198
      %v4241 = vadd.f32 %v3973, %v4203
      %v4242 = vadd.f32 %v3978, %v4208
      %s4243 = scalar_lea.vmem %s2, 4
      %v4244 = vld [vmem:[%s4243] sm:$0xf]
      %v4245 = vsel %vm432, %v3188, 0
      %v4247 = vsel %vm432, %v3189, 0
      %v4249 = vsel %vm432, %v3186, 0
      %v4251 = vsel %vm432, %v3187, 0
      %v4253 = vsel %vm432, %v3190, 0
      %v4255 = vsel %vm432, %v3191, 0
      %v4257 = vsel %vm432, %v3192, 0
      %v4259 = vsel %vm432, %v3193, 0
      %v4261 = vsel %vm432, %v3194, 0
      %v4263 = vsel %vm432, %v3195, 0
      %v4265 = vsel %vm432, %v3196, 0
      %v4267 = vsel %vm432, %v3197, 0
      %v4269 = vsel %vm432, %v3198, 0
      %v4271 = vsel %vm432, %v3199, 0
      %v4273 = vsel %vm432, %v3200, 0
      %v4275 = vsel %vm432, %v3201, 0
      %v4277 = vsel %vm432, %v3202, 0
      %v4279 = vsel %vm432, %v3203, 0
      %v4281 = vsel %vm432, %v3204, 0
      %v4283 = vsel %vm432, %v3205, 0
      %v4285 = vsel %vm432, %v3206, 0
      %v4287 = vsel %vm432, %v3207, 0
      %v4289 = vsel %vm432, %v3208, 0
      %v4291 = vsel %vm432, %v3209, 0
      %v4293 = vsel %vm432, %v3210, 0
      %v4295 = vsel %vm432, %v3211, 0
      %v4297 = vsel %vm432, %v3212, 0
      %v4299 = vsel %vm432, %v3213, 0
      %v4301 = vsel %vm432, %v3214, 0
      %v4303 = vsel %vm432, %v3215, 0
      %v4306 = vsel %vm513, %v4244, 0
      %4308 = vmatprep.subr.mxu0 0.0
      %4309 = vmatpush1.msra.mxu0 0.0
      %4310 = vmatprep.subr.mxu0 0.0
      %4311 = vmatpush1.msra.mxu0 0.0
      %4312 = vmatprep.subr.mxu0 0.0
      %4313 = vmatpush1.msra.mxu0 0.0
      %4314 = vmatprep.subr.mxu0 0.0
      %4315 = vmatpush1.msra.mxu0 0.0
      %4316 = vmatprep.subr.mxu0 0.0
      %4317 = vmatpush1.msra.mxu0 0.0
      %4318 = vmatprep.subr.mxu0 0.0
      %4319 = vmatpush1.msra.mxu0 0.0
      %4320 = vmatprep.subr.mxu0 0.0
      %4321 = vmatpush1.msra.mxu0 0.0
      %4322 = vmatprep.subr.mxu0 0.0
      %4323 = vmatpush1.msra.mxu0 0.0
      %4324 = vmatprep.subr.mxu0 0.0
      %4325 = vmatpush1.msra.mxu0 0.0
      %4326 = vmatprep.subr.mxu0 0.0
      %4327 = vmatpush1.msra.mxu0 0.0
      %4328 = vmatprep.subr.mxu0 0.0
      %4329 = vmatpush1.msra.mxu0 0.0
      %4330 = vmatprep.subr.mxu0 0.0
      %4331 = vmatpush1.msra.mxu0 0.0
      %4332 = vmatprep.subr.mxu0 0.0
      %4333 = vmatpush1.msra.mxu0 0.0
      %4334 = vmatprep.subr.mxu0 0.0
      %4335 = vmatpush1.msra.mxu0 0.0
      %4336 = vmatprep.subr.mxu0 0.0
      %4337 = vmatpush1.msra.mxu0 0.0
      %4338 = vmatprep.subr.mxu0 0.0
      %4339 = vmatpush1.msra.mxu0 %v4306
      %4340 = vmatprep.subr.mxu0 0.0
      %4341 = vmatpush2.msra.mxu0 0.0
      %4342 = vmatprep.subr.mxu0 0.0
      %4343 = vmatpush2.msra.mxu0 0.0
      %4344 = vmatprep.subr.mxu0 0.0
      %4345 = vmatpush2.msra.mxu0 0.0
      %4346 = vmatprep.subr.mxu0 0.0
      %4347 = vmatpush2.msra.mxu0 0.0
      %4348 = vmatprep.subr.mxu0 0.0
      %4349 = vmatpush2.msra.mxu0 0.0
      %4350 = vmatprep.subr.mxu0 0.0
      %4351 = vmatpush2.msra.mxu0 0.0
      %4352 = vmatprep.subr.mxu0 0.0
      %4353 = vmatpush2.msra.mxu0 0.0
      %4354 = vmatprep.subr.mxu0 0.0
      %4355 = vmatpush2.msra.mxu0 0.0
      %4356 = vmatprep.subr.mxu0 0.0
      %4357 = vmatpush2.msra.mxu0 0.0
      %4358 = vmatprep.subr.mxu0 0.0
      %4359 = vmatpush2.msra.mxu0 0.0
      %4360 = vmatprep.subr.mxu0 0.0
      %4361 = vmatpush2.msra.mxu0 0.0
      %4362 = vmatprep.subr.mxu0 0.0
      %4363 = vmatpush2.msra.mxu0 0.0
      %4364 = vmatprep.subr.mxu0 0.0
      %4365 = vmatpush2.msra.mxu0 0.0
      %4366 = vmatprep.subr.mxu0 0.0
      %4367 = vmatpush2.msra.mxu0 0.0
      %4368 = vmatprep.subr.mxu0 0.0
      %4369 = vmatpush2.msra.mxu0 0.0
      %4370 = vmatprep.subr.mxu0 0.0
      %4371 = vmatpush2.msra.mxu0 0.0
      %4372 = vmatprep.mubr.f32.mxu0 0.0
      %4373 = vmatmul.mubr.f32.gmra.mxu0 %v4245
      %v4374 = vpop.f32.mrf.mxu0
      %v4375 = vadd.f32 0.0, %v4374
      %v4376 = vpop.f32.mrf.mxu0
      %4377 = vmatprep.mubr.f32.mxu0 0.0
      %4378 = vmatmul.mubr.f32.gmra.mxu0 %v4247
      %v4379 = vpop.f32.mrf.mxu0
      %v4380 = vadd.f32 0.0, %v4379
      %v4381 = vpop.f32.mrf.mxu0
      %4382 = vmatprep.mubr.f32.mxu0 0.0
      %4383 = vmatmul.mubr.f32.gmra.mxu0 %v4249
      %v4384 = vpop.f32.mrf.mxu0
      %v4385 = vadd.f32 0.0, %v4384
      %v4386 = vpop.f32.mrf.mxu0
      %4387 = vmatprep.mubr.f32.mxu0 0.0
      %4388 = vmatmul.mubr.f32.gmra.mxu0 %v4251
      %v4389 = vpop.f32.mrf.mxu0
      %v4390 = vadd.f32 0.0, %v4389
      %v4391 = vpop.f32.mrf.mxu0
      %4392 = vmatprep.mubr.f32.mxu0 0.0
      %4393 = vmatmul.mubr.f32.gmra.mxu0 %v4245
      %v4394 = vpop.f32.mrf.mxu0
      %v4395 = vadd.f32 0.0, %v4394
      %v4396 = vpop.f32.mrf.mxu0
      %4397 = vmatprep.mubr.f32.mxu0 0.0
      %4398 = vmatmul.mubr.f32.gmra.mxu0 %v4247
      %v4399 = vpop.f32.mrf.mxu0
      %v4400 = vadd.f32 0.0, %v4399
      %v4401 = vpop.f32.mrf.mxu0
      %4402 = vmatprep.mubr.f32.mxu0 0.0
      %4403 = vmatmul.mubr.f32.gmra.mxu0 %v4253
      %v4404 = vpop.f32.mrf.mxu0
      %v4405 = vadd.f32 0.0, %v4404
      %v4406 = vpop.f32.mrf.mxu0
      %4407 = vmatprep.mubr.f32.mxu0 0.0
      %4408 = vmatmul.mubr.f32.gmra.mxu0 %v4255
      %v4409 = vpop.f32.mrf.mxu0
      %v4410 = vadd.f32 0.0, %v4409
      %v4411 = vpop.f32.mrf.mxu0
      %4412 = vmatprep.mubr.f32.mxu0 0.0
      %4413 = vmatmul.mubr.f32.gmra.mxu0 %v4257
      %v4414 = vpop.f32.mrf.mxu0
      %v4415 = vadd.f32 0.0, %v4414
      %v4416 = vpop.f32.mrf.mxu0
      %4417 = vmatprep.mubr.f32.mxu0 0.0
      %4418 = vmatmul.mubr.f32.gmra.mxu0 %v4259
      %v4419 = vpop.f32.mrf.mxu0
      %v4420 = vadd.f32 0.0, %v4419
      %v4421 = vpop.f32.mrf.mxu0
      %4422 = vmatprep.mubr.f32.mxu0 0.0
      %4423 = vmatmul.mubr.f32.gmra.mxu0 %v4261
      %v4424 = vpop.f32.mrf.mxu0
      %v4425 = vadd.f32 0.0, %v4424
      %v4426 = vpop.f32.mrf.mxu0
      %4427 = vmatprep.mubr.f32.mxu0 0.0
      %4428 = vmatmul.mubr.f32.gmra.mxu0 %v4263
      %v4429 = vpop.f32.mrf.mxu0
      %v4430 = vadd.f32 0.0, %v4429
      %v4431 = vpop.f32.mrf.mxu0
      %4432 = vmatprep.mubr.f32.mxu0 0.0
      %4433 = vmatmul.mubr.f32.gmra.mxu0 %v4265
      %v4434 = vpop.f32.mrf.mxu0
      %v4435 = vadd.f32 0.0, %v4434
      %v4436 = vpop.f32.mrf.mxu0
      %4437 = vmatprep.mubr.f32.mxu0 0.0
      %4438 = vmatmul.mubr.f32.gmra.mxu0 %v4267
      %v4439 = vpop.f32.mrf.mxu0
      %v4440 = vadd.f32 0.0, %v4439
      %v4441 = vpop.f32.mrf.mxu0
      %4442 = vmatprep.mubr.f32.mxu0 0.0
      %4443 = vmatmul.mubr.f32.gmra.mxu0 %v4269
      %v4444 = vpop.f32.mrf.mxu0
      %v4445 = vadd.f32 0.0, %v4444
      %v4446 = vpop.f32.mrf.mxu0
      %4447 = vmatprep.mubr.f32.mxu0 0.0
      %4448 = vmatmul.mubr.f32.gmra.mxu0 %v4271
      %v4449 = vpop.f32.mrf.mxu0
      %v4450 = vadd.f32 0.0, %v4449
      %v4451 = vpop.f32.mrf.mxu0
      %4452 = vmatprep.mubr.f32.mxu0 0.0
      %4453 = vmatmul.mubr.f32.gmra.mxu0 %v4273
      %v4454 = vpop.f32.mrf.mxu0
      %v4455 = vadd.f32 0.0, %v4454
      %v4456 = vpop.f32.mrf.mxu0
      %4457 = vmatprep.mubr.f32.mxu0 0.0
      %4458 = vmatmul.mubr.f32.gmra.mxu0 %v4275
      %v4459 = vpop.f32.mrf.mxu0
      %v4460 = vadd.f32 0.0, %v4459
      %v4461 = vpop.f32.mrf.mxu0
      %4462 = vmatprep.mubr.f32.mxu0 0.0
      %4463 = vmatmul.mubr.f32.gmra.mxu0 %v4277
      %v4464 = vpop.f32.mrf.mxu0
      %v4465 = vadd.f32 0.0, %v4464
      %v4466 = vpop.f32.mrf.mxu0
      %4467 = vmatprep.mubr.f32.mxu0 0.0
      %4468 = vmatmul.mubr.f32.gmra.mxu0 %v4279
      %v4469 = vpop.f32.mrf.mxu0
      %v4470 = vadd.f32 0.0, %v4469
      %v4471 = vpop.f32.mrf.mxu0
      %4472 = vmatprep.mubr.f32.mxu0 0.0
      %4473 = vmatmul.mubr.f32.gmra.mxu0 %v4281
      %v4474 = vpop.f32.mrf.mxu0
      %v4475 = vadd.f32 0.0, %v4474
      %v4476 = vpop.f32.mrf.mxu0
      %4477 = vmatprep.mubr.f32.mxu0 0.0
      %4478 = vmatmul.mubr.f32.gmra.mxu0 %v4283
      %v4479 = vpop.f32.mrf.mxu0
      %v4480 = vadd.f32 0.0, %v4479
      %v4481 = vpop.f32.mrf.mxu0
      %4482 = vmatprep.mubr.f32.mxu0 0.0
      %4483 = vmatmul.mubr.f32.gmra.mxu0 %v4285
      %v4484 = vpop.f32.mrf.mxu0
      %v4485 = vadd.f32 0.0, %v4484
      %v4486 = vpop.f32.mrf.mxu0
      %4487 = vmatprep.mubr.f32.mxu0 0.0
      %4488 = vmatmul.mubr.f32.gmra.mxu0 %v4287
      %v4489 = vpop.f32.mrf.mxu0
      %v4490 = vadd.f32 0.0, %v4489
      %v4491 = vpop.f32.mrf.mxu0
      %4492 = vmatprep.mubr.f32.mxu0 0.0
      %4493 = vmatmul.mubr.f32.gmra.mxu0 %v4289
      %v4494 = vpop.f32.mrf.mxu0
      %v4495 = vadd.f32 0.0, %v4494
      %v4496 = vpop.f32.mrf.mxu0
      %4497 = vmatprep.mubr.f32.mxu0 0.0
      %4498 = vmatmul.mubr.f32.gmra.mxu0 %v4291
      %v4499 = vpop.f32.mrf.mxu0
      %v4500 = vadd.f32 0.0, %v4499
      %v4501 = vpop.f32.mrf.mxu0
      %4502 = vmatprep.mubr.f32.mxu0 0.0
      %4503 = vmatmul.mubr.f32.gmra.mxu0 %v4293
      %v4504 = vpop.f32.mrf.mxu0
      %v4505 = vadd.f32 0.0, %v4504
      %v4506 = vpop.f32.mrf.mxu0
      %4507 = vmatprep.mubr.f32.mxu0 0.0
      %4508 = vmatmul.mubr.f32.gmra.mxu0 %v4295
      %v4509 = vpop.f32.mrf.mxu0
      %v4510 = vadd.f32 0.0, %v4509
      %v4511 = vpop.f32.mrf.mxu0
      %4512 = vmatprep.mubr.f32.mxu0 0.0
      %4513 = vmatmul.mubr.f32.gmra.mxu0 %v4297
      %v4514 = vpop.f32.mrf.mxu0
      %v4515 = vadd.f32 0.0, %v4514
      %v4516 = vpop.f32.mrf.mxu0
      %4517 = vmatprep.mubr.f32.mxu0 0.0
      %4518 = vmatmul.mubr.f32.gmra.mxu0 %v4299
      %v4519 = vpop.f32.mrf.mxu0
      %v4520 = vadd.f32 0.0, %v4519
      %v4521 = vpop.f32.mrf.mxu0
      %4522 = vmatprep.mubr.f32.mxu0 0.0
      %4523 = vmatmul.mubr.f32.gmra.mxu0 %v4301
      %v4524 = vpop.f32.mrf.mxu0
      %v4525 = vadd.f32 0.0, %v4524
      %v4526 = vpop.f32.mrf.mxu0
      %4527 = vmatprep.mubr.f32.mxu0 0.0
      %4528 = vmatmul.mubr.f32.gmra.mxu0 %v4303
      %v4529 = vpop.f32.mrf.mxu0
      %v4530 = vadd.f32 0.0, %v4529
      %v4531 = vpop.f32.mrf.mxu0
      %4532 = vdwg.mxu0
      %v4533 = vadd.f32 %v4211, %v4375
      %v4534 = vadd.f32 %v4212, %v4380
      %v4535 = vadd.f32 %v4213, %v4385
      %v4536 = vadd.f32 %v4214, %v4390
      %v4537 = vadd.f32 %v4215, %v4395
      %v4538 = vadd.f32 %v4216, %v4400
      %v4539 = vadd.f32 %v4217, %v4405
      %v4540 = vadd.f32 %v4218, %v4410
      %v4541 = vadd.f32 %v4219, %v4415
      %v4542 = vadd.f32 %v4220, %v4420
      %v4543 = vadd.f32 %v4221, %v4425
      %v4544 = vadd.f32 %v4222, %v4430
      %v4545 = vadd.f32 %v4223, %v4435
      %v4546 = vadd.f32 %v4224, %v4440
      %v4547 = vadd.f32 %v4225, %v4445
      %v4548 = vadd.f32 %v4226, %v4450
      %v4549 = vadd.f32 %v4227, %v4455
      %v4550 = vadd.f32 %v4228, %v4460
      %v4551 = vadd.f32 %v4229, %v4465
      %v4552 = vadd.f32 %v4230, %v4470
      %v4553 = vadd.f32 %v4231, %v4475
      %v4554 = vadd.f32 %v4232, %v4480
      %v4555 = vadd.f32 %v4233, %v4485
      %v4556 = vadd.f32 %v4234, %v4490
      %v4557 = vadd.f32 %v4235, %v4495
      %v4558 = vadd.f32 %v4236, %v4500
      %v4559 = vadd.f32 %v4237, %v4505
      %v4560 = vadd.f32 %v4238, %v4510
      %v4561 = vadd.f32 %v4239, %v4515
      %v4562 = vadd.f32 %v4240, %v4520
      %v4563 = vadd.f32 %v4241, %v4525
      %v4564 = vadd.f32 %v4242, %v4530
      %s4565 = scalar_lea.vmem %s2, 16
      %v4566 = vld [vmem:[%s4565] sm:$0xf]
      %v4567 = vsel %vm432, %v3216, 0
      %v4569 = vsel %vm432, %v3217, 0
      %v4572 = vsel %vm513, %v4566, 0
      %4574 = vmatprep.subr.mxu0 0.0
      %4575 = vmatpush1.msra.mxu0 0.0
      %4576 = vmatprep.subr.mxu0 0.0
      %4577 = vmatpush1.msra.mxu0 0.0
      %4578 = vmatprep.subr.mxu0 0.0
      %4579 = vmatpush1.msra.mxu0 0.0
      %4580 = vmatprep.subr.mxu0 0.0
      %4581 = vmatpush1.msra.mxu0 0.0
      %4582 = vmatprep.subr.mxu0 0.0
      %4583 = vmatpush1.msra.mxu0 0.0
      %4584 = vmatprep.subr.mxu0 0.0
      %4585 = vmatpush1.msra.mxu0 0.0
      %4586 = vmatprep.subr.mxu0 0.0
      %4587 = vmatpush1.msra.mxu0 0.0
      %4588 = vmatprep.subr.mxu0 0.0
      %4589 = vmatpush1.msra.mxu0 0.0
      %4590 = vmatprep.subr.mxu0 0.0
      %4591 = vmatpush1.msra.mxu0 0.0
      %4592 = vmatprep.subr.mxu0 0.0
      %4593 = vmatpush1.msra.mxu0 0.0
      %4594 = vmatprep.subr.mxu0 0.0
      %4595 = vmatpush1.msra.mxu0 0.0
      %4596 = vmatprep.subr.mxu0 0.0
      %4597 = vmatpush1.msra.mxu0 0.0
      %4598 = vmatprep.subr.mxu0 0.0
      %4599 = vmatpush1.msra.mxu0 0.0
      %4600 = vmatprep.subr.mxu0 0.0
      %4601 = vmatpush1.msra.mxu0 0.0
      %4602 = vmatprep.subr.mxu0 0.0
      %4603 = vmatpush1.msra.mxu0 0.0
      %4604 = vmatprep.subr.mxu0 0.0
      %4605 = vmatpush1.msra.mxu0 %v4572
      %4606 = vmatprep.subr.mxu0 0.0
      %4607 = vmatpush2.msra.mxu0 0.0
      %4608 = vmatprep.subr.mxu0 0.0
      %4609 = vmatpush2.msra.mxu0 0.0
      %4610 = vmatprep.subr.mxu0 0.0
      %4611 = vmatpush2.msra.mxu0 0.0
      %4612 = vmatprep.subr.mxu0 0.0
      %4613 = vmatpush2.msra.mxu0 0.0
      %4614 = vmatprep.subr.mxu0 0.0
      %4615 = vmatpush2.msra.mxu0 0.0
      %4616 = vmatprep.subr.mxu0 0.0
      %4617 = vmatpush2.msra.mxu0 0.0
      %4618 = vmatprep.subr.mxu0 0.0
      %4619 = vmatpush2.msra.mxu0 0.0
      %4620 = vmatprep.subr.mxu0 0.0
      %4621 = vmatpush2.msra.mxu0 0.0
      %4622 = vmatprep.subr.mxu0 0.0
      %4623 = vmatpush2.msra.mxu0 0.0
      %4624 = vmatprep.subr.mxu0 0.0
      %4625 = vmatpush2.msra.mxu0 0.0
      %4626 = vmatprep.subr.mxu0 0.0
      %4627 = vmatpush2.msra.mxu0 0.0
      %4628 = vmatprep.subr.mxu0 0.0
      %4629 = vmatpush2.msra.mxu0 0.0
      %4630 = vmatprep.subr.mxu0 0.0
      %4631 = vmatpush2.msra.mxu0 0.0
      %4632 = vmatprep.subr.mxu0 0.0
      %4633 = vmatpush2.msra.mxu0 0.0
      %4634 = vmatprep.subr.mxu0 0.0
      %4635 = vmatpush2.msra.mxu0 0.0
      %4636 = vmatprep.subr.mxu0 0.0
      %4637 = vmatpush2.msra.mxu0 0.0
      %4638 = vmatprep.mubr.f32.mxu0 0.0
      %4639 = vmatmul.mubr.f32.gmra.mxu0 %v4249
      %v4640 = vpop.f32.mrf.mxu0
      %v4641 = vadd.f32 0.0, %v4640
      %v4642 = vpop.f32.mrf.mxu0
      %4643 = vmatprep.mubr.f32.mxu0 0.0
      %4644 = vmatmul.mubr.f32.gmra.mxu0 %v4251
      %v4645 = vpop.f32.mrf.mxu0
      %v4646 = vadd.f32 0.0, %v4645
      %v4647 = vpop.f32.mrf.mxu0
      %4648 = vmatprep.mubr.f32.mxu0 0.0
      %4649 = vmatmul.mubr.f32.gmra.mxu0 %v4245
      %v4650 = vpop.f32.mrf.mxu0
      %v4651 = vadd.f32 0.0, %v4650
      %v4652 = vpop.f32.mrf.mxu0
      %4653 = vmatprep.mubr.f32.mxu0 0.0
      %4654 = vmatmul.mubr.f32.gmra.mxu0 %v4247
      %v4655 = vpop.f32.mrf.mxu0
      %v4656 = vadd.f32 0.0, %v4655
      %v4657 = vpop.f32.mrf.mxu0
      %4658 = vmatprep.mubr.f32.mxu0 0.0
      %4659 = vmatmul.mubr.f32.gmra.mxu0 %v4253
      %v4660 = vpop.f32.mrf.mxu0
      %v4661 = vadd.f32 0.0, %v4660
      %v4662 = vpop.f32.mrf.mxu0
      %4663 = vmatprep.mubr.f32.mxu0 0.0
      %4664 = vmatmul.mubr.f32.gmra.mxu0 %v4255
      %v4665 = vpop.f32.mrf.mxu0
      %v4666 = vadd.f32 0.0, %v4665
      %v4667 = vpop.f32.mrf.mxu0
      %4668 = vmatprep.mubr.f32.mxu0 0.0
      %4669 = vmatmul.mubr.f32.gmra.mxu0 %v4257
      %v4670 = vpop.f32.mrf.mxu0
      %v4671 = vadd.f32 0.0, %v4670
      %v4672 = vpop.f32.mrf.mxu0
      %4673 = vmatprep.mubr.f32.mxu0 0.0
      %4674 = vmatmul.mubr.f32.gmra.mxu0 %v4259
      %v4675 = vpop.f32.mrf.mxu0
      %v4676 = vadd.f32 0.0, %v4675
      %v4677 = vpop.f32.mrf.mxu0
      %4678 = vmatprep.mubr.f32.mxu0 0.0
      %4679 = vmatmul.mubr.f32.gmra.mxu0 %v4261
      %v4680 = vpop.f32.mrf.mxu0
      %v4681 = vadd.f32 0.0, %v4680
      %v4682 = vpop.f32.mrf.mxu0
      %4683 = vmatprep.mubr.f32.mxu0 0.0
      %4684 = vmatmul.mubr.f32.gmra.mxu0 %v4263
      %v4685 = vpop.f32.mrf.mxu0
      %v4686 = vadd.f32 0.0, %v4685
      %v4687 = vpop.f32.mrf.mxu0
      %4688 = vmatprep.mubr.f32.mxu0 0.0
      %4689 = vmatmul.mubr.f32.gmra.mxu0 %v4265
      %v4690 = vpop.f32.mrf.mxu0
      %v4691 = vadd.f32 0.0, %v4690
      %v4692 = vpop.f32.mrf.mxu0
      %4693 = vmatprep.mubr.f32.mxu0 0.0
      %4694 = vmatmul.mubr.f32.gmra.mxu0 %v4267
      %v4695 = vpop.f32.mrf.mxu0
      %v4696 = vadd.f32 0.0, %v4695
      %v4697 = vpop.f32.mrf.mxu0
      %4698 = vmatprep.mubr.f32.mxu0 0.0
      %4699 = vmatmul.mubr.f32.gmra.mxu0 %v4269
      %v4700 = vpop.f32.mrf.mxu0
      %v4701 = vadd.f32 0.0, %v4700
      %v4702 = vpop.f32.mrf.mxu0
      %4703 = vmatprep.mubr.f32.mxu0 0.0
      %4704 = vmatmul.mubr.f32.gmra.mxu0 %v4271
      %v4705 = vpop.f32.mrf.mxu0
      %v4706 = vadd.f32 0.0, %v4705
      %v4707 = vpop.f32.mrf.mxu0
      %4708 = vmatprep.mubr.f32.mxu0 0.0
      %4709 = vmatmul.mubr.f32.gmra.mxu0 %v4273
      %v4710 = vpop.f32.mrf.mxu0
      %v4711 = vadd.f32 0.0, %v4710
      %v4712 = vpop.f32.mrf.mxu0
      %4713 = vmatprep.mubr.f32.mxu0 0.0
      %4714 = vmatmul.mubr.f32.gmra.mxu0 %v4275
      %v4715 = vpop.f32.mrf.mxu0
      %v4716 = vadd.f32 0.0, %v4715
      %v4717 = vpop.f32.mrf.mxu0
      %4718 = vmatprep.mubr.f32.mxu0 0.0
      %4719 = vmatmul.mubr.f32.gmra.mxu0 %v4277
      %v4720 = vpop.f32.mrf.mxu0
      %v4721 = vadd.f32 0.0, %v4720
      %v4722 = vpop.f32.mrf.mxu0
      %4723 = vmatprep.mubr.f32.mxu0 0.0
      %4724 = vmatmul.mubr.f32.gmra.mxu0 %v4279
      %v4725 = vpop.f32.mrf.mxu0
      %v4726 = vadd.f32 0.0, %v4725
      %v4727 = vpop.f32.mrf.mxu0
      %4728 = vmatprep.mubr.f32.mxu0 0.0
      %4729 = vmatmul.mubr.f32.gmra.mxu0 %v4281
      %v4730 = vpop.f32.mrf.mxu0
      %v4731 = vadd.f32 0.0, %v4730
      %v4732 = vpop.f32.mrf.mxu0
      %4733 = vmatprep.mubr.f32.mxu0 0.0
      %4734 = vmatmul.mubr.f32.gmra.mxu0 %v4283
      %v4735 = vpop.f32.mrf.mxu0
      %v4736 = vadd.f32 0.0, %v4735
      %v4737 = vpop.f32.mrf.mxu0
      %4738 = vmatprep.mubr.f32.mxu0 0.0
      %4739 = vmatmul.mubr.f32.gmra.mxu0 %v4285
      %v4740 = vpop.f32.mrf.mxu0
      %v4741 = vadd.f32 0.0, %v4740
      %v4742 = vpop.f32.mrf.mxu0
      %4743 = vmatprep.mubr.f32.mxu0 0.0
      %4744 = vmatmul.mubr.f32.gmra.mxu0 %v4287
      %v4745 = vpop.f32.mrf.mxu0
      %v4746 = vadd.f32 0.0, %v4745
      %v4747 = vpop.f32.mrf.mxu0
      %4748 = vmatprep.mubr.f32.mxu0 0.0
      %4749 = vmatmul.mubr.f32.gmra.mxu0 %v4289
      %v4750 = vpop.f32.mrf.mxu0
      %v4751 = vadd.f32 0.0, %v4750
      %v4752 = vpop.f32.mrf.mxu0
      %4753 = vmatprep.mubr.f32.mxu0 0.0
      %4754 = vmatmul.mubr.f32.gmra.mxu0 %v4291
      %v4755 = vpop.f32.mrf.mxu0
      %v4756 = vadd.f32 0.0, %v4755
      %v4757 = vpop.f32.mrf.mxu0
      %4758 = vmatprep.mubr.f32.mxu0 0.0
      %4759 = vmatmul.mubr.f32.gmra.mxu0 %v4293
      %v4760 = vpop.f32.mrf.mxu0
      %v4761 = vadd.f32 0.0, %v4760
      %v4762 = vpop.f32.mrf.mxu0
      %4763 = vmatprep.mubr.f32.mxu0 0.0
      %4764 = vmatmul.mubr.f32.gmra.mxu0 %v4295
      %v4765 = vpop.f32.mrf.mxu0
      %v4766 = vadd.f32 0.0, %v4765
      %v4767 = vpop.f32.mrf.mxu0
      %4768 = vmatprep.mubr.f32.mxu0 0.0
      %4769 = vmatmul.mubr.f32.gmra.mxu0 %v4297
      %v4770 = vpop.f32.mrf.mxu0
      %v4771 = vadd.f32 0.0, %v4770
      %v4772 = vpop.f32.mrf.mxu0
      %4773 = vmatprep.mubr.f32.mxu0 0.0
      %4774 = vmatmul.mubr.f32.gmra.mxu0 %v4299
      %v4775 = vpop.f32.mrf.mxu0
      %v4776 = vadd.f32 0.0, %v4775
      %v4777 = vpop.f32.mrf.mxu0
      %4778 = vmatprep.mubr.f32.mxu0 0.0
      %4779 = vmatmul.mubr.f32.gmra.mxu0 %v4301
      %v4780 = vpop.f32.mrf.mxu0
      %v4781 = vadd.f32 0.0, %v4780
      %v4782 = vpop.f32.mrf.mxu0
      %4783 = vmatprep.mubr.f32.mxu0 0.0
      %4784 = vmatmul.mubr.f32.gmra.mxu0 %v4303
      %v4785 = vpop.f32.mrf.mxu0
      %v4786 = vadd.f32 0.0, %v4785
      %v4787 = vpop.f32.mrf.mxu0
      %4788 = vmatprep.mubr.f32.mxu0 0.0
      %4789 = vmatmul.mubr.f32.gmra.mxu0 %v4567
      %v4790 = vpop.f32.mrf.mxu0
      %v4791 = vadd.f32 0.0, %v4790
      %v4792 = vpop.f32.mrf.mxu0
      %4793 = vmatprep.mubr.f32.mxu0 0.0
      %4794 = vmatmul.mubr.f32.gmra.mxu0 %v4569
      %v4795 = vpop.f32.mrf.mxu0
      %v4796 = vadd.f32 0.0, %v4795
      %v4797 = vpop.f32.mrf.mxu0
      %4798 = vdwg.mxu0
      %v4799 = vadd.f32 %v4533, %v4641
      %v4800 = vadd.f32 %v4534, %v4646
      %v4801 = vadd.f32 %v4535, %v4651
      %v4802 = vadd.f32 %v4536, %v4656
      %v4803 = vadd.f32 %v4537, %v4661
      %v4804 = vadd.f32 %v4538, %v4666
      %v4805 = vadd.f32 %v4539, %v4671
      %v4806 = vadd.f32 %v4540, %v4676
      %v4807 = vadd.f32 %v4541, %v4681
      %v4808 = vadd.f32 %v4542, %v4686
      %v4809 = vadd.f32 %v4543, %v4691
      %v4810 = vadd.f32 %v4544, %v4696
      %v4811 = vadd.f32 %v4545, %v4701
      %v4812 = vadd.f32 %v4546, %v4706
      %v4813 = vadd.f32 %v4547, %v4711
      %v4814 = vadd.f32 %v4548, %v4716
      %v4815 = vadd.f32 %v4549, %v4721
      %v4816 = vadd.f32 %v4550, %v4726
      %v4817 = vadd.f32 %v4551, %v4731
      %v4818 = vadd.f32 %v4552, %v4736
      %v4819 = vadd.f32 %v4553, %v4741
      %v4820 = vadd.f32 %v4554, %v4746
      %v4821 = vadd.f32 %v4555, %v4751
      %v4822 = vadd.f32 %v4556, %v4756
      %v4823 = vadd.f32 %v4557, %v4761
      %v4824 = vadd.f32 %v4558, %v4766
      %v4825 = vadd.f32 %v4559, %v4771
      %v4826 = vadd.f32 %v4560, %v4776
      %v4827 = vadd.f32 %v4561, %v4781
      %v4828 = vadd.f32 %v4562, %v4786
      %v4829 = vadd.f32 %v4563, %v4791
      %v4830 = vadd.f32 %v4564, %v4796
      %s4831 = scalar_lea.vmem %s2, 28
      %v4832 = vld [vmem:[%s4831] sm:$0xf]
      %v4834 = vsel %vm513, %v4832, 0
      %4836 = vmatprep.subr.mxu0 0.0
      %4837 = vmatpush1.msra.mxu0 0.0
      %4838 = vmatprep.subr.mxu0 0.0
      %4839 = vmatpush1.msra.mxu0 0.0
      %4840 = vmatprep.subr.mxu0 0.0
      %4841 = vmatpush1.msra.mxu0 0.0
      %4842 = vmatprep.subr.mxu0 0.0
      %4843 = vmatpush1.msra.mxu0 0.0
      %4844 = vmatprep.subr.mxu0 0.0
      %4845 = vmatpush1.msra.mxu0 0.0
      %4846 = vmatprep.subr.mxu0 0.0
      %4847 = vmatpush1.msra.mxu0 0.0
      %4848 = vmatprep.subr.mxu0 0.0
      %4849 = vmatpush1.msra.mxu0 0.0
      %4850 = vmatprep.subr.mxu0 0.0
      %4851 = vmatpush1.msra.mxu0 0.0
      %4852 = vmatprep.subr.mxu0 0.0
      %4853 = vmatpush1.msra.mxu0 0.0
      %4854 = vmatprep.subr.mxu0 0.0
      %4855 = vmatpush1.msra.mxu0 0.0
      %4856 = vmatprep.subr.mxu0 0.0
      %4857 = vmatpush1.msra.mxu0 0.0
      %4858 = vmatprep.subr.mxu0 0.0
      %4859 = vmatpush1.msra.mxu0 0.0
      %4860 = vmatprep.subr.mxu0 0.0
      %4861 = vmatpush1.msra.mxu0 0.0
      %4862 = vmatprep.subr.mxu0 0.0
      %4863 = vmatpush1.msra.mxu0 0.0
      %4864 = vmatprep.subr.mxu0 0.0
      %4865 = vmatpush1.msra.mxu0 0.0
      %4866 = vmatprep.subr.mxu0 0.0
      %4867 = vmatpush1.msra.mxu0 %v4834
      %4868 = vmatprep.subr.mxu0 0.0
      %4869 = vmatpush2.msra.mxu0 0.0
      %4870 = vmatprep.subr.mxu0 0.0
      %4871 = vmatpush2.msra.mxu0 0.0
      %4872 = vmatprep.subr.mxu0 0.0
      %4873 = vmatpush2.msra.mxu0 0.0
      %4874 = vmatprep.subr.mxu0 0.0
      %4875 = vmatpush2.msra.mxu0 0.0
      %4876 = vmatprep.subr.mxu0 0.0
      %4877 = vmatpush2.msra.mxu0 0.0
      %4878 = vmatprep.subr.mxu0 0.0
      %4879 = vmatpush2.msra.mxu0 0.0
      %4880 = vmatprep.subr.mxu0 0.0
      %4881 = vmatpush2.msra.mxu0 0.0
      %4882 = vmatprep.subr.mxu0 0.0
      %4883 = vmatpush2.msra.mxu0 0.0
      %4884 = vmatprep.subr.mxu0 0.0
      %4885 = vmatpush2.msra.mxu0 0.0
      %4886 = vmatprep.subr.mxu0 0.0
      %4887 = vmatpush2.msra.mxu0 0.0
      %4888 = vmatprep.subr.mxu0 0.0
      %4889 = vmatpush2.msra.mxu0 0.0
      %4890 = vmatprep.subr.mxu0 0.0
      %4891 = vmatpush2.msra.mxu0 0.0
      %4892 = vmatprep.subr.mxu0 0.0
      %4893 = vmatpush2.msra.mxu0 0.0
      %4894 = vmatprep.subr.mxu0 0.0
      %4895 = vmatpush2.msra.mxu0 0.0
      %4896 = vmatprep.subr.mxu0 0.0
      %4897 = vmatpush2.msra.mxu0 0.0
      %4898 = vmatprep.subr.mxu0 0.0
      %4899 = vmatpush2.msra.mxu0 0.0
      %4900 = vmatprep.mubr.f32.mxu0 0.0
      %4901 = vmatmul.mubr.f32.gmra.mxu0 %v4245
      %v4902 = vpop.f32.mrf.mxu0
      %v4903 = vadd.f32 0.0, %v4902
      %v4904 = vpop.f32.mrf.mxu0
      %4905 = vmatprep.mubr.f32.mxu0 0.0
      %4906 = vmatmul.mubr.f32.gmra.mxu0 %v4247
      %v4907 = vpop.f32.mrf.mxu0
      %v4908 = vadd.f32 0.0, %v4907
      %v4909 = vpop.f32.mrf.mxu0
      %4910 = vmatprep.mubr.f32.mxu0 0.0
      %4911 = vmatmul.mubr.f32.gmra.mxu0 %v4253
      %v4912 = vpop.f32.mrf.mxu0
      %v4913 = vadd.f32 0.0, %v4912
      %v4914 = vpop.f32.mrf.mxu0
      %4915 = vmatprep.mubr.f32.mxu0 0.0
      %4916 = vmatmul.mubr.f32.gmra.mxu0 %v4255
      %v4917 = vpop.f32.mrf.mxu0
      %v4918 = vadd.f32 0.0, %v4917
      %v4919 = vpop.f32.mrf.mxu0
      %4920 = vmatprep.mubr.f32.mxu0 0.0
      %4921 = vmatmul.mubr.f32.gmra.mxu0 %v4257
      %v4922 = vpop.f32.mrf.mxu0
      %v4923 = vadd.f32 0.0, %v4922
      %v4924 = vpop.f32.mrf.mxu0
      %4925 = vmatprep.mubr.f32.mxu0 0.0
      %4926 = vmatmul.mubr.f32.gmra.mxu0 %v4259
      %v4927 = vpop.f32.mrf.mxu0
      %v4928 = vadd.f32 0.0, %v4927
      %v4929 = vpop.f32.mrf.mxu0
      %4930 = vmatprep.mubr.f32.mxu0 0.0
      %4931 = vmatmul.mubr.f32.gmra.mxu0 %v4261
      %v4932 = vpop.f32.mrf.mxu0
      %v4933 = vadd.f32 0.0, %v4932
      %v4934 = vpop.f32.mrf.mxu0
      %4935 = vmatprep.mubr.f32.mxu0 0.0
      %4936 = vmatmul.mubr.f32.gmra.mxu0 %v4263
      %v4937 = vpop.f32.mrf.mxu0
      %v4938 = vadd.f32 0.0, %v4937
      %v4939 = vpop.f32.mrf.mxu0
      %4940 = vmatprep.mubr.f32.mxu0 0.0
      %4941 = vmatmul.mubr.f32.gmra.mxu0 %v4265
      %v4942 = vpop.f32.mrf.mxu0
      %v4943 = vadd.f32 0.0, %v4942
      %v4944 = vpop.f32.mrf.mxu0
      %4945 = vmatprep.mubr.f32.mxu0 0.0
      %4946 = vmatmul.mubr.f32.gmra.mxu0 %v4267
      %v4947 = vpop.f32.mrf.mxu0
      %v4948 = vadd.f32 0.0, %v4947
      %v4949 = vpop.f32.mrf.mxu0
      %4950 = vmatprep.mubr.f32.mxu0 0.0
      %4951 = vmatmul.mubr.f32.gmra.mxu0 %v4269
      %v4952 = vpop.f32.mrf.mxu0
      %v4953 = vadd.f32 0.0, %v4952
      %v4954 = vpop.f32.mrf.mxu0
      %4955 = vmatprep.mubr.f32.mxu0 0.0
      %4956 = vmatmul.mubr.f32.gmra.mxu0 %v4271
      %v4957 = vpop.f32.mrf.mxu0
      %v4958 = vadd.f32 0.0, %v4957
      %v4959 = vpop.f32.mrf.mxu0
      %4960 = vmatprep.mubr.f32.mxu0 0.0
      %4961 = vmatmul.mubr.f32.gmra.mxu0 %v4273
      %v4962 = vpop.f32.mrf.mxu0
      %v4963 = vadd.f32 0.0, %v4962
      %v4964 = vpop.f32.mrf.mxu0
      %4965 = vmatprep.mubr.f32.mxu0 0.0
      %4966 = vmatmul.mubr.f32.gmra.mxu0 %v4275
      %v4967 = vpop.f32.mrf.mxu0
      %v4968 = vadd.f32 0.0, %v4967
      %v4969 = vpop.f32.mrf.mxu0
      %4970 = vmatprep.mubr.f32.mxu0 0.0
      %4971 = vmatmul.mubr.f32.gmra.mxu0 %v4277
      %v4972 = vpop.f32.mrf.mxu0
      %v4973 = vadd.f32 0.0, %v4972
      %v4974 = vpop.f32.mrf.mxu0
      %4975 = vmatprep.mubr.f32.mxu0 0.0
      %4976 = vmatmul.mubr.f32.gmra.mxu0 %v4279
      %v4977 = vpop.f32.mrf.mxu0
      %v4978 = vadd.f32 0.0, %v4977
      %v4979 = vpop.f32.mrf.mxu0
      %4980 = vmatprep.mubr.f32.mxu0 0.0
      %4981 = vmatmul.mubr.f32.gmra.mxu0 %v4281
      %v4982 = vpop.f32.mrf.mxu0
      %v4983 = vadd.f32 0.0, %v4982
      %v4984 = vpop.f32.mrf.mxu0
      %4985 = vmatprep.mubr.f32.mxu0 0.0
      %4986 = vmatmul.mubr.f32.gmra.mxu0 %v4283
      %v4987 = vpop.f32.mrf.mxu0
      %v4988 = vadd.f32 0.0, %v4987
      %v4989 = vpop.f32.mrf.mxu0
      %4990 = vmatprep.mubr.f32.mxu0 0.0
      %4991 = vmatmul.mubr.f32.gmra.mxu0 %v4285
      %v4992 = vpop.f32.mrf.mxu0
      %v4993 = vadd.f32 0.0, %v4992
      %v4994 = vpop.f32.mrf.mxu0
      %4995 = vmatprep.mubr.f32.mxu0 0.0
      %4996 = vmatmul.mubr.f32.gmra.mxu0 %v4287
      %v4997 = vpop.f32.mrf.mxu0
      %v4998 = vadd.f32 0.0, %v4997
      %v4999 = vpop.f32.mrf.mxu0
      %5000 = vmatprep.mubr.f32.mxu0 0.0
      %5001 = vmatmul.mubr.f32.gmra.mxu0 %v4289
      %v5002 = vpop.f32.mrf.mxu0
      %v5003 = vadd.f32 0.0, %v5002
      %v5004 = vpop.f32.mrf.mxu0
      %5005 = vmatprep.mubr.f32.mxu0 0.0
      %5006 = vmatmul.mubr.f32.gmra.mxu0 %v4291
      %v5007 = vpop.f32.mrf.mxu0
      %v5008 = vadd.f32 0.0, %v5007
      %v5009 = vpop.f32.mrf.mxu0
      %5010 = vmatprep.mubr.f32.mxu0 0.0
      %5011 = vmatmul.mubr.f32.gmra.mxu0 %v4293
      %v5012 = vpop.f32.mrf.mxu0
      %v5013 = vadd.f32 0.0, %v5012
      %v5014 = vpop.f32.mrf.mxu0
      %5015 = vmatprep.mubr.f32.mxu0 0.0
      %5016 = vmatmul.mubr.f32.gmra.mxu0 %v4295
      %v5017 = vpop.f32.mrf.mxu0
      %v5018 = vadd.f32 0.0, %v5017
      %v5019 = vpop.f32.mrf.mxu0
      %5020 = vmatprep.mubr.f32.mxu0 0.0
      %5021 = vmatmul.mubr.f32.gmra.mxu0 %v4297
      %v5022 = vpop.f32.mrf.mxu0
      %v5023 = vadd.f32 0.0, %v5022
      %v5024 = vpop.f32.mrf.mxu0
      %5025 = vmatprep.mubr.f32.mxu0 0.0
      %5026 = vmatmul.mubr.f32.gmra.mxu0 %v4299
      %v5027 = vpop.f32.mrf.mxu0
      %v5028 = vadd.f32 0.0, %v5027
      %v5029 = vpop.f32.mrf.mxu0
      %5030 = vmatprep.mubr.f32.mxu0 0.0
      %5031 = vmatmul.mubr.f32.gmra.mxu0 %v4301
      %v5032 = vpop.f32.mrf.mxu0
      %v5033 = vadd.f32 0.0, %v5032
      %v5034 = vpop.f32.mrf.mxu0
      %5035 = vmatprep.mubr.f32.mxu0 0.0
      %5036 = vmatmul.mubr.f32.gmra.mxu0 %v4303
      %v5037 = vpop.f32.mrf.mxu0
      %v5038 = vadd.f32 0.0, %v5037
      %v5039 = vpop.f32.mrf.mxu0
      %5040 = vmatprep.mubr.f32.mxu0 0.0
      %5041 = vmatmul.mubr.f32.gmra.mxu0 %v4567
      %v5042 = vpop.f32.mrf.mxu0
      %v5043 = vadd.f32 0.0, %v5042
      %v5044 = vpop.f32.mrf.mxu0
      %5045 = vmatprep.mubr.f32.mxu0 0.0
      %5046 = vmatmul.mubr.f32.gmra.mxu0 %v4569
      %v5047 = vpop.f32.mrf.mxu0
      %v5048 = vadd.f32 0.0, %v5047
      %v5049 = vpop.f32.mrf.mxu0
      %5050 = vmatprep.mubr.f32.mxu0 0.0
      %5051 = vmatmul.mubr.f32.gmra.mxu0 %v4301
      %v5052 = vpop.f32.mrf.mxu0
      %v5053 = vadd.f32 0.0, %v5052
      %v5054 = vpop.f32.mrf.mxu0
      %5055 = vmatprep.mubr.f32.mxu0 0.0
      %5056 = vmatmul.mubr.f32.gmra.mxu0 %v4303
      %v5057 = vpop.f32.mrf.mxu0
      %v5058 = vadd.f32 0.0, %v5057
      %v5059 = vpop.f32.mrf.mxu0
      %5060 = vdwg.mxu0
      %v5061 = vadd.f32 %v4799, %v4903
      %v5062 = vadd.f32 %v4800, %v4908
      %v5063 = vadd.f32 %v4801, %v4913
      %v5064 = vadd.f32 %v4802, %v4918
      %v5065 = vadd.f32 %v4803, %v4923
      %v5066 = vadd.f32 %v4804, %v4928
      %v5067 = vadd.f32 %v4805, %v4933
      %v5068 = vadd.f32 %v4806, %v4938
      %v5069 = vadd.f32 %v4807, %v4943
      %v5070 = vadd.f32 %v4808, %v4948
      %v5071 = vadd.f32 %v4809, %v4953
      %v5072 = vadd.f32 %v4810, %v4958
      %v5073 = vadd.f32 %v4811, %v4963
      %v5074 = vadd.f32 %v4812, %v4968
      %v5075 = vadd.f32 %v4813, %v4973
      %v5076 = vadd.f32 %v4814, %v4978
      %v5077 = vadd.f32 %v4815, %v4983
      %v5078 = vadd.f32 %v4816, %v4988
      %v5079 = vadd.f32 %v4817, %v4993
      %v5080 = vadd.f32 %v4818, %v4998
      %v5081 = vadd.f32 %v4819, %v5003
      %v5082 = vadd.f32 %v4820, %v5008
      %v5083 = vadd.f32 %v4821, %v5013
      %v5084 = vadd.f32 %v4822, %v5018
      %v5085 = vadd.f32 %v4823, %v5023
      %v5086 = vadd.f32 %v4824, %v5028
      %v5087 = vadd.f32 %v4825, %v5033
      %v5088 = vadd.f32 %v4826, %v5038
      %v5089 = vadd.f32 %v4827, %v5043
      %v5090 = vadd.f32 %v4828, %v5048
      %v5091 = vadd.f32 %v4829, %v5053
      %v5092 = vadd.f32 %v4830, %v5058
      %s5093 = scalar_lea.vmem %s2, 8
      %v5094 = vld [vmem:[%s5093] sm:$0xf]
      %v5095 = vsel %vm432, %v3365, 0
      %v5098 = vsel %vm432, %v3427, 0
      %v5100 = vsel %vm432, %v3363, 0
      %v5103 = vsel %vm432, %v3426, 0
      %v5105 = vsel %vm432, %v3367, 0
      %v5108 = vsel %vm432, %v3428, 0
      %v5110 = vsel %vm432, %v3369, 0
      %v5113 = vsel %vm432, %v3429, 0
      %v5115 = vsel %vm432, %v3371, 0
      %v5118 = vsel %vm432, %v3430, 0
      %v5120 = vsel %vm432, %v3373, 0
      %v5123 = vsel %vm432, %v3431, 0
      %v5125 = vsel %vm432, %v3375, 0
      %v5128 = vsel %vm432, %v3432, 0
      %v5130 = vsel %vm432, %v3377, 0
      %v5133 = vsel %vm432, %v3433, 0
      %v5135 = vsel %vm432, %v3379, 0
      %v5138 = vsel %vm432, %v3434, 0
      %v5140 = vsel %vm432, %v3381, 0
      %v5143 = vsel %vm432, %v3435, 0
      %v5145 = vsel %vm432, %v3383, 0
      %v5148 = vsel %vm432, %v3436, 0
      %v5150 = vsel %vm432, %v3385, 0
      %v5153 = vsel %vm432, %v3437, 0
      %v5155 = vsel %vm432, %v3387, 0
      %v5158 = vsel %vm432, %v3438, 0
      %v5160 = vsel %vm432, %v3389, 0
      %v5163 = vsel %vm432, %v3439, 0
      %v5165 = vsel %vm432, %v3391, 0
      %v5168 = vsel %vm432, %v3440, 0
      %v5171 = vsel %vm513, %v5094, 0
      %5173 = vmatprep.subr.mxu0 0.0
      %5174 = vmatpush1.msra.mxu0 0.0
      %5175 = vmatprep.subr.mxu0 0.0
      %5176 = vmatpush1.msra.mxu0 0.0
      %5177 = vmatprep.subr.mxu0 0.0
      %5178 = vmatpush1.msra.mxu0 0.0
      %5179 = vmatprep.subr.mxu0 0.0
      %5180 = vmatpush1.msra.mxu0 0.0
      %5181 = vmatprep.subr.mxu0 0.0
      %5182 = vmatpush1.msra.mxu0 0.0
      %5183 = vmatprep.subr.mxu0 0.0
      %5184 = vmatpush1.msra.mxu0 0.0
      %5185 = vmatprep.subr.mxu0 0.0
      %5186 = vmatpush1.msra.mxu0 0.0
      %5187 = vmatprep.subr.mxu0 0.0
      %5188 = vmatpush1.msra.mxu0 0.0
      %5189 = vmatprep.subr.mxu0 0.0
      %5190 = vmatpush1.msra.mxu0 0.0
      %5191 = vmatprep.subr.mxu0 0.0
      %5192 = vmatpush1.msra.mxu0 0.0
      %5193 = vmatprep.subr.mxu0 0.0
      %5194 = vmatpush1.msra.mxu0 0.0
      %5195 = vmatprep.subr.mxu0 0.0
      %5196 = vmatpush1.msra.mxu0 0.0
      %5197 = vmatprep.subr.mxu0 0.0
      %5198 = vmatpush1.msra.mxu0 0.0
      %5199 = vmatprep.subr.mxu0 0.0
      %5200 = vmatpush1.msra.mxu0 0.0
      %5201 = vmatprep.subr.mxu0 0.0
      %5202 = vmatpush1.msra.mxu0 0.0
      %5203 = vmatprep.subr.mxu0 0.0
      %5204 = vmatpush1.msra.mxu0 %v5171
      %5205 = vmatprep.subr.mxu0 0.0
      %5206 = vmatpush2.msra.mxu0 0.0
      %5207 = vmatprep.subr.mxu0 0.0
      %5208 = vmatpush2.msra.mxu0 0.0
      %5209 = vmatprep.subr.mxu0 0.0
      %5210 = vmatpush2.msra.mxu0 0.0
      %5211 = vmatprep.subr.mxu0 0.0
      %5212 = vmatpush2.msra.mxu0 0.0
      %5213 = vmatprep.subr.mxu0 0.0
      %5214 = vmatpush2.msra.mxu0 0.0
      %5215 = vmatprep.subr.mxu0 0.0
      %5216 = vmatpush2.msra.mxu0 0.0
      %5217 = vmatprep.subr.mxu0 0.0
      %5218 = vmatpush2.msra.mxu0 0.0
      %5219 = vmatprep.subr.mxu0 0.0
      %5220 = vmatpush2.msra.mxu0 0.0
      %5221 = vmatprep.subr.mxu0 0.0
      %5222 = vmatpush2.msra.mxu0 0.0
      %5223 = vmatprep.subr.mxu0 0.0
      %5224 = vmatpush2.msra.mxu0 0.0
      %5225 = vmatprep.subr.mxu0 0.0
      %5226 = vmatpush2.msra.mxu0 0.0
      %5227 = vmatprep.subr.mxu0 0.0
      %5228 = vmatpush2.msra.mxu0 0.0
      %5229 = vmatprep.subr.mxu0 0.0
      %5230 = vmatpush2.msra.mxu0 0.0
      %5231 = vmatprep.subr.mxu0 0.0
      %5232 = vmatpush2.msra.mxu0 0.0
      %5233 = vmatprep.subr.mxu0 0.0
      %5234 = vmatpush2.msra.mxu0 0.0
      %5235 = vmatprep.subr.mxu0 0.0
      %5236 = vmatpush2.msra.mxu0 0.0
      %5237 = vmatprep.mubr.f32.mxu0 0.0
      %5238 = vmatmul.mubr.f32.gmra.mxu0 %v5095
      %v5239 = vpop.f32.mrf.mxu0
      %v5240 = vadd.f32 0.0, %v5239
      %v5241 = vpop.f32.mrf.mxu0
      %5242 = vmatprep.mubr.f32.mxu0 0.0
      %5243 = vmatmul.mubr.f32.gmra.mxu0 %v5098
      %v5244 = vpop.f32.mrf.mxu0
      %v5245 = vadd.f32 0.0, %v5244
      %v5246 = vpop.f32.mrf.mxu0
      %5247 = vmatprep.mubr.f32.mxu0 0.0
      %5248 = vmatmul.mubr.f32.gmra.mxu0 %v5100
      %v5249 = vpop.f32.mrf.mxu0
      %v5250 = vadd.f32 0.0, %v5249
      %v5251 = vpop.f32.mrf.mxu0
      %5252 = vmatprep.mubr.f32.mxu0 0.0
      %5253 = vmatmul.mubr.f32.gmra.mxu0 %v5103
      %v5254 = vpop.f32.mrf.mxu0
      %v5255 = vadd.f32 0.0, %v5254
      %v5256 = vpop.f32.mrf.mxu0
      %5257 = vmatprep.mubr.f32.mxu0 0.0
      %5258 = vmatmul.mubr.f32.gmra.mxu0 %v5095
      %v5259 = vpop.f32.mrf.mxu0
      %v5260 = vadd.f32 0.0, %v5259
      %v5261 = vpop.f32.mrf.mxu0
      %5262 = vmatprep.mubr.f32.mxu0 0.0
      %5263 = vmatmul.mubr.f32.gmra.mxu0 %v5098
      %v5264 = vpop.f32.mrf.mxu0
      %v5265 = vadd.f32 0.0, %v5264
      %v5266 = vpop.f32.mrf.mxu0
      %5267 = vmatprep.mubr.f32.mxu0 0.0
      %5268 = vmatmul.mubr.f32.gmra.mxu0 %v5105
      %v5269 = vpop.f32.mrf.mxu0
      %v5270 = vadd.f32 0.0, %v5269
      %v5271 = vpop.f32.mrf.mxu0
      %5272 = vmatprep.mubr.f32.mxu0 0.0
      %5273 = vmatmul.mubr.f32.gmra.mxu0 %v5108
      %v5274 = vpop.f32.mrf.mxu0
      %v5275 = vadd.f32 0.0, %v5274
      %v5276 = vpop.f32.mrf.mxu0
      %5277 = vmatprep.mubr.f32.mxu0 0.0
      %5278 = vmatmul.mubr.f32.gmra.mxu0 %v5110
      %v5279 = vpop.f32.mrf.mxu0
      %v5280 = vadd.f32 0.0, %v5279
      %v5281 = vpop.f32.mrf.mxu0
      %5282 = vmatprep.mubr.f32.mxu0 0.0
      %5283 = vmatmul.mubr.f32.gmra.mxu0 %v5113
      %v5284 = vpop.f32.mrf.mxu0
      %v5285 = vadd.f32 0.0, %v5284
      %v5286 = vpop.f32.mrf.mxu0
      %5287 = vmatprep.mubr.f32.mxu0 0.0
      %5288 = vmatmul.mubr.f32.gmra.mxu0 %v5115
      %v5289 = vpop.f32.mrf.mxu0
      %v5290 = vadd.f32 0.0, %v5289
      %v5291 = vpop.f32.mrf.mxu0
      %5292 = vmatprep.mubr.f32.mxu0 0.0
      %5293 = vmatmul.mubr.f32.gmra.mxu0 %v5118
      %v5294 = vpop.f32.mrf.mxu0
      %v5295 = vadd.f32 0.0, %v5294
      %v5296 = vpop.f32.mrf.mxu0
      %5297 = vmatprep.mubr.f32.mxu0 0.0
      %5298 = vmatmul.mubr.f32.gmra.mxu0 %v5120
      %v5299 = vpop.f32.mrf.mxu0
      %v5300 = vadd.f32 0.0, %v5299
      %v5301 = vpop.f32.mrf.mxu0
      %5302 = vmatprep.mubr.f32.mxu0 0.0
      %5303 = vmatmul.mubr.f32.gmra.mxu0 %v5123
      %v5304 = vpop.f32.mrf.mxu0
      %v5305 = vadd.f32 0.0, %v5304
      %v5306 = vpop.f32.mrf.mxu0
      %5307 = vmatprep.mubr.f32.mxu0 0.0
      %5308 = vmatmul.mubr.f32.gmra.mxu0 %v5125
      %v5309 = vpop.f32.mrf.mxu0
      %v5310 = vadd.f32 0.0, %v5309
      %v5311 = vpop.f32.mrf.mxu0
      %5312 = vmatprep.mubr.f32.mxu0 0.0
      %5313 = vmatmul.mubr.f32.gmra.mxu0 %v5128
      %v5314 = vpop.f32.mrf.mxu0
      %v5315 = vadd.f32 0.0, %v5314
      %v5316 = vpop.f32.mrf.mxu0
      %5317 = vmatprep.mubr.f32.mxu0 0.0
      %5318 = vmatmul.mubr.f32.gmra.mxu0 %v5130
      %v5319 = vpop.f32.mrf.mxu0
      %v5320 = vadd.f32 0.0, %v5319
      %v5321 = vpop.f32.mrf.mxu0
      %5322 = vmatprep.mubr.f32.mxu0 0.0
      %5323 = vmatmul.mubr.f32.gmra.mxu0 %v5133
      %v5324 = vpop.f32.mrf.mxu0
      %v5325 = vadd.f32 0.0, %v5324
      %v5326 = vpop.f32.mrf.mxu0
      %5327 = vmatprep.mubr.f32.mxu0 0.0
      %5328 = vmatmul.mubr.f32.gmra.mxu0 %v5135
      %v5329 = vpop.f32.mrf.mxu0
      %v5330 = vadd.f32 0.0, %v5329
      %v5331 = vpop.f32.mrf.mxu0
      %5332 = vmatprep.mubr.f32.mxu0 0.0
      %5333 = vmatmul.mubr.f32.gmra.mxu0 %v5138
      %v5334 = vpop.f32.mrf.mxu0
      %v5335 = vadd.f32 0.0, %v5334
      %v5336 = vpop.f32.mrf.mxu0
      %5337 = vmatprep.mubr.f32.mxu0 0.0
      %5338 = vmatmul.mubr.f32.gmra.mxu0 %v5140
      %v5339 = vpop.f32.mrf.mxu0
      %v5340 = vadd.f32 0.0, %v5339
      %v5341 = vpop.f32.mrf.mxu0
      %5342 = vmatprep.mubr.f32.mxu0 0.0
      %5343 = vmatmul.mubr.f32.gmra.mxu0 %v5143
      %v5344 = vpop.f32.mrf.mxu0
      %v5345 = vadd.f32 0.0, %v5344
      %v5346 = vpop.f32.mrf.mxu0
      %5347 = vmatprep.mubr.f32.mxu0 0.0
      %5348 = vmatmul.mubr.f32.gmra.mxu0 %v5145
      %v5349 = vpop.f32.mrf.mxu0
      %v5350 = vadd.f32 0.0, %v5349
      %v5351 = vpop.f32.mrf.mxu0
      %5352 = vmatprep.mubr.f32.mxu0 0.0
      %5353 = vmatmul.mubr.f32.gmra.mxu0 %v5148
      %v5354 = vpop.f32.mrf.mxu0
      %v5355 = vadd.f32 0.0, %v5354
      %v5356 = vpop.f32.mrf.mxu0
      %5357 = vmatprep.mubr.f32.mxu0 0.0
      %5358 = vmatmul.mubr.f32.gmra.mxu0 %v5150
      %v5359 = vpop.f32.mrf.mxu0
      %v5360 = vadd.f32 0.0, %v5359
      %v5361 = vpop.f32.mrf.mxu0
      %5362 = vmatprep.mubr.f32.mxu0 0.0
      %5363 = vmatmul.mubr.f32.gmra.mxu0 %v5153
      %v5364 = vpop.f32.mrf.mxu0
      %v5365 = vadd.f32 0.0, %v5364
      %v5366 = vpop.f32.mrf.mxu0
      %5367 = vmatprep.mubr.f32.mxu0 0.0
      %5368 = vmatmul.mubr.f32.gmra.mxu0 %v5155
      %v5369 = vpop.f32.mrf.mxu0
      %v5370 = vadd.f32 0.0, %v5369
      %v5371 = vpop.f32.mrf.mxu0
      %5372 = vmatprep.mubr.f32.mxu0 0.0
      %5373 = vmatmul.mubr.f32.gmra.mxu0 %v5158
      %v5374 = vpop.f32.mrf.mxu0
      %v5375 = vadd.f32 0.0, %v5374
      %v5376 = vpop.f32.mrf.mxu0
      %5377 = vmatprep.mubr.f32.mxu0 0.0
      %5378 = vmatmul.mubr.f32.gmra.mxu0 %v5160
      %v5379 = vpop.f32.mrf.mxu0
      %v5380 = vadd.f32 0.0, %v5379
      %v5381 = vpop.f32.mrf.mxu0
      %5382 = vmatprep.mubr.f32.mxu0 0.0
      %5383 = vmatmul.mubr.f32.gmra.mxu0 %v5163
      %v5384 = vpop.f32.mrf.mxu0
      %v5385 = vadd.f32 0.0, %v5384
      %v5386 = vpop.f32.mrf.mxu0
      %5387 = vmatprep.mubr.f32.mxu0 0.0
      %5388 = vmatmul.mubr.f32.gmra.mxu0 %v5165
      %v5389 = vpop.f32.mrf.mxu0
      %v5390 = vadd.f32 0.0, %v5389
      %v5391 = vpop.f32.mrf.mxu0
      %5392 = vmatprep.mubr.f32.mxu0 0.0
      %5393 = vmatmul.mubr.f32.gmra.mxu0 %v5168
      %v5394 = vpop.f32.mrf.mxu0
      %v5395 = vadd.f32 0.0, %v5394
      %v5396 = vpop.f32.mrf.mxu0
      %5397 = vdwg.mxu0
      %v5398 = vadd.f32 %v5061, %v5240
      %v5399 = vadd.f32 %v5062, %v5245
      %v5400 = vadd.f32 %v5063, %v5250
      %v5401 = vadd.f32 %v5064, %v5255
      %v5402 = vadd.f32 %v5065, %v5260
      %v5403 = vadd.f32 %v5066, %v5265
      %v5404 = vadd.f32 %v5067, %v5270
      %v5405 = vadd.f32 %v5068, %v5275
      %v5406 = vadd.f32 %v5069, %v5280
      %v5407 = vadd.f32 %v5070, %v5285
      %v5408 = vadd.f32 %v5071, %v5290
      %v5409 = vadd.f32 %v5072, %v5295
      %v5410 = vadd.f32 %v5073, %v5300
      %v5411 = vadd.f32 %v5074, %v5305
      %v5412 = vadd.f32 %v5075, %v5310
      %v5413 = vadd.f32 %v5076, %v5315
      %v5414 = vadd.f32 %v5077, %v5320
      %v5415 = vadd.f32 %v5078, %v5325
      %v5416 = vadd.f32 %v5079, %v5330
      %v5417 = vadd.f32 %v5080, %v5335
      %v5418 = vadd.f32 %v5081, %v5340
      %v5419 = vadd.f32 %v5082, %v5345
      %v5420 = vadd.f32 %v5083, %v5350
      %v5421 = vadd.f32 %v5084, %v5355
      %v5422 = vadd.f32 %v5085, %v5360
      %v5423 = vadd.f32 %v5086, %v5365
      %v5424 = vadd.f32 %v5087, %v5370
      %v5425 = vadd.f32 %v5088, %v5375
      %v5426 = vadd.f32 %v5089, %v5380
      %v5427 = vadd.f32 %v5090, %v5385
      %v5428 = vadd.f32 %v5091, %v5390
      %v5429 = vadd.f32 %v5092, %v5395
      %s5430 = scalar_lea.vmem %s2, 20
      %v5431 = vld [vmem:[%s5430] sm:$0xf]
      %v5432 = vsel %vm432, %v3393, 0
      %v5435 = vsel %vm432, %v3441, 0
      %v5438 = vsel %vm513, %v5431, 0
      %5440 = vmatprep.subr.mxu0 0.0
      %5441 = vmatpush1.msra.mxu0 0.0
      %5442 = vmatprep.subr.mxu0 0.0
      %5443 = vmatpush1.msra.mxu0 0.0
      %5444 = vmatprep.subr.mxu0 0.0
      %5445 = vmatpush1.msra.mxu0 0.0
      %5446 = vmatprep.subr.mxu0 0.0
      %5447 = vmatpush1.msra.mxu0 0.0
      %5448 = vmatprep.subr.mxu0 0.0
      %5449 = vmatpush1.msra.mxu0 0.0
      %5450 = vmatprep.subr.mxu0 0.0
      %5451 = vmatpush1.msra.mxu0 0.0
      %5452 = vmatprep.subr.mxu0 0.0
      %5453 = vmatpush1.msra.mxu0 0.0
      %5454 = vmatprep.subr.mxu0 0.0
      %5455 = vmatpush1.msra.mxu0 0.0
      %5456 = vmatprep.subr.mxu0 0.0
      %5457 = vmatpush1.msra.mxu0 0.0
      %5458 = vmatprep.subr.mxu0 0.0
      %5459 = vmatpush1.msra.mxu0 0.0
      %5460 = vmatprep.subr.mxu0 0.0
      %5461 = vmatpush1.msra.mxu0 0.0
      %5462 = vmatprep.subr.mxu0 0.0
      %5463 = vmatpush1.msra.mxu0 0.0
      %5464 = vmatprep.subr.mxu0 0.0
      %5465 = vmatpush1.msra.mxu0 0.0
      %5466 = vmatprep.subr.mxu0 0.0
      %5467 = vmatpush1.msra.mxu0 0.0
      %5468 = vmatprep.subr.mxu0 0.0
      %5469 = vmatpush1.msra.mxu0 0.0
      %5470 = vmatprep.subr.mxu0 0.0
      %5471 = vmatpush1.msra.mxu0 %v5438
      %5472 = vmatprep.subr.mxu0 0.0
      %5473 = vmatpush2.msra.mxu0 0.0
      %5474 = vmatprep.subr.mxu0 0.0
      %5475 = vmatpush2.msra.mxu0 0.0
      %5476 = vmatprep.subr.mxu0 0.0
      %5477 = vmatpush2.msra.mxu0 0.0
      %5478 = vmatprep.subr.mxu0 0.0
      %5479 = vmatpush2.msra.mxu0 0.0
      %5480 = vmatprep.subr.mxu0 0.0
      %5481 = vmatpush2.msra.mxu0 0.0
      %5482 = vmatprep.subr.mxu0 0.0
      %5483 = vmatpush2.msra.mxu0 0.0
      %5484 = vmatprep.subr.mxu0 0.0
      %5485 = vmatpush2.msra.mxu0 0.0
      %5486 = vmatprep.subr.mxu0 0.0
      %5487 = vmatpush2.msra.mxu0 0.0
      %5488 = vmatprep.subr.mxu0 0.0
      %5489 = vmatpush2.msra.mxu0 0.0
      %5490 = vmatprep.subr.mxu0 0.0
      %5491 = vmatpush2.msra.mxu0 0.0
      %5492 = vmatprep.subr.mxu0 0.0
      %5493 = vmatpush2.msra.mxu0 0.0
      %5494 = vmatprep.subr.mxu0 0.0
      %5495 = vmatpush2.msra.mxu0 0.0
      %5496 = vmatprep.subr.mxu0 0.0
      %5497 = vmatpush2.msra.mxu0 0.0
      %5498 = vmatprep.subr.mxu0 0.0
      %5499 = vmatpush2.msra.mxu0 0.0
      %5500 = vmatprep.subr.mxu0 0.0
      %5501 = vmatpush2.msra.mxu0 0.0
      %5502 = vmatprep.subr.mxu0 0.0
      %5503 = vmatpush2.msra.mxu0 0.0
      %5504 = vmatprep.mubr.f32.mxu0 0.0
      %5505 = vmatmul.mubr.f32.gmra.mxu0 %v5100
      %v5506 = vpop.f32.mrf.mxu0
      %v5507 = vadd.f32 0.0, %v5506
      %v5508 = vpop.f32.mrf.mxu0
      %5509 = vmatprep.mubr.f32.mxu0 0.0
      %5510 = vmatmul.mubr.f32.gmra.mxu0 %v5103
      %v5511 = vpop.f32.mrf.mxu0
      %v5512 = vadd.f32 0.0, %v5511
      %v5513 = vpop.f32.mrf.mxu0
      %5514 = vmatprep.mubr.f32.mxu0 0.0
      %5515 = vmatmul.mubr.f32.gmra.mxu0 %v5095
      %v5516 = vpop.f32.mrf.mxu0
      %v5517 = vadd.f32 0.0, %v5516
      %v5518 = vpop.f32.mrf.mxu0
      %5519 = vmatprep.mubr.f32.mxu0 0.0
      %5520 = vmatmul.mubr.f32.gmra.mxu0 %v5098
      %v5521 = vpop.f32.mrf.mxu0
      %v5522 = vadd.f32 0.0, %v5521
      %v5523 = vpop.f32.mrf.mxu0
      %5524 = vmatprep.mubr.f32.mxu0 0.0
      %5525 = vmatmul.mubr.f32.gmra.mxu0 %v5105
      %v5526 = vpop.f32.mrf.mxu0
      %v5527 = vadd.f32 0.0, %v5526
      %v5528 = vpop.f32.mrf.mxu0
      %5529 = vmatprep.mubr.f32.mxu0 0.0
      %5530 = vmatmul.mubr.f32.gmra.mxu0 %v5108
      %v5531 = vpop.f32.mrf.mxu0
      %v5532 = vadd.f32 0.0, %v5531
      %v5533 = vpop.f32.mrf.mxu0
      %5534 = vmatprep.mubr.f32.mxu0 0.0
      %5535 = vmatmul.mubr.f32.gmra.mxu0 %v5110
      %v5536 = vpop.f32.mrf.mxu0
      %v5537 = vadd.f32 0.0, %v5536
      %v5538 = vpop.f32.mrf.mxu0
      %5539 = vmatprep.mubr.f32.mxu0 0.0
      %5540 = vmatmul.mubr.f32.gmra.mxu0 %v5113
      %v5541 = vpop.f32.mrf.mxu0
      %v5542 = vadd.f32 0.0, %v5541
      %v5543 = vpop.f32.mrf.mxu0
      %5544 = vmatprep.mubr.f32.mxu0 0.0
      %5545 = vmatmul.mubr.f32.gmra.mxu0 %v5115
      %v5546 = vpop.f32.mrf.mxu0
      %v5547 = vadd.f32 0.0, %v5546
      %v5548 = vpop.f32.mrf.mxu0
      %5549 = vmatprep.mubr.f32.mxu0 0.0
      %5550 = vmatmul.mubr.f32.gmra.mxu0 %v5118
      %v5551 = vpop.f32.mrf.mxu0
      %v5552 = vadd.f32 0.0, %v5551
      %v5553 = vpop.f32.mrf.mxu0
      %5554 = vmatprep.mubr.f32.mxu0 0.0
      %5555 = vmatmul.mubr.f32.gmra.mxu0 %v5120
      %v5556 = vpop.f32.mrf.mxu0
      %v5557 = vadd.f32 0.0, %v5556
      %v5558 = vpop.f32.mrf.mxu0
      %5559 = vmatprep.mubr.f32.mxu0 0.0
      %5560 = vmatmul.mubr.f32.gmra.mxu0 %v5123
      %v5561 = vpop.f32.mrf.mxu0
      %v5562 = vadd.f32 0.0, %v5561
      %v5563 = vpop.f32.mrf.mxu0
      %5564 = vmatprep.mubr.f32.mxu0 0.0
      %5565 = vmatmul.mubr.f32.gmra.mxu0 %v5125
      %v5566 = vpop.f32.mrf.mxu0
      %v5567 = vadd.f32 0.0, %v5566
      %v5568 = vpop.f32.mrf.mxu0
      %5569 = vmatprep.mubr.f32.mxu0 0.0
      %5570 = vmatmul.mubr.f32.gmra.mxu0 %v5128
      %v5571 = vpop.f32.mrf.mxu0
      %v5572 = vadd.f32 0.0, %v5571
      %v5573 = vpop.f32.mrf.mxu0
      %5574 = vmatprep.mubr.f32.mxu0 0.0
      %5575 = vmatmul.mubr.f32.gmra.mxu0 %v5130
      %v5576 = vpop.f32.mrf.mxu0
      %v5577 = vadd.f32 0.0, %v5576
      %v5578 = vpop.f32.mrf.mxu0
      %5579 = vmatprep.mubr.f32.mxu0 0.0
      %5580 = vmatmul.mubr.f32.gmra.mxu0 %v5133
      %v5581 = vpop.f32.mrf.mxu0
      %v5582 = vadd.f32 0.0, %v5581
      %v5583 = vpop.f32.mrf.mxu0
      %5584 = vmatprep.mubr.f32.mxu0 0.0
      %5585 = vmatmul.mubr.f32.gmra.mxu0 %v5135
      %v5586 = vpop.f32.mrf.mxu0
      %v5587 = vadd.f32 0.0, %v5586
      %v5588 = vpop.f32.mrf.mxu0
      %5589 = vmatprep.mubr.f32.mxu0 0.0
      %5590 = vmatmul.mubr.f32.gmra.mxu0 %v5138
      %v5591 = vpop.f32.mrf.mxu0
      %v5592 = vadd.f32 0.0, %v5591
      %v5593 = vpop.f32.mrf.mxu0
      %5594 = vmatprep.mubr.f32.mxu0 0.0
      %5595 = vmatmul.mubr.f32.gmra.mxu0 %v5140
      %v5596 = vpop.f32.mrf.mxu0
      %v5597 = vadd.f32 0.0, %v5596
      %v5598 = vpop.f32.mrf.mxu0
      %5599 = vmatprep.mubr.f32.mxu0 0.0
      %5600 = vmatmul.mubr.f32.gmra.mxu0 %v5143
      %v5601 = vpop.f32.mrf.mxu0
      %v5602 = vadd.f32 0.0, %v5601
      %v5603 = vpop.f32.mrf.mxu0
      %5604 = vmatprep.mubr.f32.mxu0 0.0
      %5605 = vmatmul.mubr.f32.gmra.mxu0 %v5145
      %v5606 = vpop.f32.mrf.mxu0
      %v5607 = vadd.f32 0.0, %v5606
      %v5608 = vpop.f32.mrf.mxu0
      %5609 = vmatprep.mubr.f32.mxu0 0.0
      %5610 = vmatmul.mubr.f32.gmra.mxu0 %v5148
      %v5611 = vpop.f32.mrf.mxu0
      %v5612 = vadd.f32 0.0, %v5611
      %v5613 = vpop.f32.mrf.mxu0
      %5614 = vmatprep.mubr.f32.mxu0 0.0
      %5615 = vmatmul.mubr.f32.gmra.mxu0 %v5150
      %v5616 = vpop.f32.mrf.mxu0
      %v5617 = vadd.f32 0.0, %v5616
      %v5618 = vpop.f32.mrf.mxu0
      %5619 = vmatprep.mubr.f32.mxu0 0.0
      %5620 = vmatmul.mubr.f32.gmra.mxu0 %v5153
      %v5621 = vpop.f32.mrf.mxu0
      %v5622 = vadd.f32 0.0, %v5621
      %v5623 = vpop.f32.mrf.mxu0
      %5624 = vmatprep.mubr.f32.mxu0 0.0
      %5625 = vmatmul.mubr.f32.gmra.mxu0 %v5155
      %v5626 = vpop.f32.mrf.mxu0
      %v5627 = vadd.f32 0.0, %v5626
      %v5628 = vpop.f32.mrf.mxu0
      %5629 = vmatprep.mubr.f32.mxu0 0.0
      %5630 = vmatmul.mubr.f32.gmra.mxu0 %v5158
      %v5631 = vpop.f32.mrf.mxu0
      %v5632 = vadd.f32 0.0, %v5631
      %v5633 = vpop.f32.mrf.mxu0
      %5634 = vmatprep.mubr.f32.mxu0 0.0
      %5635 = vmatmul.mubr.f32.gmra.mxu0 %v5160
      %v5636 = vpop.f32.mrf.mxu0
      %v5637 = vadd.f32 0.0, %v5636
      %v5638 = vpop.f32.mrf.mxu0
      %5639 = vmatprep.mubr.f32.mxu0 0.0
      %5640 = vmatmul.mubr.f32.gmra.mxu0 %v5163
      %v5641 = vpop.f32.mrf.mxu0
      %v5642 = vadd.f32 0.0, %v5641
      %v5643 = vpop.f32.mrf.mxu0
      %5644 = vmatprep.mubr.f32.mxu0 0.0
      %5645 = vmatmul.mubr.f32.gmra.mxu0 %v5165
      %v5646 = vpop.f32.mrf.mxu0
      %v5647 = vadd.f32 0.0, %v5646
      %v5648 = vpop.f32.mrf.mxu0
      %5649 = vmatprep.mubr.f32.mxu0 0.0
      %5650 = vmatmul.mubr.f32.gmra.mxu0 %v5168
      %v5651 = vpop.f32.mrf.mxu0
      %v5652 = vadd.f32 0.0, %v5651
      %v5653 = vpop.f32.mrf.mxu0
      %5654 = vmatprep.mubr.f32.mxu0 0.0
      %5655 = vmatmul.mubr.f32.gmra.mxu0 %v5432
      %v5656 = vpop.f32.mrf.mxu0
      %v5657 = vadd.f32 0.0, %v5656
      %v5658 = vpop.f32.mrf.mxu0
      %5659 = vmatprep.mubr.f32.mxu0 0.0
      %5660 = vmatmul.mubr.f32.gmra.mxu0 %v5435
      %v5661 = vpop.f32.mrf.mxu0
      %v5662 = vadd.f32 0.0, %v5661
      %v5663 = vpop.f32.mrf.mxu0
      %5664 = vdwg.mxu0
      %v5665 = vadd.f32 %v5398, %v5507
      %v5666 = vadd.f32 %v5399, %v5512
      %v5667 = vadd.f32 %v5400, %v5517
      %v5668 = vadd.f32 %v5401, %v5522
      %v5669 = vadd.f32 %v5402, %v5527
      %v5670 = vadd.f32 %v5403, %v5532
      %v5671 = vadd.f32 %v5404, %v5537
      %v5672 = vadd.f32 %v5405, %v5542
      %v5673 = vadd.f32 %v5406, %v5547
      %v5674 = vadd.f32 %v5407, %v5552
      %v5675 = vadd.f32 %v5408, %v5557
      %v5676 = vadd.f32 %v5409, %v5562
      %v5677 = vadd.f32 %v5410, %v5567
      %v5678 = vadd.f32 %v5411, %v5572
      %v5679 = vadd.f32 %v5412, %v5577
      %v5680 = vadd.f32 %v5413, %v5582
      %v5681 = vadd.f32 %v5414, %v5587
      %v5682 = vadd.f32 %v5415, %v5592
      %v5683 = vadd.f32 %v5416, %v5597
      %v5684 = vadd.f32 %v5417, %v5602
      %v5685 = vadd.f32 %v5418, %v5607
      %v5686 = vadd.f32 %v5419, %v5612
      %v5687 = vadd.f32 %v5420, %v5617
      %v5688 = vadd.f32 %v5421, %v5622
      %v5689 = vadd.f32 %v5422, %v5627
      %v5690 = vadd.f32 %v5423, %v5632
      %v5691 = vadd.f32 %v5424, %v5637
      %v5692 = vadd.f32 %v5425, %v5642
      %v5693 = vadd.f32 %v5426, %v5647
      %v5694 = vadd.f32 %v5427, %v5652
      %v5695 = vadd.f32 %v5428, %v5657
      %v5696 = vadd.f32 %v5429, %v5662
      %s5697 = scalar_lea.vmem %s2, 32
      %v5698 = vld [vmem:[%s5697] sm:$0xf]
      %v5700 = vsel %vm513, %v5698, 0
      %5702 = vmatprep.subr.mxu0 0.0
      %5703 = vmatpush1.msra.mxu0 0.0
      %5704 = vmatprep.subr.mxu0 0.0
      %5705 = vmatpush1.msra.mxu0 0.0
      %5706 = vmatprep.subr.mxu0 0.0
      %5707 = vmatpush1.msra.mxu0 0.0
      %5708 = vmatprep.subr.mxu0 0.0
      %5709 = vmatpush1.msra.mxu0 0.0
      %5710 = vmatprep.subr.mxu0 0.0
      %5711 = vmatpush1.msra.mxu0 0.0
      %5712 = vmatprep.subr.mxu0 0.0
      %5713 = vmatpush1.msra.mxu0 0.0
      %5714 = vmatprep.subr.mxu0 0.0
      %5715 = vmatpush1.msra.mxu0 0.0
      %5716 = vmatprep.subr.mxu0 0.0
      %5717 = vmatpush1.msra.mxu0 0.0
      %5718 = vmatprep.subr.mxu0 0.0
      %5719 = vmatpush1.msra.mxu0 0.0
      %5720 = vmatprep.subr.mxu0 0.0
      %5721 = vmatpush1.msra.mxu0 0.0
      %5722 = vmatprep.subr.mxu0 0.0
      %5723 = vmatpush1.msra.mxu0 0.0
      %5724 = vmatprep.subr.mxu0 0.0
      %5725 = vmatpush1.msra.mxu0 0.0
      %5726 = vmatprep.subr.mxu0 0.0
      %5727 = vmatpush1.msra.mxu0 0.0
      %5728 = vmatprep.subr.mxu0 0.0
      %5729 = vmatpush1.msra.mxu0 0.0
      %5730 = vmatprep.subr.mxu0 0.0
      %5731 = vmatpush1.msra.mxu0 0.0
      %5732 = vmatprep.subr.mxu0 0.0
      %5733 = vmatpush1.msra.mxu0 %v5700
      %5734 = vmatprep.subr.mxu0 0.0
      %5735 = vmatpush2.msra.mxu0 0.0
      %5736 = vmatprep.subr.mxu0 0.0
      %5737 = vmatpush2.msra.mxu0 0.0
      %5738 = vmatprep.subr.mxu0 0.0
      %5739 = vmatpush2.msra.mxu0 0.0
      %5740 = vmatprep.subr.mxu0 0.0
      %5741 = vmatpush2.msra.mxu0 0.0
      %5742 = vmatprep.subr.mxu0 0.0
      %5743 = vmatpush2.msra.mxu0 0.0
      %5744 = vmatprep.subr.mxu0 0.0
      %5745 = vmatpush2.msra.mxu0 0.0
      %5746 = vmatprep.subr.mxu0 0.0
      %5747 = vmatpush2.msra.mxu0 0.0
      %5748 = vmatprep.subr.mxu0 0.0
      %5749 = vmatpush2.msra.mxu0 0.0
      %5750 = vmatprep.subr.mxu0 0.0
      %5751 = vmatpush2.msra.mxu0 0.0
      %5752 = vmatprep.subr.mxu0 0.0
      %5753 = vmatpush2.msra.mxu0 0.0
      %5754 = vmatprep.subr.mxu0 0.0
      %5755 = vmatpush2.msra.mxu0 0.0
      %5756 = vmatprep.subr.mxu0 0.0
      %5757 = vmatpush2.msra.mxu0 0.0
      %5758 = vmatprep.subr.mxu0 0.0
      %5759 = vmatpush2.msra.mxu0 0.0
      %5760 = vmatprep.subr.mxu0 0.0
      %5761 = vmatpush2.msra.mxu0 0.0
      %5762 = vmatprep.subr.mxu0 0.0
      %5763 = vmatpush2.msra.mxu0 0.0
      %5764 = vmatprep.subr.mxu0 0.0
      %5765 = vmatpush2.msra.mxu0 0.0
      %5766 = vmatprep.mubr.f32.mxu0 0.0
      %5767 = vmatmul.mubr.f32.gmra.mxu0 %v5095
      %v5768 = vpop.f32.mrf.mxu0
      %v5769 = vadd.f32 0.0, %v5768
      %v5770 = vpop.f32.mrf.mxu0
      %5771 = vmatprep.mubr.f32.mxu0 0.0
      %5772 = vmatmul.mubr.f32.gmra.mxu0 %v5098
      %v5773 = vpop.f32.mrf.mxu0
      %v5774 = vadd.f32 0.0, %v5773
      %v5775 = vpop.f32.mrf.mxu0
      %5776 = vmatprep.mubr.f32.mxu0 0.0
      %5777 = vmatmul.mubr.f32.gmra.mxu0 %v5105
      %v5778 = vpop.f32.mrf.mxu0
      %v5779 = vadd.f32 0.0, %v5778
      %v5780 = vpop.f32.mrf.mxu0
      %5781 = vmatprep.mubr.f32.mxu0 0.0
      %5782 = vmatmul.mubr.f32.gmra.mxu0 %v5108
      %v5783 = vpop.f32.mrf.mxu0
      %v5784 = vadd.f32 0.0, %v5783
      %v5785 = vpop.f32.mrf.mxu0
      %5786 = vmatprep.mubr.f32.mxu0 0.0
      %5787 = vmatmul.mubr.f32.gmra.mxu0 %v5110
      %v5788 = vpop.f32.mrf.mxu0
      %v5789 = vadd.f32 0.0, %v5788
      %v5790 = vpop.f32.mrf.mxu0
      %5791 = vmatprep.mubr.f32.mxu0 0.0
      %5792 = vmatmul.mubr.f32.gmra.mxu0 %v5113
      %v5793 = vpop.f32.mrf.mxu0
      %v5794 = vadd.f32 0.0, %v5793
      %v5795 = vpop.f32.mrf.mxu0
      %5796 = vmatprep.mubr.f32.mxu0 0.0
      %5797 = vmatmul.mubr.f32.gmra.mxu0 %v5115
      %v5798 = vpop.f32.mrf.mxu0
      %v5799 = vadd.f32 0.0, %v5798
      %v5800 = vpop.f32.mrf.mxu0
      %5801 = vmatprep.mubr.f32.mxu0 0.0
      %5802 = vmatmul.mubr.f32.gmra.mxu0 %v5118
      %v5803 = vpop.f32.mrf.mxu0
      %v5804 = vadd.f32 0.0, %v5803
      %v5805 = vpop.f32.mrf.mxu0
      %5806 = vmatprep.mubr.f32.mxu0 0.0
      %5807 = vmatmul.mubr.f32.gmra.mxu0 %v5120
      %v5808 = vpop.f32.mrf.mxu0
      %v5809 = vadd.f32 0.0, %v5808
      %v5810 = vpop.f32.mrf.mxu0
      %5811 = vmatprep.mubr.f32.mxu0 0.0
      %5812 = vmatmul.mubr.f32.gmra.mxu0 %v5123
      %v5813 = vpop.f32.mrf.mxu0
      %v5814 = vadd.f32 0.0, %v5813
      %v5815 = vpop.f32.mrf.mxu0
      %5816 = vmatprep.mubr.f32.mxu0 0.0
      %5817 = vmatmul.mubr.f32.gmra.mxu0 %v5125
      %v5818 = vpop.f32.mrf.mxu0
      %v5819 = vadd.f32 0.0, %v5818
      %v5820 = vpop.f32.mrf.mxu0
      %5821 = vmatprep.mubr.f32.mxu0 0.0
      %5822 = vmatmul.mubr.f32.gmra.mxu0 %v5128
      %v5823 = vpop.f32.mrf.mxu0
      %v5824 = vadd.f32 0.0, %v5823
      %v5825 = vpop.f32.mrf.mxu0
      %5826 = vmatprep.mubr.f32.mxu0 0.0
      %5827 = vmatmul.mubr.f32.gmra.mxu0 %v5130
      %v5828 = vpop.f32.mrf.mxu0
      %v5829 = vadd.f32 0.0, %v5828
      %v5830 = vpop.f32.mrf.mxu0
      %5831 = vmatprep.mubr.f32.mxu0 0.0
      %5832 = vmatmul.mubr.f32.gmra.mxu0 %v5133
      %v5833 = vpop.f32.mrf.mxu0
      %v5834 = vadd.f32 0.0, %v5833
      %v5835 = vpop.f32.mrf.mxu0
      %5836 = vmatprep.mubr.f32.mxu0 0.0
      %5837 = vmatmul.mubr.f32.gmra.mxu0 %v5135
      %v5838 = vpop.f32.mrf.mxu0
      %v5839 = vadd.f32 0.0, %v5838
      %v5840 = vpop.f32.mrf.mxu0
      %5841 = vmatprep.mubr.f32.mxu0 0.0
      %5842 = vmatmul.mubr.f32.gmra.mxu0 %v5138
      %v5843 = vpop.f32.mrf.mxu0
      %v5844 = vadd.f32 0.0, %v5843
      %v5845 = vpop.f32.mrf.mxu0
      %5846 = vmatprep.mubr.f32.mxu0 0.0
      %5847 = vmatmul.mubr.f32.gmra.mxu0 %v5140
      %v5848 = vpop.f32.mrf.mxu0
      %v5849 = vadd.f32 0.0, %v5848
      %v5850 = vpop.f32.mrf.mxu0
      %5851 = vmatprep.mubr.f32.mxu0 0.0
      %5852 = vmatmul.mubr.f32.gmra.mxu0 %v5143
      %v5853 = vpop.f32.mrf.mxu0
      %v5854 = vadd.f32 0.0, %v5853
      %v5855 = vpop.f32.mrf.mxu0
      %5856 = vmatprep.mubr.f32.mxu0 0.0
      %5857 = vmatmul.mubr.f32.gmra.mxu0 %v5145
      %v5858 = vpop.f32.mrf.mxu0
      %v5859 = vadd.f32 0.0, %v5858
      %v5860 = vpop.f32.mrf.mxu0
      %5861 = vmatprep.mubr.f32.mxu0 0.0
      %5862 = vmatmul.mubr.f32.gmra.mxu0 %v5148
      %v5863 = vpop.f32.mrf.mxu0
      %v5864 = vadd.f32 0.0, %v5863
      %v5865 = vpop.f32.mrf.mxu0
      %5866 = vmatprep.mubr.f32.mxu0 0.0
      %5867 = vmatmul.mubr.f32.gmra.mxu0 %v5150
      %v5868 = vpop.f32.mrf.mxu0
      %v5869 = vadd.f32 0.0, %v5868
      %v5870 = vpop.f32.mrf.mxu0
      %5871 = vmatprep.mubr.f32.mxu0 0.0
      %5872 = vmatmul.mubr.f32.gmra.mxu0 %v5153
      %v5873 = vpop.f32.mrf.mxu0
      %v5874 = vadd.f32 0.0, %v5873
      %v5875 = vpop.f32.mrf.mxu0
      %5876 = vmatprep.mubr.f32.mxu0 0.0
      %5877 = vmatmul.mubr.f32.gmra.mxu0 %v5155
      %v5878 = vpop.f32.mrf.mxu0
      %v5879 = vadd.f32 0.0, %v5878
      %v5880 = vpop.f32.mrf.mxu0
      %5881 = vmatprep.mubr.f32.mxu0 0.0
      %5882 = vmatmul.mubr.f32.gmra.mxu0 %v5158
      %v5883 = vpop.f32.mrf.mxu0
      %v5884 = vadd.f32 0.0, %v5883
      %v5885 = vpop.f32.mrf.mxu0
      %5886 = vmatprep.mubr.f32.mxu0 0.0
      %5887 = vmatmul.mubr.f32.gmra.mxu0 %v5160
      %v5888 = vpop.f32.mrf.mxu0
      %v5889 = vadd.f32 0.0, %v5888
      %v5890 = vpop.f32.mrf.mxu0
      %5891 = vmatprep.mubr.f32.mxu0 0.0
      %5892 = vmatmul.mubr.f32.gmra.mxu0 %v5163
      %v5893 = vpop.f32.mrf.mxu0
      %v5894 = vadd.f32 0.0, %v5893
      %v5895 = vpop.f32.mrf.mxu0
      %5896 = vmatprep.mubr.f32.mxu0 0.0
      %5897 = vmatmul.mubr.f32.gmra.mxu0 %v5165
      %v5898 = vpop.f32.mrf.mxu0
      %v5899 = vadd.f32 0.0, %v5898
      %v5900 = vpop.f32.mrf.mxu0
      %5901 = vmatprep.mubr.f32.mxu0 0.0
      %5902 = vmatmul.mubr.f32.gmra.mxu0 %v5168
      %v5903 = vpop.f32.mrf.mxu0
      %v5904 = vadd.f32 0.0, %v5903
      %v5905 = vpop.f32.mrf.mxu0
      %5906 = vmatprep.mubr.f32.mxu0 0.0
      %5907 = vmatmul.mubr.f32.gmra.mxu0 %v5432
      %v5908 = vpop.f32.mrf.mxu0
      %v5909 = vadd.f32 0.0, %v5908
      %v5910 = vpop.f32.mrf.mxu0
      %5911 = vmatprep.mubr.f32.mxu0 0.0
      %5912 = vmatmul.mubr.f32.gmra.mxu0 %v5435
      %v5913 = vpop.f32.mrf.mxu0
      %v5914 = vadd.f32 0.0, %v5913
      %v5915 = vpop.f32.mrf.mxu0
      %5916 = vmatprep.mubr.f32.mxu0 0.0
      %5917 = vmatmul.mubr.f32.gmra.mxu0 %v5165
      %v5918 = vpop.f32.mrf.mxu0
      %v5919 = vadd.f32 0.0, %v5918
      %v5920 = vpop.f32.mrf.mxu0
      %5921 = vmatprep.mubr.f32.mxu0 0.0
      %5922 = vmatmul.mubr.f32.gmra.mxu0 %v5168
      %v5923 = vpop.f32.mrf.mxu0
      %v5924 = vadd.f32 0.0, %v5923
      %v5925 = vpop.f32.mrf.mxu0
      %5926 = vdwg.mxu0
      %v5927 = vadd.f32 %v5665, %v5769
      %v5928 = vadd.f32 %v5666, %v5774
      %v5929 = vadd.f32 %v5667, %v5779
      %v5930 = vadd.f32 %v5668, %v5784
      %v5931 = vadd.f32 %v5669, %v5789
      %v5932 = vadd.f32 %v5670, %v5794
      %v5933 = vadd.f32 %v5671, %v5799
      %v5934 = vadd.f32 %v5672, %v5804
      %v5935 = vadd.f32 %v5673, %v5809
      %v5936 = vadd.f32 %v5674, %v5814
      %v5937 = vadd.f32 %v5675, %v5819
      %v5938 = vadd.f32 %v5676, %v5824
      %v5939 = vadd.f32 %v5677, %v5829
      %v5940 = vadd.f32 %v5678, %v5834
      %v5941 = vadd.f32 %v5679, %v5839
      %v5942 = vadd.f32 %v5680, %v5844
      %v5943 = vadd.f32 %v5681, %v5849
      %v5944 = vadd.f32 %v5682, %v5854
      %v5945 = vadd.f32 %v5683, %v5859
      %v5946 = vadd.f32 %v5684, %v5864
      %v5947 = vadd.f32 %v5685, %v5869
      %v5948 = vadd.f32 %v5686, %v5874
      %v5949 = vadd.f32 %v5687, %v5879
      %v5950 = vadd.f32 %v5688, %v5884
      %v5951 = vadd.f32 %v5689, %v5889
      %v5952 = vadd.f32 %v5690, %v5894
      %v5953 = vadd.f32 %v5691, %v5899
      %v5954 = vadd.f32 %v5692, %v5904
      %v5955 = vadd.f32 %v5693, %v5909
      %v5956 = vadd.f32 %v5694, %v5914
      %v5957 = vadd.f32 %v5695, %v5919
      %v5958 = vadd.f32 %v5696, %v5924
      %v5959 = vsel %vm432, %v5927, 0.0
      %v5960 = vsel %vm432, %v5928, 0.0
      %v5961 = vadd.f32 %v5959, %v5960
      %v5962 = vsel %vm432, %v5929, 0.0
      %v5963 = vadd.f32 %v5961, %v5962
      %v5964 = vsel %vm432, %v5930, 0.0
      %v5965 = vadd.f32 %v5963, %v5964
      %v5966 = vsel %vm432, %v5931, 0.0
      %v5967 = vadd.f32 %v5965, %v5966
      %v5968 = vsel %vm432, %v5932, 0.0
      %v5969 = vadd.f32 %v5967, %v5968
      %v5970 = vsel %vm432, %v5933, 0.0
      %v5971 = vadd.f32 %v5969, %v5970
      %v5972 = vsel %vm432, %v5934, 0.0
      %v5973 = vadd.f32 %v5971, %v5972
      %v5974 = vsel %vm432, %v5935, 0.0
      %v5975 = vadd.f32 %v5973, %v5974
      %v5976 = vsel %vm432, %v5936, 0.0
      %v5977 = vadd.f32 %v5975, %v5976
      %v5978 = vsel %vm432, %v5937, 0.0
      %v5979 = vadd.f32 %v5977, %v5978
      %v5980 = vsel %vm432, %v5938, 0.0
      %v5981 = vadd.f32 %v5979, %v5980
      %v5982 = vsel %vm432, %v5939, 0.0
      %v5983 = vadd.f32 %v5981, %v5982
      %v5984 = vsel %vm432, %v5940, 0.0
      %v5985 = vadd.f32 %v5983, %v5984
      %v5986 = vsel %vm432, %v5941, 0.0
      %v5987 = vadd.f32 %v5985, %v5986
      %v5988 = vsel %vm432, %v5942, 0.0
      %v5989 = vadd.f32 %v5987, %v5988
      %v5990 = vsel %vm432, %v5943, 0.0
      %v5991 = vadd.f32 %v5989, %v5990
      %v5992 = vsel %vm432, %v5944, 0.0
      %v5993 = vadd.f32 %v5991, %v5992
      %v5994 = vsel %vm432, %v5945, 0.0
      %v5995 = vadd.f32 %v5993, %v5994
      %v5996 = vsel %vm432, %v5946, 0.0
      %v5997 = vadd.f32 %v5995, %v5996
      %v5998 = vsel %vm432, %v5947, 0.0
      %v5999 = vadd.f32 %v5997, %v5998
      %v6000 = vsel %vm432, %v5948, 0.0
      %v6001 = vadd.f32 %v5999, %v6000
      %v6002 = vsel %vm432, %v5949, 0.0
      %v6003 = vadd.f32 %v6001, %v6002
      %v6004 = vsel %vm432, %v5950, 0.0
      %v6005 = vadd.f32 %v6003, %v6004
      %v6006 = vsel %vm432, %v5951, 0.0
      %v6007 = vadd.f32 %v6005, %v6006
      %v6008 = vsel %vm432, %v5952, 0.0
      %v6009 = vadd.f32 %v6007, %v6008
      %v6010 = vsel %vm432, %v5953, 0.0
      %v6011 = vadd.f32 %v6009, %v6010
      %v6012 = vsel %vm432, %v5954, 0.0
      %v6013 = vadd.f32 %v6011, %v6012
      %v6014 = vsel %vm432, %v5955, 0.0
      %v6015 = vadd.f32 %v6013, %v6014
      %v6016 = vsel %vm432, %v5956, 0.0
      %v6017 = vadd.f32 %v6015, %v6016
      %v6018 = vsel %vm432, %v5957, 0.0
      %v6019 = vadd.f32 %v6017, %v6018
      %v6020 = vsel %vm432, %v5958, 0.0
      %v6021 = vadd.f32 %v6019, %v6020
      %v6022 = vrot.slane %v6021, 4
      %v6023 = vadd.f32 %v6021, %v6022
      %v6024 = vrot.slane %v6023, 2
      %v6025 = vadd.f32 %v6023, %v6024
      %v6026 = vrot.slane %v6025, 1
      %v6027 = vadd.f32 %v6025, %v6026
      %v6028 = vmul.f32 %v6027, 0.00390625
      %v6029 = vsub.f32 %v5927, %v6028
      %v6030 = vsub.f32 %v5928, %v6028
      %v6031 = vsub.f32 %v5929, %v6028
      %v6032 = vsub.f32 %v5930, %v6028
      %v6033 = vsub.f32 %v5931, %v6028
      %v6034 = vsub.f32 %v5932, %v6028
      %v6035 = vsub.f32 %v5933, %v6028
      %v6036 = vsub.f32 %v5934, %v6028
      %v6037 = vsub.f32 %v5935, %v6028
      %v6038 = vsub.f32 %v5936, %v6028
      %v6039 = vsub.f32 %v5937, %v6028
      %v6040 = vsub.f32 %v5938, %v6028
      %v6041 = vsub.f32 %v5939, %v6028
      %v6042 = vsub.f32 %v5940, %v6028
      %v6043 = vsub.f32 %v5941, %v6028
      %v6044 = vsub.f32 %v5942, %v6028
      %v6045 = vsub.f32 %v5943, %v6028
      %v6046 = vsub.f32 %v5944, %v6028
      %v6047 = vsub.f32 %v5945, %v6028
      %v6048 = vsub.f32 %v5946, %v6028
      %v6049 = vsub.f32 %v5947, %v6028
      %v6050 = vsub.f32 %v5948, %v6028
      %v6051 = vsub.f32 %v5949, %v6028
      %v6052 = vsub.f32 %v5950, %v6028
      %v6053 = vsub.f32 %v5951, %v6028
      %v6054 = vsub.f32 %v5952, %v6028
      %v6055 = vsub.f32 %v5953, %v6028
      %v6056 = vsub.f32 %v5954, %v6028
      %v6057 = vsub.f32 %v5955, %v6028
      %v6058 = vsub.f32 %v5956, %v6028
      %v6059 = vsub.f32 %v5957, %v6028
      %v6060 = vsub.f32 %v5958, %v6028
      %v6061 = vmul.f32 %v6029, %v6029
      %v6062 = vmul.f32 %v6030, %v6030
      %v6063 = vmul.f32 %v6031, %v6031
      %v6064 = vmul.f32 %v6032, %v6032
      %v6065 = vmul.f32 %v6033, %v6033
      %v6066 = vmul.f32 %v6034, %v6034
      %v6067 = vmul.f32 %v6035, %v6035
      %v6068 = vmul.f32 %v6036, %v6036
      %v6069 = vmul.f32 %v6037, %v6037
      %v6070 = vmul.f32 %v6038, %v6038
      %v6071 = vmul.f32 %v6039, %v6039
      %v6072 = vmul.f32 %v6040, %v6040
      %v6073 = vmul.f32 %v6041, %v6041
      %v6074 = vmul.f32 %v6042, %v6042
      %v6075 = vmul.f32 %v6043, %v6043
      %v6076 = vmul.f32 %v6044, %v6044
      %v6077 = vmul.f32 %v6045, %v6045
      %v6078 = vmul.f32 %v6046, %v6046
      %v6079 = vmul.f32 %v6047, %v6047
      %v6080 = vmul.f32 %v6048, %v6048
      %v6081 = vmul.f32 %v6049, %v6049
      %v6082 = vmul.f32 %v6050, %v6050
      %v6083 = vmul.f32 %v6051, %v6051
      %v6084 = vmul.f32 %v6052, %v6052
      %v6085 = vmul.f32 %v6053, %v6053
      %v6086 = vmul.f32 %v6054, %v6054
      %v6087 = vmul.f32 %v6055, %v6055
      %v6088 = vmul.f32 %v6056, %v6056
      %v6089 = vmul.f32 %v6057, %v6057
      %v6090 = vmul.f32 %v6058, %v6058
      %v6091 = vmul.f32 %v6059, %v6059
      %v6092 = vmul.f32 %v6060, %v6060
      %v6093 = vsel %vm432, %v6061, 0.0
      %v6094 = vsel %vm432, %v6062, 0.0
      %v6095 = vadd.f32 %v6093, %v6094
      %v6096 = vsel %vm432, %v6063, 0.0
      %v6097 = vadd.f32 %v6095, %v6096
      %v6098 = vsel %vm432, %v6064, 0.0
      %v6099 = vadd.f32 %v6097, %v6098
      %v6100 = vsel %vm432, %v6065, 0.0
      %v6101 = vadd.f32 %v6099, %v6100
      %v6102 = vsel %vm432, %v6066, 0.0
      %v6103 = vadd.f32 %v6101, %v6102
      %v6104 = vsel %vm432, %v6067, 0.0
      %v6105 = vadd.f32 %v6103, %v6104
      %v6106 = vsel %vm432, %v6068, 0.0
      %v6107 = vadd.f32 %v6105, %v6106
      %v6108 = vsel %vm432, %v6069, 0.0
      %v6109 = vadd.f32 %v6107, %v6108
      %v6110 = vsel %vm432, %v6070, 0.0
      %v6111 = vadd.f32 %v6109, %v6110
      %v6112 = vsel %vm432, %v6071, 0.0
      %v6113 = vadd.f32 %v6111, %v6112
      %v6114 = vsel %vm432, %v6072, 0.0
      %v6115 = vadd.f32 %v6113, %v6114
      %v6116 = vsel %vm432, %v6073, 0.0
      %v6117 = vadd.f32 %v6115, %v6116
      %v6118 = vsel %vm432, %v6074, 0.0
      %v6119 = vadd.f32 %v6117, %v6118
      %v6120 = vsel %vm432, %v6075, 0.0
      %v6121 = vadd.f32 %v6119, %v6120
      %v6122 = vsel %vm432, %v6076, 0.0
      %v6123 = vadd.f32 %v6121, %v6122
      %v6124 = vsel %vm432, %v6077, 0.0
      %v6125 = vadd.f32 %v6123, %v6124
      %v6126 = vsel %vm432, %v6078, 0.0
      %v6127 = vadd.f32 %v6125, %v6126
      %v6128 = vsel %vm432, %v6079, 0.0
      %v6129 = vadd.f32 %v6127, %v6128
      %v6130 = vsel %vm432, %v6080, 0.0
      %v6131 = vadd.f32 %v6129, %v6130
      %v6132 = vsel %vm432, %v6081, 0.0
      %v6133 = vadd.f32 %v6131, %v6132
      %v6134 = vsel %vm432, %v6082, 0.0
      %v6135 = vadd.f32 %v6133, %v6134
      %v6136 = vsel %vm432, %v6083, 0.0
      %v6137 = vadd.f32 %v6135, %v6136
      %v6138 = vsel %vm432, %v6084, 0.0
      %v6139 = vadd.f32 %v6137, %v6138
      %v6140 = vsel %vm432, %v6085, 0.0
      %v6141 = vadd.f32 %v6139, %v6140
      %v6142 = vsel %vm432, %v6086, 0.0
      %v6143 = vadd.f32 %v6141, %v6142
      %v6144 = vsel %vm432, %v6087, 0.0
      %v6145 = vadd.f32 %v6143, %v6144
      %v6146 = vsel %vm432, %v6088, 0.0
      %v6147 = vadd.f32 %v6145, %v6146
      %v6148 = vsel %vm432, %v6089, 0.0
      %v6149 = vadd.f32 %v6147, %v6148
      %v6150 = vsel %vm432, %v6090, 0.0
      %v6151 = vadd.f32 %v6149, %v6150
      %v6152 = vsel %vm432, %v6091, 0.0
      %v6153 = vadd.f32 %v6151, %v6152
      %v6154 = vsel %vm432, %v6092, 0.0
      %v6155 = vadd.f32 %v6153, %v6154
      %v6156 = vrot.slane %v6155, 4
      %v6157 = vadd.f32 %v6155, %v6156
      %v6158 = vrot.slane %v6157, 2
      %v6159 = vadd.f32 %v6157, %v6158
      %v6160 = vrot.slane %v6159, 1
      %v6161 = vadd.f32 %v6159, %v6160
      %v6162 = vmul.f32 %v6161, 0.00390625
      %v6163 = vadd.f32 %v6162, 1e-05
      %v6164 = vrsqrt.pop %v6163
      %v6165 = vmul.f32 %v6029, %v6164
      %v6166 = vmul.f32 %v6030, %v6164
      %v6167 = vmul.f32 %v6031, %v6164
      %v6168 = vmul.f32 %v6032, %v6164
      %v6169 = vmul.f32 %v6033, %v6164
      %v6170 = vmul.f32 %v6034, %v6164
      %v6171 = vmul.f32 %v6035, %v6164
      %v6172 = vmul.f32 %v6036, %v6164
      %v6173 = vmul.f32 %v6037, %v6164
      %v6174 = vmul.f32 %v6038, %v6164
      %v6175 = vmul.f32 %v6039, %v6164
      %v6176 = vmul.f32 %v6040, %v6164
      %v6177 = vmul.f32 %v6041, %v6164
      %v6178 = vmul.f32 %v6042, %v6164
      %v6179 = vmul.f32 %v6043, %v6164
      %v6180 = vmul.f32 %v6044, %v6164
      %v6181 = vmul.f32 %v6045, %v6164
      %v6182 = vmul.f32 %v6046, %v6164
      %v6183 = vmul.f32 %v6047, %v6164
      %v6184 = vmul.f32 %v6048, %v6164
      %v6185 = vmul.f32 %v6049, %v6164
      %v6186 = vmul.f32 %v6050, %v6164
      %v6187 = vmul.f32 %v6051, %v6164
      %v6188 = vmul.f32 %v6052, %v6164
      %v6189 = vmul.f32 %v6053, %v6164
      %v6190 = vmul.f32 %v6054, %v6164
      %v6191 = vmul.f32 %v6055, %v6164
      %v6192 = vmul.f32 %v6056, %v6164
      %v6193 = vmul.f32 %v6057, %v6164
      %v6194 = vmul.f32 %v6058, %v6164
      %v6195 = vmul.f32 %v6059, %v6164
      %v6196 = vmul.f32 %v6060, %v6164
      %v6197 = vadd.f32 %v171, %v6165
      %v6198 = vadd.f32 %v172, %v6166
      %v6199 = vadd.f32 %v173, %v6167
      %v6200 = vadd.f32 %v174, %v6168
      %v6201 = vadd.f32 %v175, %v6169
      %v6202 = vadd.f32 %v176, %v6170
      %v6203 = vadd.f32 %v177, %v6171
      %v6204 = vadd.f32 %v178, %v6172
      %v6205 = vadd.f32 %v179, %v6173
      %v6206 = vadd.f32 %v180, %v6174
      %v6207 = vadd.f32 %v181, %v6175
      %v6208 = vadd.f32 %v182, %v6176
      %v6209 = vadd.f32 %v183, %v6177
      %v6210 = vadd.f32 %v184, %v6178
      %v6211 = vadd.f32 %v185, %v6179
      %v6212 = vadd.f32 %v186, %v6180
      %v6213 = vadd.f32 %v187, %v6181
      %v6214 = vadd.f32 %v188, %v6182
      %v6215 = vadd.f32 %v189, %v6183
      %v6216 = vadd.f32 %v190, %v6184
      %v6217 = vadd.f32 %v191, %v6185
      %v6218 = vadd.f32 %v192, %v6186
      %v6219 = vadd.f32 %v193, %v6187
      %v6220 = vadd.f32 %v194, %v6188
      %v6221 = vadd.f32 %v195, %v6189
      %v6222 = vadd.f32 %v196, %v6190
      %v6223 = vadd.f32 %v197, %v6191
      %v6224 = vadd.f32 %v198, %v6192
      %v6225 = vadd.f32 %v199, %v6193
      %v6226 = vadd.f32 %v200, %v6194
      %v6227 = vadd.f32 %v201, %v6195
      %v6228 = vadd.f32 %v202, %v6196
      %6229 = vst.msk [vmem:[%s170] sm:$0xff] %vm432, %v6197
      %6230 = vst.msk [vmem:[%s170 + $0x8] sm:$0xff] %vm432, %v6198
      %6231 = vst.msk [vmem:[%s170 + $0x10] sm:$0xff] %vm432, %v6199
      %6232 = vst.msk [vmem:[%s170 + $0x18] sm:$0xff] %vm432, %v6200
      %6233 = vst.msk [vmem:[%s170 + $0x20] sm:$0xff] %vm432, %v6201
      %6234 = vst.msk [vmem:[%s170 + $0x28] sm:$0xff] %vm432, %v6202
      %6235 = vst.msk [vmem:[%s170 + $0x30] sm:$0xff] %vm432, %v6203
      %6236 = vst.msk [vmem:[%s170 + $0x38] sm:$0xff] %vm432, %v6204
      %6237 = vst.msk [vmem:[%s170 + $0x40] sm:$0xff] %vm432, %v6205
      %6238 = vst.msk [vmem:[%s170 + $0x48] sm:$0xff] %vm432, %v6206
      %6239 = vst.msk [vmem:[%s170 + $0x50] sm:$0xff] %vm432, %v6207
      %6240 = vst.msk [vmem:[%s170 + $0x58] sm:$0xff] %vm432, %v6208
      %6241 = vst.msk [vmem:[%s170 + $0x60] sm:$0xff] %vm432, %v6209
      %6242 = vst.msk [vmem:[%s170 + $0x68] sm:$0xff] %vm432, %v6210
      %6243 = vst.msk [vmem:[%s170 + $0x70] sm:$0xff] %vm432, %v6211
      %6244 = vst.msk [vmem:[%s170 + $0x78] sm:$0xff] %vm432, %v6212
      %6245 = vst.msk [vmem:[%s170 + $0x80] sm:$0xff] %vm432, %v6213
      %6246 = vst.msk [vmem:[%s170 + $0x88] sm:$0xff] %vm432, %v6214
      %6247 = vst.msk [vmem:[%s170 + $0x90] sm:$0xff] %vm432, %v6215
      %6248 = vst.msk [vmem:[%s170 + $0x98] sm:$0xff] %vm432, %v6216
      %6249 = vst.msk [vmem:[%s170 + $0xa0] sm:$0xff] %vm432, %v6217
      %6250 = vst.msk [vmem:[%s170 + $0xa8] sm:$0xff] %vm432, %v6218
      %6251 = vst.msk [vmem:[%s170 + $0xb0] sm:$0xff] %vm432, %v6219
      %6252 = vst.msk [vmem:[%s170 + $0xb8] sm:$0xff] %vm432, %v6220
      %6253 = vst.msk [vmem:[%s170 + $0xc0] sm:$0xff] %vm432, %v6221
      %6254 = vst.msk [vmem:[%s170 + $0xc8] sm:$0xff] %vm432, %v6222
      %6255 = vst.msk [vmem:[%s170 + $0xd0] sm:$0xff] %vm432, %v6223
      %6256 = vst.msk [vmem:[%s170 + $0xd8] sm:$0xff] %vm432, %v6224
      %6257 = vst.msk [vmem:[%s170 + $0xe0] sm:$0xff] %vm432, %v6225
      %6258 = vst.msk [vmem:[%s170 + $0xe8] sm:$0xff] %vm432, %v6226
      %6259 = vst.msk [vmem:[%s170 + $0xf0] sm:$0xff] %vm432, %v6227
      %6260 = vst.msk [vmem:[%s170 + $0xf8] sm:$0xff] %vm432, %v6228
      %p6261 = scmp.lt.s32.totalorder %s14, 1
      %s6262 = scalar_select %p6261, %s14, 1
      %s6263 = smul.addr %s6262, 32
      %s6264 = smul.addr %s6263, 8
      %s6265 = scalar_lea.vmem %s3, %s6264
      // Predicated region
      $region33: #{tpu_custom_call.1} parent=31 // pred_check
        %p6266 = pneg %p100
      $region34: #{tpu_custom_call.1} parent=31 // pred_check_branch
        %6268 = sbr.rel (%p6266) target = $region36
      $region35: #{tpu_custom_call.1} parent=31 // pred_region
        _
      $region36: #{tpu_custom_call.1} parent=31 // pred_fallthru
        _
    $region32: #{tpu_custom_call.1} parent=5 // pred_fallthru
      _
    %p6269 = scmp.le.s32.totalorder 2, %s9
    // Predicated region
    $region37: #{tpu_custom_call.1} parent=5 // pred_check
      %p6270 = pneg %p6269
    $region38: #{tpu_custom_call.1} parent=5 // pred_check_branch
      %6272 = sbr.rel (%p6270) target = $region40
    $region39: #{tpu_custom_call.1} parent=5 // pred_region
      %s6273 = ssub.s32 %s9, 2
      // Predicated region
      $region41: #{tpu_custom_call.1} parent=39 // pred_check
        %p6274 = pneg %p106
      $region42: #{tpu_custom_call.1} parent=39 // pred_check_branch
        %6276 = sbr.rel (%p6274) target = $region44
      $region43: #{tpu_custom_call.1} parent=39 // pred_region
        %p6277 = scmp.lt.s32.totalorder %s15, 1
        %s6278 = scalar_select %p6277, %s15, 1
        %s6279 = smul.addr %s6278, 32
        %s6280 = smul.addr %s6279, 8
        %s6281 = scalar_lea.vmem %s3, %s6280
      $region44: #{tpu_custom_call.1} parent=39 // pred_fallthru
        _
    $region40: #{tpu_custom_call.1} parent=5 // pred_fallthru
      _
  $region6: #{tpu_custom_call.1} parent=0 // loop_footer
    %s13 = sadd.s32 1, %s9
  $region7: #{tpu_custom_call.1} parent=0 // loop_footer_branch
    %8 = sbr.rel target = $region3
  $region8: #{tpu_custom_call.1} parent=0 // loop_exit
    _

</llo_original>
